<compile_context>
chip_gen: v7x
topology: tpu7x:2x2x1
jax: 0.10.0
libtpu: 0.0.40
codegen_flags: <defaults>
</compile_context>

<pallas_src>
import jax
import jax.numpy as jnp
from jax.experimental import pallas as pl
from jax.experimental.pallas import tpu as pltpu

# ------------------------- small, consistent hyperparameters -------------------
N_INPUT_FEATURES = 4      # C
HIDDEN_DIM = 32           # H
NUM_LAYERS = 2
BIDIRECTIONAL = True
N_1D_FILTERS = 3          # F (filters per input channel, grouped conv)
KERNEL_SIZE = 3           # must be odd
TARGET_SIZE = 5
BATCH = 2                 # N
SEQ_LEN = 8               # L
NUM_DIRS = 2 if BIDIRECTIONAL else 1
TAG_PAD = 128             # lane-dense padded width of the hidden2tag output


# --------------------------------- fused Pallas kernel --------------------------
def _make_fused_kernel(seq_len, np_rows, hidden):
    """Builds the fused forward kernel for static (L, NP, H)."""
    L, NP, H = seq_len, np_rows, hidden

    def kernel(xcol_ref, weff_ref, beff_ref,
               wih0_ref, whh0_ref, b0_ref,
               wih1_ref, whh1_ref, b1_ref,
               wtag_ref, btag_ref,
               out_ref,
               sf0_ref, sb0_ref, sf1_ref, sb1_ref):

        def cell(gates, c_prev):
            # Whole-vreg transcendentals (EUP), then slice i/f/g/o (PyTorch order).
            sg = jax.nn.sigmoid(gates)
            th = jnp.tanh(gates)
            i_g = sg[:, 0:H]
            f_g = sg[:, H:2 * H]
            g_g = th[:, 2 * H:3 * H]
            o_g = sg[:, 3 * H:4 * H]
            c_new = f_g * c_prev + i_g * g_g
            h_new = o_g * jnp.tanh(c_new)
            return h_new, c_new

        def run_bilstm(gx_f, gx_b, whh_ref, out_f_ref, out_b_ref):
            # gx_*: [L*NP, 4H] hoisted input projections (time-major, NP rows/step).
            whh_f = whh_ref[0]
            whh_b = whh_ref[1]
            h_f = jnp.zeros((NP, H), jnp.float32)
            c_f = jnp.zeros((NP, H), jnp.float32)
            h_b = jnp.zeros((NP, H), jnp.float32)
            c_b = jnp.zeros((NP, H), jnp.float32)
            for s in range(L):                      # static unroll (L == 8)
                tf = s                              # forward processes time s
                tb = L - 1 - s                      # backward processes time L-1-s
                g_f = gx_f[tf * NP:(tf + 1) * NP, :] + jnp.dot(
                    h_f, whh_f, preferred_element_type=jnp.float32)
                h_f, c_f = cell(g_f, c_f)
                out_f_ref[tf * NP:(tf + 1) * NP, :] = h_f
                g_b = gx_b[tb * NP:(tb + 1) * NP, :] + jnp.dot(
                    h_b, whh_b, preferred_element_type=jnp.float32)
                h_b, c_b = cell(g_b, c_b)
                out_b_ref[tb * NP:(tb + 1) * NP, :] = h_b

        # 1) depthwise conv (reflect pad) + conv2lstm folded into one GEMM.
        h0 = jnp.dot(xcol_ref[...], weff_ref[...],
                     preferred_element_type=jnp.float32) + beff_ref[...]

        # 2) LSTM layer 0: hoisted per-direction input projection + recurrence.
        gx0_f = jnp.dot(h0, wih0_ref[0], preferred_element_type=jnp.float32) + b0_ref[0]
        gx0_b = jnp.dot(h0, wih0_ref[1], preferred_element_type=jnp.float32) + b0_ref[1]
        run_bilstm(gx0_f, gx0_b, whh0_ref, sf0_ref, sb0_ref)

        # 3) LSTM layer 1: input is [fwd | bwd] of layer 0, kept as two slabs
        #    (avoids a lane concat; W_ih is pre-split per input half in the wrapper).
        sf0 = sf0_ref[...]
        sb0 = sb0_ref[...]
        gx1_f = (jnp.dot(sf0, wih1_ref[0], preferred_element_type=jnp.float32)
                 + jnp.dot(sb0, wih1_ref[1], preferred_element_type=jnp.float32)
                 + b1_ref[0])
        gx1_b = (jnp.dot(sf0, wih1_ref[2], preferred_element_type=jnp.float32)
                 + jnp.dot(sb0, wih1_ref[3], preferred_element_type=jnp.float32)
                 + b1_ref[1])
        run_bilstm(gx1_f, gx1_b, whh1_ref, sf1_ref, sb1_ref)

        # 4) hidden2tag — lane-dense (128-wide padded) output slab, one unmasked store.
        out_ref[...] = (
            jnp.dot(sf1_ref[...], wtag_ref[0], preferred_element_type=jnp.float32)
            + jnp.dot(sb1_ref[...], wtag_ref[1], preferred_element_type=jnp.float32)
            + btag_ref[...])

    return kernel


# --------------------------------- full forward ---------------------------------
def forward_pallas(x, p):
    assert BIDIRECTIONAL and NUM_LAYERS == 2, "fused kernel built for bi=True, 2 layers"
    n, seq_len, c = x.shape
    k = KERNEL_SIZE
    pad = k // 2
    f = N_1D_FILTERS
    h = HIDDEN_DIM
    t_size = TARGET_SIZE
    np_rows = ((n + 7) // 8) * 8          # pad batch to a full sublane tile

    # ---- fold grouped conv + conv2lstm into a single GEMM (eval-time algebra) ----
    # W_eff[hh, c*K + j] = sum_f W_c2l[hh, c*F + f] * w_conv[c*F + f, j]
    w_c2l3 = p["w_c2l"].reshape(h, c, f)                       # [H, C, F]
    w_conv3 = p["w_conv"].reshape(c, f, k)                     # [C, F, K]
    w_eff = jnp.einsum("hcf,cfk->hck", w_c2l3, w_conv3).reshape(h, c * k)
    b_eff = p["w_c2l"] @ p["b_conv"] + p["b_c2l"]              # [H]

    # ---- im2col of the reflect-padded input, time-major, batch padded to np_rows ----
    xpad = jnp.pad(x, ((0, 0), (pad, pad), (0, 0)), mode="reflect")            # [N,L+2p,C]
    taps = jnp.stack([xpad[:, j:j + seq_len, :] for j in range(k)], axis=-1)   # [N,L,C,K]
    xcol = taps.reshape(n, seq_len, c * k).transpose(1, 0, 2)                  # [L,N,C*K]
    xcol = jnp.pad(xcol, ((0, 0), (0, np_rows - n), (0, 0)))                   # [L,NP,C*K]
    xcol = xcol.reshape(seq_len * np_rows, c * k)

    # ---- LSTM weights packed for the kernel (transposed, biases pre-summed) ----
    def stack_dirs(layer, fn):
        return jnp.stack([fn(*p["lstm"][layer][d]) for d in range(NUM_DIRS)], axis=0)

    wih0 = stack_dirs(0, lambda wih, whh, bih, bhh: wih.T)                # [2, H, 4H]
    whh0 = stack_dirs(0, lambda wih, whh, bih, bhh: whh.T)                # [2, H, 4H]
    b0 = stack_dirs(0, lambda wih, whh, bih, bhh: (bih + bhh)[None, :])   # [2, 1, 4H]

    wih1_parts = []
    for d in range(NUM_DIRS):
        w_ih1 = p["lstm"][1][d][0]                      # [4H, 2H]
        wih1_parts.append(w_ih1[:, :h].T)               # acts on forward half  [H, 4H]
        wih1_parts.append(w_ih1[:, h:].T)               # acts on backward half [H, 4H]
    wih1 = jnp.stack(wih1_parts, axis=0)                # [4, H, 4H]
    whh1 = stack_dirs(1, lambda wih, whh, bih, bhh: whh.T)                # [2, H, 4H]
    b1 = stack_dirs(1, lambda wih, whh, bih, bhh: (bih + bhh)[None, :])   # [2, 1, 4H]

    # ---- hidden2tag weights per direction, zero-padded to 128 lanes ----
    wt = p["w_tag"]                                                       # [T, 2H]
    wtag = jnp.stack([wt[:, :h].T, wt[:, h:].T], axis=0)                  # [2, H, T]
    wtag = jnp.pad(wtag, ((0, 0), (0, 0), (0, TAG_PAD - t_size)))         # [2, H, 128]
    btag = jnp.pad(p["b_tag"], (0, TAG_PAD - t_size))[None, :]            # [1, 128]

    kernel = _make_fused_kernel(seq_len, np_rows, h)
    out = pl.pallas_call(
        kernel,
        out_shape=jax.ShapeDtypeStruct((seq_len * np_rows, TAG_PAD), jnp.float32),
        scratch_shapes=[
            pltpu.VMEM((seq_len * np_rows, h), jnp.float32),   # layer-0 forward seq
            pltpu.VMEM((seq_len * np_rows, h), jnp.float32),   # layer-0 backward seq
            pltpu.VMEM((seq_len * np_rows, h), jnp.float32),   # layer-1 forward seq
            pltpu.VMEM((seq_len * np_rows, h), jnp.float32),   # layer-1 backward seq
        ],
    )(xcol, w_eff.T, b_eff[None, :], wih0, whh0, b0, wih1, whh1, b1, wtag, btag)

    out = out.reshape(seq_len, np_rows, TAG_PAD)[:, :n, :t_size]   # [L, N, T]
    return out.transpose(1, 0, 2)                                  # [N, L, T]


# --------------------------------- pure-JAX reference ---------------------------
def forward_reference(x, p):
    n, seq_len, c = x.shape
    pad = KERNEL_SIZE // 2
    m = c * N_1D_FILTERS
    xt = jnp.transpose(x, (0, 2, 1))
    xpad = jnp.pad(xt, ((0, 0), (0, 0), (pad, pad)), mode="reflect")
    xrep = jnp.repeat(xpad, N_1D_FILTERS, axis=1)
    y = jnp.zeros((n, m, seq_len), jnp.float32)
    for j in range(KERNEL_SIZE):
        y = y + xrep[:, :, j:j + seq_len] * p["w_conv"][:, j][None, :, None]
    y = y + p["b_conv"][None, :, None]
    y = jnp.transpose(y, (0, 2, 1))
    h0 = y @ p["w_c2l"].T + p["b_c2l"]
    inp = jnp.transpose(h0, (1, 0, 2))
    for layer in range(NUM_LAYERS):
        outs = []
        for d in range(NUM_DIRS):
            w_ih, w_hh, b_ih, b_hh = p["lstm"][layer][d]
            xs = inp if d == 0 else inp[::-1]
            h = jnp.zeros((n, HIDDEN_DIM), jnp.float32)
            cst = jnp.zeros((n, HIDDEN_DIM), jnp.float32)
            ys = []
            for t in range(seq_len):
                gates = xs[t] @ w_ih.T + h @ w_hh.T + b_ih + b_hh
                i_g = jax.nn.sigmoid(gates[:, 0:HIDDEN_DIM])
                f_g = jax.nn.sigmoid(gates[:, HIDDEN_DIM:2 * HIDDEN_DIM])
                g_g = jnp.tanh(gates[:, 2 * HIDDEN_DIM:3 * HIDDEN_DIM])
                o_g = jax.nn.sigmoid(gates[:, 3 * HIDDEN_DIM:4 * HIDDEN_DIM])
                cst = f_g * cst + i_g * g_g
                h = o_g * jnp.tanh(cst)
                ys.append(h)
            ys = jnp.stack(ys, axis=0)
            if d == 1:
                ys = ys[::-1]
            outs.append(ys)
        inp = jnp.concatenate(outs, axis=-1)
    lin_in = jnp.transpose(inp, (1, 0, 2))
    return lin_in @ p["w_tag"].T + p["b_tag"]


# --------------------------------- parameters -----------------------------------
def init_params(key):
    def nrm(k, shape, scale=0.1):
        return scale * jax.random.normal(k, shape, dtype=jnp.float32)

    n_keys = 6 + 4 * NUM_LAYERS * NUM_DIRS
    keys = iter(jax.random.split(key, n_keys))
    m = N_INPUT_FEATURES * N_1D_FILTERS
    p = {
        "w_conv": nrm(next(keys), (m, KERNEL_SIZE)),           # grouped conv [C*F, 1, K] squeezed
        "b_conv": nrm(next(keys), (m,)),
        "w_c2l": nrm(next(keys), (HIDDEN_DIM, m)),
        "b_c2l": nrm(next(keys), (HIDDEN_DIM,)),
        "w_tag": nrm(next(keys), (TARGET_SIZE, NUM_DIRS * HIDDEN_DIM)),
        "b_tag": nrm(next(keys), (TARGET_SIZE,)),
        "lstm": [],
    }
    for layer in range(NUM_LAYERS):
        din = HIDDEN_DIM if layer == 0 else NUM_DIRS * HIDDEN_DIM
        dirs = []
        for _ in range(NUM_DIRS):
            dirs.append((
                nrm(next(keys), (4 * HIDDEN_DIM, din)),         # weight_ih
                nrm(next(keys), (4 * HIDDEN_DIM, HIDDEN_DIM)),  # weight_hh
                nrm(next(keys), (4 * HIDDEN_DIM,)),             # bias_ih
                nrm(next(keys), (4 * HIDDEN_DIM,)),             # bias_hh
            ))
        p["lstm"].append(dirs)
    return p


if __name__ == "__main__":
    key = jax.random.PRNGKey(0)
    k_param, k_x = jax.random.split(key)
    params = init_params(k_param)
    x = jax.random.normal(k_x, (BATCH, SEQ_LEN, N_INPUT_FEATURES), dtype=jnp.float32)

    fwd = jax.jit(forward_pallas)
    out = jax.block_until_ready(fwd(x, params))
    assert out.shape == (BATCH, SEQ_LEN, TARGET_SIZE)

    ref = jax.jit(forward_reference)(x, params)
    max_err = float(jnp.max(jnp.abs(out - ref)))
    assert max_err < 5e-3, f"mismatch vs reference: max abs err {max_err}"
    print("KERNEL_OK")
</pallas_src>

<mosaic_0001>
module attributes {stable_mosaic.version = 11 : i64} {
  func.func @kernel(%arg0: memref<64x12xf32, #tpu.memory_space<vmem>>, %arg1: memref<12x32xf32, #tpu.memory_space<vmem>>, %arg2: memref<1x32xf32, #tpu.memory_space<vmem>>, %arg3: memref<2x32x128xf32, #tpu.memory_space<vmem>>, %arg4: memref<2x32x128xf32, #tpu.memory_space<vmem>>, %arg5: memref<2x1x128xf32, #tpu.memory_space<vmem>>, %arg6: memref<4x32x128xf32, #tpu.memory_space<vmem>>, %arg7: memref<2x32x128xf32, #tpu.memory_space<vmem>>, %arg8: memref<2x1x128xf32, #tpu.memory_space<vmem>>, %arg9: memref<2x32x128xf32, #tpu.memory_space<vmem>>, %arg10: memref<1x128xf32, #tpu.memory_space<vmem>>, %arg11: memref<64x128xf32, #tpu.memory_space<vmem>>, %arg12: memref<64x32xf32, #tpu.memory_space<vmem>>, %arg13: memref<64x32xf32, #tpu.memory_space<vmem>>, %arg14: memref<64x32xf32, #tpu.memory_space<vmem>>, %arg15: memref<64x32xf32, #tpu.memory_space<vmem>>) attributes {dimension_semantics = [], scalar_prefetch = 0 : i64, scratch_operands = 4 : i64, tpu.core_type = #tpu.core_type<tc>} {
    %c0 = arith.constant 0 : index
    %c0_0 = arith.constant 0 : index
    %0 = vector.load %arg0[%c0, %c0_0] : memref<64x12xf32, #tpu.memory_space<vmem>>, vector<64x12xf32>
    %c0_1 = arith.constant 0 : index
    %c0_2 = arith.constant 0 : index
    %1 = vector.load %arg1[%c0_1, %c0_2] : memref<12x32xf32, #tpu.memory_space<vmem>>, vector<12x32xf32>
    %cst = arith.constant dense<0.000000e+00> : vector<64x32xf32>
    %2 = tpu.matmul %0, %1, %cst {dimension_numbers = #tpu.dot_dimension_numbers<[1], [0], [0], [1], [0, 0, 1, 1], [], []>} : vector<64x12xf32>, vector<12x32xf32>, vector<64x32xf32> -> vector<64x32xf32>
    %c0_3 = arith.constant 0 : index
    %c0_4 = arith.constant 0 : index
    %3 = vector.load %arg2[%c0_3, %c0_4] : memref<1x32xf32, #tpu.memory_space<vmem>>, vector<1x32xf32>
    %4 = vector.broadcast %3 : vector<1x32xf32> to vector<64x32xf32>
    %5 = arith.addf %2, %4 : vector<64x32xf32>
    %c0_5 = arith.constant 0 : index
    %c0_6 = arith.constant 0 : index
    %c0_7 = arith.constant 0 : index
    %6 = vector.load %arg3[%c0_5, %c0_6, %c0_7] : memref<2x32x128xf32, #tpu.memory_space<vmem>>, vector<1x32x128xf32>
    %7 = vector.shape_cast %6 : vector<1x32x128xf32> to vector<32x128xf32>
    %cst_8 = arith.constant dense<0.000000e+00> : vector<64x128xf32>
    %8 = tpu.matmul %5, %7, %cst_8 {dimension_numbers = #tpu.dot_dimension_numbers<[1], [0], [0], [1], [0, 0, 1, 1], [], []>} : vector<64x32xf32>, vector<32x128xf32>, vector<64x128xf32> -> vector<64x128xf32>
    %c0_9 = arith.constant 0 : index
    %c0_10 = arith.constant 0 : index
    %c0_11 = arith.constant 0 : index
    %9 = vector.load %arg5[%c0_9, %c0_10, %c0_11] : memref<2x1x128xf32, #tpu.memory_space<vmem>>, vector<1x1x128xf32>
    %10 = vector.shape_cast %9 : vector<1x1x128xf32> to vector<1x128xf32>
    %11 = vector.broadcast %10 : vector<1x128xf32> to vector<64x128xf32>
    %12 = arith.addf %8, %11 : vector<64x128xf32>
    %c1 = arith.constant 1 : index
    %c0_12 = arith.constant 0 : index
    %c0_13 = arith.constant 0 : index
    %13 = vector.load %arg3[%c1, %c0_12, %c0_13] : memref<2x32x128xf32, #tpu.memory_space<vmem>>, vector<1x32x128xf32>
    %14 = vector.shape_cast %13 : vector<1x32x128xf32> to vector<32x128xf32>
    %cst_14 = arith.constant dense<0.000000e+00> : vector<64x128xf32>
    %15 = tpu.matmul %5, %14, %cst_14 {dimension_numbers = #tpu.dot_dimension_numbers<[1], [0], [0], [1], [0, 0, 1, 1], [], []>} : vector<64x32xf32>, vector<32x128xf32>, vector<64x128xf32> -> vector<64x128xf32>
    %c1_15 = arith.constant 1 : index
    %c0_16 = arith.constant 0 : index
    %c0_17 = arith.constant 0 : index
    %16 = vector.load %arg5[%c1_15, %c0_16, %c0_17] : memref<2x1x128xf32, #tpu.memory_space<vmem>>, vector<1x1x128xf32>
    %17 = vector.shape_cast %16 : vector<1x1x128xf32> to vector<1x128xf32>
    %18 = vector.broadcast %17 : vector<1x128xf32> to vector<64x128xf32>
    %19 = arith.addf %15, %18 : vector<64x128xf32>
    %c0_18 = arith.constant 0 : index
    %c0_19 = arith.constant 0 : index
    %c0_20 = arith.constant 0 : index
    %20 = vector.load %arg4[%c0_18, %c0_19, %c0_20] : memref<2x32x128xf32, #tpu.memory_space<vmem>>, vector<1x32x128xf32>
    %21 = vector.shape_cast %20 : vector<1x32x128xf32> to vector<32x128xf32>
    %c1_21 = arith.constant 1 : index
    %c0_22 = arith.constant 0 : index
    %c0_23 = arith.constant 0 : index
    %22 = vector.load %arg4[%c1_21, %c0_22, %c0_23] : memref<2x32x128xf32, #tpu.memory_space<vmem>>, vector<1x32x128xf32>
    %23 = vector.shape_cast %22 : vector<1x32x128xf32> to vector<32x128xf32>
    %cst_24 = arith.constant 0.000000e+00 : f32
    %24 = vector.broadcast %cst_24 : f32 to vector<8x32xf32>
    %cst_25 = arith.constant 0.000000e+00 : f32
    %25 = vector.broadcast %cst_25 : f32 to vector<8x32xf32>
    %cst_26 = arith.constant 0.000000e+00 : f32
    %26 = vector.broadcast %cst_26 : f32 to vector<8x32xf32>
    %cst_27 = arith.constant 0.000000e+00 : f32
    %27 = vector.broadcast %cst_27 : f32 to vector<8x32xf32>
    %28 = vector.extract_strided_slice %12 {offsets = [0, 0], sizes = [8, 128], strides = [1, 1]} : vector<64x128xf32> to vector<8x128xf32>
    %cst_28 = arith.constant dense<0.000000e+00> : vector<8x128xf32>
    %29 = tpu.matmul %24, %21, %cst_28 {dimension_numbers = #tpu.dot_dimension_numbers<[1], [0], [0], [1], [0, 0, 1, 1], [], []>} : vector<8x32xf32>, vector<32x128xf32>, vector<8x128xf32> -> vector<8x128xf32>
    %30 = arith.addf %28, %29 : vector<8x128xf32>
    %31 = arith.negf %30 : vector<8x128xf32>
    %32 = math.exp %31 : vector<8x128xf32>
    %cst_29 = arith.constant 1.000000e+00 : f32
    %33 = vector.broadcast %cst_29 : f32 to vector<8x128xf32>
    %34 = arith.addf %33, %32 : vector<8x128xf32>
    %35 = arith.divf %33, %34 : vector<8x128xf32>
    %36 = math.tanh %30 : vector<8x128xf32>
    %37 = vector.extract_strided_slice %35 {offsets = [0, 0], sizes = [8, 32], strides = [1, 1]} : vector<8x128xf32> to vector<8x32xf32>
    %38 = vector.extract_strided_slice %35 {offsets = [0, 32], sizes = [8, 32], strides = [1, 1]} : vector<8x128xf32> to vector<8x32xf32>
    %39 = vector.extract_strided_slice %36 {offsets = [0, 64], sizes = [8, 32], strides = [1, 1]} : vector<8x128xf32> to vector<8x32xf32>
    %40 = vector.extract_strided_slice %35 {offsets = [0, 96], sizes = [8, 32], strides = [1, 1]} : vector<8x128xf32> to vector<8x32xf32>
    %41 = arith.mulf %38, %25 : vector<8x32xf32>
    %42 = arith.mulf %37, %39 : vector<8x32xf32>
    %43 = arith.addf %41, %42 : vector<8x32xf32>
    %44 = math.tanh %43 : vector<8x32xf32>
    %45 = arith.mulf %40, %44 : vector<8x32xf32>
    %c0_30 = arith.constant 0 : index
    %c0_31 = arith.constant 0 : index
    %46 = vector.load %arg12[%c0_30, %c0_31] : memref<64x32xf32, #tpu.memory_space<vmem>>, vector<8x32xf32>
    tpu.vector_store %arg12[%c0_30, %c0_31], %45 {strides = array<i32>} : memref<64x32xf32, #tpu.memory_space<vmem>>, vector<8x32xf32>,
    %47 = vector.extract_strided_slice %19 {offsets = [56, 0], sizes = [8, 128], strides = [1, 1]} : vector<64x128xf32> to vector<8x128xf32>
    %cst_32 = arith.constant dense<0.000000e+00> : vector<8x128xf32>
    %48 = tpu.matmul %26, %23, %cst_32 {dimension_numbers = #tpu.dot_dimension_numbers<[1], [0], [0], [1], [0, 0, 1, 1], [], []>} : vector<8x32xf32>, vector<32x128xf32>, vector<8x128xf32> -> vector<8x128xf32>
    %49 = arith.addf %47, %48 : vector<8x128xf32>
    %50 = arith.negf %49 : vector<8x128xf32>
    %51 = math.exp %50 : vector<8x128xf32>
    %cst_33 = arith.constant 1.000000e+00 : f32
    %52 = vector.broadcast %cst_33 : f32 to vector<8x128xf32>
    %53 = arith.addf %52, %51 : vector<8x128xf32>
    %54 = arith.divf %52, %53 : vector<8x128xf32>
    %55 = math.tanh %49 : vector<8x128xf32>
    %56 = vector.extract_strided_slice %54 {offsets = [0, 0], sizes = [8, 32], strides = [1, 1]} : vector<8x128xf32> to vector<8x32xf32>
    %57 = vector.extract_strided_slice %54 {offsets = [0, 32], sizes = [8, 32], strides = [1, 1]} : vector<8x128xf32> to vector<8x32xf32>
    %58 = vector.extract_strided_slice %55 {offsets = [0, 64], sizes = [8, 32], strides = [1, 1]} : vector<8x128xf32> to vector<8x32xf32>
    %59 = vector.extract_strided_slice %54 {offsets = [0, 96], sizes = [8, 32], strides = [1, 1]} : vector<8x128xf32> to vector<8x32xf32>
    %60 = arith.mulf %57, %27 : vector<8x32xf32>
    %61 = arith.mulf %56, %58 : vector<8x32xf32>
    %62 = arith.addf %60, %61 : vector<8x32xf32>
    %63 = math.tanh %62 : vector<8x32xf32>
    %64 = arith.mulf %59, %63 : vector<8x32xf32>
    %c56 = arith.constant 56 : index
    %c0_34 = arith.constant 0 : index
    %65 = vector.load %arg13[%c56, %c0_34] : memref<64x32xf32, #tpu.memory_space<vmem>>, vector<8x32xf32>
    tpu.vector_store %arg13[%c56, %c0_34], %64 {strides = array<i32>} : memref<64x32xf32, #tpu.memory_space<vmem>>, vector<8x32xf32>,
    %66 = vector.extract_strided_slice %12 {offsets = [8, 0], sizes = [8, 128], strides = [1, 1]} : vector<64x128xf32> to vector<8x128xf32>
    %cst_35 = arith.constant dense<0.000000e+00> : vector<8x128xf32>
    %67 = tpu.matmul %45, %21, %cst_35 {dimension_numbers = #tpu.dot_dimension_numbers<[1], [0], [0], [1], [0, 0, 1, 1], [], []>} : vector<8x32xf32>, vector<32x128xf32>, vector<8x128xf32> -> vector<8x128xf32>
    %68 = arith.addf %66, %67 : vector<8x128xf32>
    %69 = arith.negf %68 : vector<8x128xf32>
    %70 = math.exp %69 : vector<8x128xf32>
    %cst_36 = arith.constant 1.000000e+00 : f32
    %71 = vector.broadcast %cst_36 : f32 to vector<8x128xf32>
    %72 = arith.addf %71, %70 : vector<8x128xf32>
    %73 = arith.divf %71, %72 : vector<8x128xf32>
    %74 = math.tanh %68 : vector<8x128xf32>
    %75 = vector.extract_strided_slice %73 {offsets = [0, 0], sizes = [8, 32], strides = [1, 1]} : vector<8x128xf32> to vector<8x32xf32>
    %76 = vector.extract_strided_slice %73 {offsets = [0, 32], sizes = [8, 32], strides = [1, 1]} : vector<8x128xf32> to vector<8x32xf32>
    %77 = vector.extract_strided_slice %74 {offsets = [0, 64], sizes = [8, 32], strides = [1, 1]} : vector<8x128xf32> to vector<8x32xf32>
    %78 = vector.extract_strided_slice %73 {offsets = [0, 96], sizes = [8, 32], strides = [1, 1]} : vector<8x128xf32> to vector<8x32xf32>
    %79 = arith.mulf %76, %43 : vector<8x32xf32>
    %80 = arith.mulf %75, %77 : vector<8x32xf32>
    %81 = arith.addf %79, %80 : vector<8x32xf32>
    %82 = math.tanh %81 : vector<8x32xf32>
    %83 = arith.mulf %78, %82 : vector<8x32xf32>
    %c8 = arith.constant 8 : index
    %c0_37 = arith.constant 0 : index
    %84 = vector.load %arg12[%c8, %c0_37] : memref<64x32xf32, #tpu.memory_space<vmem>>, vector<8x32xf32>
    tpu.vector_store %arg12[%c8, %c0_37], %83 {strides = array<i32>} : memref<64x32xf32, #tpu.memory_space<vmem>>, vector<8x32xf32>,
    %85 = vector.extract_strided_slice %19 {offsets = [48, 0], sizes = [8, 128], strides = [1, 1]} : vector<64x128xf32> to vector<8x128xf32>
    %cst_38 = arith.constant dense<0.000000e+00> : vector<8x128xf32>
    %86 = tpu.matmul %64, %23, %cst_38 {dimension_numbers = #tpu.dot_dimension_numbers<[1], [0], [0], [1], [0, 0, 1, 1], [], []>} : vector<8x32xf32>, vector<32x128xf32>, vector<8x128xf32> -> vector<8x128xf32>
    %87 = arith.addf %85, %86 : vector<8x128xf32>
    %88 = arith.negf %87 : vector<8x128xf32>
    %89 = math.exp %88 : vector<8x128xf32>
    %cst_39 = arith.constant 1.000000e+00 : f32
    %90 = vector.broadcast %cst_39 : f32 to vector<8x128xf32>
    %91 = arith.addf %90, %89 : vector<8x128xf32>
    %92 = arith.divf %90, %91 : vector<8x128xf32>
    %93 = math.tanh %87 : vector<8x128xf32>
    %94 = vector.extract_strided_slice %92 {offsets = [0, 0], sizes = [8, 32], strides = [1, 1]} : vector<8x128xf32> to vector<8x32xf32>
    %95 = vector.extract_strided_slice %92 {offsets = [0, 32], sizes = [8, 32], strides = [1, 1]} : vector<8x128xf32> to vector<8x32xf32>
    %96 = vector.extract_strided_slice %93 {offsets = [0, 64], sizes = [8, 32], strides = [1, 1]} : vector<8x128xf32> to vector<8x32xf32>
    %97 = vector.extract_strided_slice %92 {offsets = [0, 96], sizes = [8, 32], strides = [1, 1]} : vector<8x128xf32> to vector<8x32xf32>
    %98 = arith.mulf %95, %62 : vector<8x32xf32>
    %99 = arith.mulf %94, %96 : vector<8x32xf32>
    %100 = arith.addf %98, %99 : vector<8x32xf32>
    %101 = math.tanh %100 : vector<8x32xf32>
    %102 = arith.mulf %97, %101 : vector<8x32xf32>
    %c48 = arith.constant 48 : index
    %c0_40 = arith.constant 0 : index
    %103 = vector.load %arg13[%c48, %c0_40] : memref<64x32xf32, #tpu.memory_space<vmem>>, vector<8x32xf32>
    tpu.vector_store %arg13[%c48, %c0_40], %102 {strides = array<i32>} : memref<64x32xf32, #tpu.memory_space<vmem>>, vector<8x32xf32>,
    %104 = vector.extract_strided_slice %12 {offsets = [16, 0], sizes = [8, 128], strides = [1, 1]} : vector<64x128xf32> to vector<8x128xf32>
    %cst_41 = arith.constant dense<0.000000e+00> : vector<8x128xf32>
    %105 = tpu.matmul %83, %21, %cst_41 {dimension_numbers = #tpu.dot_dimension_numbers<[1], [0], [0], [1], [0, 0, 1, 1], [], []>} : vector<8x32xf32>, vector<32x128xf32>, vector<8x128xf32> -> vector<8x128xf32>
    %106 = arith.addf %104, %105 : vector<8x128xf32>
    %107 = arith.negf %106 : vector<8x128xf32>
    %108 = math.exp %107 : vector<8x128xf32>
    %cst_42 = arith.constant 1.000000e+00 : f32
    %109 = vector.broadcast %cst_42 : f32 to vector<8x128xf32>
    %110 = arith.addf %109, %108 : vector<8x128xf32>
    %111 = arith.divf %109, %110 : vector<8x128xf32>
    %112 = math.tanh %106 : vector<8x128xf32>
    %113 = vector.extract_strided_slice %111 {offsets = [0, 0], sizes = [8, 32], strides = [1, 1]} : vector<8x128xf32> to vector<8x32xf32>
    %114 = vector.extract_strided_slice %111 {offsets = [0, 32], sizes = [8, 32], strides = [1, 1]} : vector<8x128xf32> to vector<8x32xf32>
    %115 = vector.extract_strided_slice %112 {offsets = [0, 64], sizes = [8, 32], strides = [1, 1]} : vector<8x128xf32> to vector<8x32xf32>
    %116 = vector.extract_strided_slice %111 {offsets = [0, 96], sizes = [8, 32], strides = [1, 1]} : vector<8x128xf32> to vector<8x32xf32>
    %117 = arith.mulf %114, %81 : vector<8x32xf32>
    %118 = arith.mulf %113, %115 : vector<8x32xf32>
    %119 = arith.addf %117, %118 : vector<8x32xf32>
    %120 = math.tanh %119 : vector<8x32xf32>
    %121 = arith.mulf %116, %120 : vector<8x32xf32>
    %c16 = arith.constant 16 : index
    %c0_43 = arith.constant 0 : index
    %122 = vector.load %arg12[%c16, %c0_43] : memref<64x32xf32, #tpu.memory_space<vmem>>, vector<8x32xf32>
    tpu.vector_store %arg12[%c16, %c0_43], %121 {strides = array<i32>} : memref<64x32xf32, #tpu.memory_space<vmem>>, vector<8x32xf32>,
    %123 = vector.extract_strided_slice %19 {offsets = [40, 0], sizes = [8, 128], strides = [1, 1]} : vector<64x128xf32> to vector<8x128xf32>
    %cst_44 = arith.constant dense<0.000000e+00> : vector<8x128xf32>
    %124 = tpu.matmul %102, %23, %cst_44 {dimension_numbers = #tpu.dot_dimension_numbers<[1], [0], [0], [1], [0, 0, 1, 1], [], []>} : vector<8x32xf32>, vector<32x128xf32>, vector<8x128xf32> -> vector<8x128xf32>
    %125 = arith.addf %123, %124 : vector<8x128xf32>
    %126 = arith.negf %125 : vector<8x128xf32>
    %127 = math.exp %126 : vector<8x128xf32>
    %cst_45 = arith.constant 1.000000e+00 : f32
    %128 = vector.broadcast %cst_45 : f32 to vector<8x128xf32>
    %129 = arith.addf %128, %127 : vector<8x128xf32>
    %130 = arith.divf %128, %129 : vector<8x128xf32>
    %131 = math.tanh %125 : vector<8x128xf32>
    %132 = vector.extract_strided_slice %130 {offsets = [0, 0], sizes = [8, 32], strides = [1, 1]} : vector<8x128xf32> to vector<8x32xf32>
    %133 = vector.extract_strided_slice %130 {offsets = [0, 32], sizes = [8, 32], strides = [1, 1]} : vector<8x128xf32> to vector<8x32xf32>
    %134 = vector.extract_strided_slice %131 {offsets = [0, 64], sizes = [8, 32], strides = [1, 1]} : vector<8x128xf32> to vector<8x32xf32>
    %135 = vector.extract_strided_slice %130 {offsets = [0, 96], sizes = [8, 32], strides = [1, 1]} : vector<8x128xf32> to vector<8x32xf32>
    %136 = arith.mulf %133, %100 : vector<8x32xf32>
    %137 = arith.mulf %132, %134 : vector<8x32xf32>
    %138 = arith.addf %136, %137 : vector<8x32xf32>
    %139 = math.tanh %138 : vector<8x32xf32>
    %140 = arith.mulf %135, %139 : vector<8x32xf32>
    %c40 = arith.constant 40 : index
    %c0_46 = arith.constant 0 : index
    %141 = vector.load %arg13[%c40, %c0_46] : memref<64x32xf32, #tpu.memory_space<vmem>>, vector<8x32xf32>
    tpu.vector_store %arg13[%c40, %c0_46], %140 {strides = array<i32>} : memref<64x32xf32, #tpu.memory_space<vmem>>, vector<8x32xf32>,
    %142 = vector.extract_strided_slice %12 {offsets = [24, 0], sizes = [8, 128], strides = [1, 1]} : vector<64x128xf32> to vector<8x128xf32>
    %cst_47 = arith.constant dense<0.000000e+00> : vector<8x128xf32>
    %143 = tpu.matmul %121, %21, %cst_47 {dimension_numbers = #tpu.dot_dimension_numbers<[1], [0], [0], [1], [0, 0, 1, 1], [], []>} : vector<8x32xf32>, vector<32x128xf32>, vector<8x128xf32> -> vector<8x128xf32>
    %144 = arith.addf %142, %143 : vector<8x128xf32>
    %145 = arith.negf %144 : vector<8x128xf32>
    %146 = math.exp %145 : vector<8x128xf32>
    %cst_48 = arith.constant 1.000000e+00 : f32
    %147 = vector.broadcast %cst_48 : f32 to vector<8x128xf32>
    %148 = arith.addf %147, %146 : vector<8x128xf32>
    %149 = arith.divf %147, %148 : vector<8x128xf32>
    %150 = math.tanh %144 : vector<8x128xf32>
    %151 = vector.extract_strided_slice %149 {offsets = [0, 0], sizes = [8, 32], strides = [1, 1]} : vector<8x128xf32> to vector<8x32xf32>
    %152 = vector.extract_strided_slice %149 {offsets = [0, 32], sizes = [8, 32], strides = [1, 1]} : vector<8x128xf32> to vector<8x32xf32>
    %153 = vector.extract_strided_slice %150 {offsets = [0, 64], sizes = [8, 32], strides = [1, 1]} : vector<8x128xf32> to vector<8x32xf32>
    %154 = vector.extract_strided_slice %149 {offsets = [0, 96], sizes = [8, 32], strides = [1, 1]} : vector<8x128xf32> to vector<8x32xf32>
    %155 = arith.mulf %152, %119 : vector<8x32xf32>
    %156 = arith.mulf %151, %153 : vector<8x32xf32>
    %157 = arith.addf %155, %156 : vector<8x32xf32>
    %158 = math.tanh %157 : vector<8x32xf32>
    %159 = arith.mulf %154, %158 : vector<8x32xf32>
    %c24 = arith.constant 24 : index
    %c0_49 = arith.constant 0 : index
    %160 = vector.load %arg12[%c24, %c0_49] : memref<64x32xf32, #tpu.memory_space<vmem>>, vector<8x32xf32>
    tpu.vector_store %arg12[%c24, %c0_49], %159 {strides = array<i32>} : memref<64x32xf32, #tpu.memory_space<vmem>>, vector<8x32xf32>,
    %161 = vector.extract_strided_slice %19 {offsets = [32, 0], sizes = [8, 128], strides = [1, 1]} : vector<64x128xf32> to vector<8x128xf32>
    %cst_50 = arith.constant dense<0.000000e+00> : vector<8x128xf32>
    %162 = tpu.matmul %140, %23, %cst_50 {dimension_numbers = #tpu.dot_dimension_numbers<[1], [0], [0], [1], [0, 0, 1, 1], [], []>} : vector<8x32xf32>, vector<32x128xf32>, vector<8x128xf32> -> vector<8x128xf32>
    %163 = arith.addf %161, %162 : vector<8x128xf32>
    %164 = arith.negf %163 : vector<8x128xf32>
    %165 = math.exp %164 : vector<8x128xf32>
    %cst_51 = arith.constant 1.000000e+00 : f32
    %166 = vector.broadcast %cst_51 : f32 to vector<8x128xf32>
    %167 = arith.addf %166, %165 : vector<8x128xf32>
    %168 = arith.divf %166, %167 : vector<8x128xf32>
    %169 = math.tanh %163 : vector<8x128xf32>
    %170 = vector.extract_strided_slice %168 {offsets = [0, 0], sizes = [8, 32], strides = [1, 1]} : vector<8x128xf32> to vector<8x32xf32>
    %171 = vector.extract_strided_slice %168 {offsets = [0, 32], sizes = [8, 32], strides = [1, 1]} : vector<8x128xf32> to vector<8x32xf32>
    %172 = vector.extract_strided_slice %169 {offsets = [0, 64], sizes = [8, 32], strides = [1, 1]} : vector<8x128xf32> to vector<8x32xf32>
    %173 = vector.extract_strided_slice %168 {offsets = [0, 96], sizes = [8, 32], strides = [1, 1]} : vector<8x128xf32> to vector<8x32xf32>
    %174 = arith.mulf %171, %138 : vector<8x32xf32>
    %175 = arith.mulf %170, %172 : vector<8x32xf32>
    %176 = arith.addf %174, %175 : vector<8x32xf32>
    %177 = math.tanh %176 : vector<8x32xf32>
    %178 = arith.mulf %173, %177 : vector<8x32xf32>
    %c32 = arith.constant 32 : index
    %c0_52 = arith.constant 0 : index
    %179 = vector.load %arg13[%c32, %c0_52] : memref<64x32xf32, #tpu.memory_space<vmem>>, vector<8x32xf32>
    tpu.vector_store %arg13[%c32, %c0_52], %178 {strides = array<i32>} : memref<64x32xf32, #tpu.memory_space<vmem>>, vector<8x32xf32>,
    %180 = vector.extract_strided_slice %12 {offsets = [32, 0], sizes = [8, 128], strides = [1, 1]} : vector<64x128xf32> to vector<8x128xf32>
    %cst_53 = arith.constant dense<0.000000e+00> : vector<8x128xf32>
    %181 = tpu.matmul %159, %21, %cst_53 {dimension_numbers = #tpu.dot_dimension_numbers<[1], [0], [0], [1], [0, 0, 1, 1], [], []>} : vector<8x32xf32>, vector<32x128xf32>, vector<8x128xf32> -> vector<8x128xf32>
    %182 = arith.addf %180, %181 : vector<8x128xf32>
    %183 = arith.negf %182 : vector<8x128xf32>
    %184 = math.exp %183 : vector<8x128xf32>
    %cst_54 = arith.constant 1.000000e+00 : f32
    %185 = vector.broadcast %cst_54 : f32 to vector<8x128xf32>
    %186 = arith.addf %185, %184 : vector<8x128xf32>
    %187 = arith.divf %185, %186 : vector<8x128xf32>
    %188 = math.tanh %182 : vector<8x128xf32>
    %189 = vector.extract_strided_slice %187 {offsets = [0, 0], sizes = [8, 32], strides = [1, 1]} : vector<8x128xf32> to vector<8x32xf32>
    %190 = vector.extract_strided_slice %187 {offsets = [0, 32], sizes = [8, 32], strides = [1, 1]} : vector<8x128xf32> to vector<8x32xf32>
    %191 = vector.extract_strided_slice %188 {offsets = [0, 64], sizes = [8, 32], strides = [1, 1]} : vector<8x128xf32> to vector<8x32xf32>
    %192 = vector.extract_strided_slice %187 {offsets = [0, 96], sizes = [8, 32], strides = [1, 1]} : vector<8x128xf32> to vector<8x32xf32>
    %193 = arith.mulf %190, %157 : vector<8x32xf32>
    %194 = arith.mulf %189, %191 : vector<8x32xf32>
    %195 = arith.addf %193, %194 : vector<8x32xf32>
    %196 = math.tanh %195 : vector<8x32xf32>
    %197 = arith.mulf %192, %196 : vector<8x32xf32>
    %c32_55 = arith.constant 32 : index
    %c0_56 = arith.constant 0 : index
    %198 = vector.load %arg12[%c32_55, %c0_56] : memref<64x32xf32, #tpu.memory_space<vmem>>, vector<8x32xf32>
    tpu.vector_store %arg12[%c32_55, %c0_56], %197 {strides = array<i32>} : memref<64x32xf32, #tpu.memory_space<vmem>>, vector<8x32xf32>,
    %199 = vector.extract_strided_slice %19 {offsets = [24, 0], sizes = [8, 128], strides = [1, 1]} : vector<64x128xf32> to vector<8x128xf32>
    %cst_57 = arith.constant dense<0.000000e+00> : vector<8x128xf32>
    %200 = tpu.matmul %178, %23, %cst_57 {dimension_numbers = #tpu.dot_dimension_numbers<[1], [0], [0], [1], [0, 0, 1, 1], [], []>} : vector<8x32xf32>, vector<32x128xf32>, vector<8x128xf32> -> vector<8x128xf32>
    %201 = arith.addf %199, %200 : vector<8x128xf32>
    %202 = arith.negf %201 : vector<8x128xf32>
    %203 = math.exp %202 : vector<8x128xf32>
    %cst_58 = arith.constant 1.000000e+00 : f32
    %204 = vector.broadcast %cst_58 : f32 to vector<8x128xf32>
    %205 = arith.addf %204, %203 : vector<8x128xf32>
    %206 = arith.divf %204, %205 : vector<8x128xf32>
    %207 = math.tanh %201 : vector<8x128xf32>
    %208 = vector.extract_strided_slice %206 {offsets = [0, 0], sizes = [8, 32], strides = [1, 1]} : vector<8x128xf32> to vector<8x32xf32>
    %209 = vector.extract_strided_slice %206 {offsets = [0, 32], sizes = [8, 32], strides = [1, 1]} : vector<8x128xf32> to vector<8x32xf32>
    %210 = vector.extract_strided_slice %207 {offsets = [0, 64], sizes = [8, 32], strides = [1, 1]} : vector<8x128xf32> to vector<8x32xf32>
    %211 = vector.extract_strided_slice %206 {offsets = [0, 96], sizes = [8, 32], strides = [1, 1]} : vector<8x128xf32> to vector<8x32xf32>
    %212 = arith.mulf %209, %176 : vector<8x32xf32>
    %213 = arith.mulf %208, %210 : vector<8x32xf32>
    %214 = arith.addf %212, %213 : vector<8x32xf32>
    %215 = math.tanh %214 : vector<8x32xf32>
    %216 = arith.mulf %211, %215 : vector<8x32xf32>
    %c24_59 = arith.constant 24 : index
    %c0_60 = arith.constant 0 : index
    %217 = vector.load %arg13[%c24_59, %c0_60] : memref<64x32xf32, #tpu.memory_space<vmem>>, vector<8x32xf32>
    tpu.vector_store %arg13[%c24_59, %c0_60], %216 {strides = array<i32>} : memref<64x32xf32, #tpu.memory_space<vmem>>, vector<8x32xf32>,
    %218 = vector.extract_strided_slice %12 {offsets = [40, 0], sizes = [8, 128], strides = [1, 1]} : vector<64x128xf32> to vector<8x128xf32>
    %cst_61 = arith.constant dense<0.000000e+00> : vector<8x128xf32>
    %219 = tpu.matmul %197, %21, %cst_61 {dimension_numbers = #tpu.dot_dimension_numbers<[1], [0], [0], [1], [0, 0, 1, 1], [], []>} : vector<8x32xf32>, vector<32x128xf32>, vector<8x128xf32> -> vector<8x128xf32>
    %220 = arith.addf %218, %219 : vector<8x128xf32>
    %221 = arith.negf %220 : vector<8x128xf32>
    %222 = math.exp %221 : vector<8x128xf32>
    %cst_62 = arith.constant 1.000000e+00 : f32
    %223 = vector.broadcast %cst_62 : f32 to vector<8x128xf32>
    %224 = arith.addf %223, %222 : vector<8x128xf32>
    %225 = arith.divf %223, %224 : vector<8x128xf32>
    %226 = math.tanh %220 : vector<8x128xf32>
    %227 = vector.extract_strided_slice %225 {offsets = [0, 0], sizes = [8, 32], strides = [1, 1]} : vector<8x128xf32> to vector<8x32xf32>
    %228 = vector.extract_strided_slice %225 {offsets = [0, 32], sizes = [8, 32], strides = [1, 1]} : vector<8x128xf32> to vector<8x32xf32>
    %229 = vector.extract_strided_slice %226 {offsets = [0, 64], sizes = [8, 32], strides = [1, 1]} : vector<8x128xf32> to vector<8x32xf32>
    %230 = vector.extract_strided_slice %225 {offsets = [0, 96], sizes = [8, 32], strides = [1, 1]} : vector<8x128xf32> to vector<8x32xf32>
    %231 = arith.mulf %228, %195 : vector<8x32xf32>
    %232 = arith.mulf %227, %229 : vector<8x32xf32>
    %233 = arith.addf %231, %232 : vector<8x32xf32>
    %234 = math.tanh %233 : vector<8x32xf32>
    %235 = arith.mulf %230, %234 : vector<8x32xf32>
    %c40_63 = arith.constant 40 : index
    %c0_64 = arith.constant 0 : index
    %236 = vector.load %arg12[%c40_63, %c0_64] : memref<64x32xf32, #tpu.memory_space<vmem>>, vector<8x32xf32>
    tpu.vector_store %arg12[%c40_63, %c0_64], %235 {strides = array<i32>} : memref<64x32xf32, #tpu.memory_space<vmem>>, vector<8x32xf32>,
    %237 = vector.extract_strided_slice %19 {offsets = [16, 0], sizes = [8, 128], strides = [1, 1]} : vector<64x128xf32> to vector<8x128xf32>
    %cst_65 = arith.constant dense<0.000000e+00> : vector<8x128xf32>
    %238 = tpu.matmul %216, %23, %cst_65 {dimension_numbers = #tpu.dot_dimension_numbers<[1], [0], [0], [1], [0, 0, 1, 1], [], []>} : vector<8x32xf32>, vector<32x128xf32>, vector<8x128xf32> -> vector<8x128xf32>
    %239 = arith.addf %237, %238 : vector<8x128xf32>
    %240 = arith.negf %239 : vector<8x128xf32>
    %241 = math.exp %240 : vector<8x128xf32>
    %cst_66 = arith.constant 1.000000e+00 : f32
    %242 = vector.broadcast %cst_66 : f32 to vector<8x128xf32>
    %243 = arith.addf %242, %241 : vector<8x128xf32>
    %244 = arith.divf %242, %243 : vector<8x128xf32>
    %245 = math.tanh %239 : vector<8x128xf32>
    %246 = vector.extract_strided_slice %244 {offsets = [0, 0], sizes = [8, 32], strides = [1, 1]} : vector<8x128xf32> to vector<8x32xf32>
    %247 = vector.extract_strided_slice %244 {offsets = [0, 32], sizes = [8, 32], strides = [1, 1]} : vector<8x128xf32> to vector<8x32xf32>
    %248 = vector.extract_strided_slice %245 {offsets = [0, 64], sizes = [8, 32], strides = [1, 1]} : vector<8x128xf32> to vector<8x32xf32>
    %249 = vector.extract_strided_slice %244 {offsets = [0, 96], sizes = [8, 32], strides = [1, 1]} : vector<8x128xf32> to vector<8x32xf32>
    %250 = arith.mulf %247, %214 : vector<8x32xf32>
    %251 = arith.mulf %246, %248 : vector<8x32xf32>
    %252 = arith.addf %250, %251 : vector<8x32xf32>
    %253 = math.tanh %252 : vector<8x32xf32>
    %254 = arith.mulf %249, %253 : vector<8x32xf32>
    %c16_67 = arith.constant 16 : index
    %c0_68 = arith.constant 0 : index
    %255 = vector.load %arg13[%c16_67, %c0_68] : memref<64x32xf32, #tpu.memory_space<vmem>>, vector<8x32xf32>
    tpu.vector_store %arg13[%c16_67, %c0_68], %254 {strides = array<i32>} : memref<64x32xf32, #tpu.memory_space<vmem>>, vector<8x32xf32>,
    %256 = vector.extract_strided_slice %12 {offsets = [48, 0], sizes = [8, 128], strides = [1, 1]} : vector<64x128xf32> to vector<8x128xf32>
    %cst_69 = arith.constant dense<0.000000e+00> : vector<8x128xf32>
    %257 = tpu.matmul %235, %21, %cst_69 {dimension_numbers = #tpu.dot_dimension_numbers<[1], [0], [0], [1], [0, 0, 1, 1], [], []>} : vector<8x32xf32>, vector<32x128xf32>, vector<8x128xf32> -> vector<8x128xf32>
    %258 = arith.addf %256, %257 : vector<8x128xf32>
    %259 = arith.negf %258 : vector<8x128xf32>
    %260 = math.exp %259 : vector<8x128xf32>
    %cst_70 = arith.constant 1.000000e+00 : f32
    %261 = vector.broadcast %cst_70 : f32 to vector<8x128xf32>
    %262 = arith.addf %261, %260 : vector<8x128xf32>
    %263 = arith.divf %261, %262 : vector<8x128xf32>
    %264 = math.tanh %258 : vector<8x128xf32>
    %265 = vector.extract_strided_slice %263 {offsets = [0, 0], sizes = [8, 32], strides = [1, 1]} : vector<8x128xf32> to vector<8x32xf32>
    %266 = vector.extract_strided_slice %263 {offsets = [0, 32], sizes = [8, 32], strides = [1, 1]} : vector<8x128xf32> to vector<8x32xf32>
    %267 = vector.extract_strided_slice %264 {offsets = [0, 64], sizes = [8, 32], strides = [1, 1]} : vector<8x128xf32> to vector<8x32xf32>
    %268 = vector.extract_strided_slice %263 {offsets = [0, 96], sizes = [8, 32], strides = [1, 1]} : vector<8x128xf32> to vector<8x32xf32>
    %269 = arith.mulf %266, %233 : vector<8x32xf32>
    %270 = arith.mulf %265, %267 : vector<8x32xf32>
    %271 = arith.addf %269, %270 : vector<8x32xf32>
    %272 = math.tanh %271 : vector<8x32xf32>
    %273 = arith.mulf %268, %272 : vector<8x32xf32>
    %c48_71 = arith.constant 48 : index
    %c0_72 = arith.constant 0 : index
    %274 = vector.load %arg12[%c48_71, %c0_72] : memref<64x32xf32, #tpu.memory_space<vmem>>, vector<8x32xf32>
    tpu.vector_store %arg12[%c48_71, %c0_72], %273 {strides = array<i32>} : memref<64x32xf32, #tpu.memory_space<vmem>>, vector<8x32xf32>,
    %275 = vector.extract_strided_slice %19 {offsets = [8, 0], sizes = [8, 128], strides = [1, 1]} : vector<64x128xf32> to vector<8x128xf32>
    %cst_73 = arith.constant dense<0.000000e+00> : vector<8x128xf32>
    %276 = tpu.matmul %254, %23, %cst_73 {dimension_numbers = #tpu.dot_dimension_numbers<[1], [0], [0], [1], [0, 0, 1, 1], [], []>} : vector<8x32xf32>, vector<32x128xf32>, vector<8x128xf32> -> vector<8x128xf32>
    %277 = arith.addf %275, %276 : vector<8x128xf32>
    %278 = arith.negf %277 : vector<8x128xf32>
    %279 = math.exp %278 : vector<8x128xf32>
    %cst_74 = arith.constant 1.000000e+00 : f32
    %280 = vector.broadcast %cst_74 : f32 to vector<8x128xf32>
    %281 = arith.addf %280, %279 : vector<8x128xf32>
    %282 = arith.divf %280, %281 : vector<8x128xf32>
    %283 = math.tanh %277 : vector<8x128xf32>
    %284 = vector.extract_strided_slice %282 {offsets = [0, 0], sizes = [8, 32], strides = [1, 1]} : vector<8x128xf32> to vector<8x32xf32>
    %285 = vector.extract_strided_slice %282 {offsets = [0, 32], sizes = [8, 32], strides = [1, 1]} : vector<8x128xf32> to vector<8x32xf32>
    %286 = vector.extract_strided_slice %283 {offsets = [0, 64], sizes = [8, 32], strides = [1, 1]} : vector<8x128xf32> to vector<8x32xf32>
    %287 = vector.extract_strided_slice %282 {offsets = [0, 96], sizes = [8, 32], strides = [1, 1]} : vector<8x128xf32> to vector<8x32xf32>
    %288 = arith.mulf %285, %252 : vector<8x32xf32>
    %289 = arith.mulf %284, %286 : vector<8x32xf32>
    %290 = arith.addf %288, %289 : vector<8x32xf32>
    %291 = math.tanh %290 : vector<8x32xf32>
    %292 = arith.mulf %287, %291 : vector<8x32xf32>
    %c8_75 = arith.constant 8 : index
    %c0_76 = arith.constant 0 : index
    %293 = vector.load %arg13[%c8_75, %c0_76] : memref<64x32xf32, #tpu.memory_space<vmem>>, vector<8x32xf32>
    tpu.vector_store %arg13[%c8_75, %c0_76], %292 {strides = array<i32>} : memref<64x32xf32, #tpu.memory_space<vmem>>, vector<8x32xf32>,
    %294 = vector.extract_strided_slice %12 {offsets = [56, 0], sizes = [8, 128], strides = [1, 1]} : vector<64x128xf32> to vector<8x128xf32>
    %cst_77 = arith.constant dense<0.000000e+00> : vector<8x128xf32>
    %295 = tpu.matmul %273, %21, %cst_77 {dimension_numbers = #tpu.dot_dimension_numbers<[1], [0], [0], [1], [0, 0, 1, 1], [], []>} : vector<8x32xf32>, vector<32x128xf32>, vector<8x128xf32> -> vector<8x128xf32>
    %296 = arith.addf %294, %295 : vector<8x128xf32>
    %297 = arith.negf %296 : vector<8x128xf32>
    %298 = math.exp %297 : vector<8x128xf32>
    %cst_78 = arith.constant 1.000000e+00 : f32
    %299 = vector.broadcast %cst_78 : f32 to vector<8x128xf32>
    %300 = arith.addf %299, %298 : vector<8x128xf32>
    %301 = arith.divf %299, %300 : vector<8x128xf32>
    %302 = math.tanh %296 : vector<8x128xf32>
    %303 = vector.extract_strided_slice %301 {offsets = [0, 0], sizes = [8, 32], strides = [1, 1]} : vector<8x128xf32> to vector<8x32xf32>
    %304 = vector.extract_strided_slice %301 {offsets = [0, 32], sizes = [8, 32], strides = [1, 1]} : vector<8x128xf32> to vector<8x32xf32>
    %305 = vector.extract_strided_slice %302 {offsets = [0, 64], sizes = [8, 32], strides = [1, 1]} : vector<8x128xf32> to vector<8x32xf32>
    %306 = vector.extract_strided_slice %301 {offsets = [0, 96], sizes = [8, 32], strides = [1, 1]} : vector<8x128xf32> to vector<8x32xf32>
    %307 = arith.mulf %304, %271 : vector<8x32xf32>
    %308 = arith.mulf %303, %305 : vector<8x32xf32>
    %309 = arith.addf %307, %308 : vector<8x32xf32>
    %310 = math.tanh %309 : vector<8x32xf32>
    %311 = arith.mulf %306, %310 : vector<8x32xf32>
    %c56_79 = arith.constant 56 : index
    %c0_80 = arith.constant 0 : index
    %312 = vector.load %arg12[%c56_79, %c0_80] : memref<64x32xf32, #tpu.memory_space<vmem>>, vector<8x32xf32>
    tpu.vector_store %arg12[%c56_79, %c0_80], %311 {strides = array<i32>} : memref<64x32xf32, #tpu.memory_space<vmem>>, vector<8x32xf32>,
    %313 = vector.extract_strided_slice %19 {offsets = [0, 0], sizes = [8, 128], strides = [1, 1]} : vector<64x128xf32> to vector<8x128xf32>
    %cst_81 = arith.constant dense<0.000000e+00> : vector<8x128xf32>
    %314 = tpu.matmul %292, %23, %cst_81 {dimension_numbers = #tpu.dot_dimension_numbers<[1], [0], [0], [1], [0, 0, 1, 1], [], []>} : vector<8x32xf32>, vector<32x128xf32>, vector<8x128xf32> -> vector<8x128xf32>
    %315 = arith.addf %313, %314 : vector<8x128xf32>
    %316 = arith.negf %315 : vector<8x128xf32>
    %317 = math.exp %316 : vector<8x128xf32>
    %cst_82 = arith.constant 1.000000e+00 : f32
    %318 = vector.broadcast %cst_82 : f32 to vector<8x128xf32>
    %319 = arith.addf %318, %317 : vector<8x128xf32>
    %320 = arith.divf %318, %319 : vector<8x128xf32>
    %321 = math.tanh %315 : vector<8x128xf32>
    %322 = vector.extract_strided_slice %320 {offsets = [0, 0], sizes = [8, 32], strides = [1, 1]} : vector<8x128xf32> to vector<8x32xf32>
    %323 = vector.extract_strided_slice %320 {offsets = [0, 32], sizes = [8, 32], strides = [1, 1]} : vector<8x128xf32> to vector<8x32xf32>
    %324 = vector.extract_strided_slice %321 {offsets = [0, 64], sizes = [8, 32], strides = [1, 1]} : vector<8x128xf32> to vector<8x32xf32>
    %325 = vector.extract_strided_slice %320 {offsets = [0, 96], sizes = [8, 32], strides = [1, 1]} : vector<8x128xf32> to vector<8x32xf32>
    %326 = arith.mulf %323, %290 : vector<8x32xf32>
    %327 = arith.mulf %322, %324 : vector<8x32xf32>
    %328 = arith.addf %326, %327 : vector<8x32xf32>
    %329 = math.tanh %328 : vector<8x32xf32>
    %330 = arith.mulf %325, %329 : vector<8x32xf32>
    %c0_83 = arith.constant 0 : index
    %c0_84 = arith.constant 0 : index
    %331 = vector.load %arg13[%c0_83, %c0_84] : memref<64x32xf32, #tpu.memory_space<vmem>>, vector<8x32xf32>
    tpu.vector_store %arg13[%c0_83, %c0_84], %330 {strides = array<i32>} : memref<64x32xf32, #tpu.memory_space<vmem>>, vector<8x32xf32>,
    %c0_85 = arith.constant 0 : index
    %c0_86 = arith.constant 0 : index
    %332 = vector.load %arg12[%c0_85, %c0_86] : memref<64x32xf32, #tpu.memory_space<vmem>>, vector<64x32xf32>
    %c0_87 = arith.constant 0 : index
    %c0_88 = arith.constant 0 : index
    %333 = vector.load %arg13[%c0_87, %c0_88] : memref<64x32xf32, #tpu.memory_space<vmem>>, vector<64x32xf32>
    %c0_89 = arith.constant 0 : index
    %c0_90 = arith.constant 0 : index
    %c0_91 = arith.constant 0 : index
    %334 = vector.load %arg6[%c0_89, %c0_90, %c0_91] : memref<4x32x128xf32, #tpu.memory_space<vmem>>, vector<1x32x128xf32>
    %335 = vector.shape_cast %334 : vector<1x32x128xf32> to vector<32x128xf32>
    %cst_92 = arith.constant dense<0.000000e+00> : vector<64x128xf32>
    %336 = tpu.matmul %332, %335, %cst_92 {dimension_numbers = #tpu.dot_dimension_numbers<[1], [0], [0], [1], [0, 0, 1, 1], [], []>} : vector<64x32xf32>, vector<32x128xf32>, vector<64x128xf32> -> vector<64x128xf32>
    %c1_93 = arith.constant 1 : index
    %c0_94 = arith.constant 0 : index
    %c0_95 = arith.constant 0 : index
    %337 = vector.load %arg6[%c1_93, %c0_94, %c0_95] : memref<4x32x128xf32, #tpu.memory_space<vmem>>, vector<1x32x128xf32>
    %338 = vector.shape_cast %337 : vector<1x32x128xf32> to vector<32x128xf32>
    %cst_96 = arith.constant dense<0.000000e+00> : vector<64x128xf32>
    %339 = tpu.matmul %333, %338, %cst_96 {dimension_numbers = #tpu.dot_dimension_numbers<[1], [0], [0], [1], [0, 0, 1, 1], [], []>} : vector<64x32xf32>, vector<32x128xf32>, vector<64x128xf32> -> vector<64x128xf32>
    %340 = arith.addf %336, %339 : vector<64x128xf32>
    %c0_97 = arith.constant 0 : index
    %c0_98 = arith.constant 0 : index
    %c0_99 = arith.constant 0 : index
    %341 = vector.load %arg8[%c0_97, %c0_98, %c0_99] : memref<2x1x128xf32, #tpu.memory_space<vmem>>, vector<1x1x128xf32>
    %342 = vector.shape_cast %341 : vector<1x1x128xf32> to vector<1x128xf32>
    %343 = vector.broadcast %342 : vector<1x128xf32> to vector<64x128xf32>
    %344 = arith.addf %340, %343 : vector<64x128xf32>
    %c2 = arith.constant 2 : index
    %c0_100 = arith.constant 0 : index
    %c0_101 = arith.constant 0 : index
    %345 = vector.load %arg6[%c2, %c0_100, %c0_101] : memref<4x32x128xf32, #tpu.memory_space<vmem>>, vector<1x32x128xf32>
    %346 = vector.shape_cast %345 : vector<1x32x128xf32> to vector<32x128xf32>
    %cst_102 = arith.constant dense<0.000000e+00> : vector<64x128xf32>
    %347 = tpu.matmul %332, %346, %cst_102 {dimension_numbers = #tpu.dot_dimension_numbers<[1], [0], [0], [1], [0, 0, 1, 1], [], []>} : vector<64x32xf32>, vector<32x128xf32>, vector<64x128xf32> -> vector<64x128xf32>
    %c3 = arith.constant 3 : index
    %c0_103 = arith.constant 0 : index
    %c0_104 = arith.constant 0 : index
    %348 = vector.load %arg6[%c3, %c0_103, %c0_104] : memref<4x32x128xf32, #tpu.memory_space<vmem>>, vector<1x32x128xf32>
    %349 = vector.shape_cast %348 : vector<1x32x128xf32> to vector<32x128xf32>
    %cst_105 = arith.constant dense<0.000000e+00> : vector<64x128xf32>
    %350 = tpu.matmul %333, %349, %cst_105 {dimension_numbers = #tpu.dot_dimension_numbers<[1], [0], [0], [1], [0, 0, 1, 1], [], []>} : vector<64x32xf32>, vector<32x128xf32>, vector<64x128xf32> -> vector<64x128xf32>
    %351 = arith.addf %347, %350 : vector<64x128xf32>
    %c1_106 = arith.constant 1 : index
    %c0_107 = arith.constant 0 : index
    %c0_108 = arith.constant 0 : index
    %352 = vector.load %arg8[%c1_106, %c0_107, %c0_108] : memref<2x1x128xf32, #tpu.memory_space<vmem>>, vector<1x1x128xf32>
    %353 = vector.shape_cast %352 : vector<1x1x128xf32> to vector<1x128xf32>
    %354 = vector.broadcast %353 : vector<1x128xf32> to vector<64x128xf32>
    %355 = arith.addf %351, %354 : vector<64x128xf32>
    %c0_109 = arith.constant 0 : index
    %c0_110 = arith.constant 0 : index
    %c0_111 = arith.constant 0 : index
    %356 = vector.load %arg7[%c0_109, %c0_110, %c0_111] : memref<2x32x128xf32, #tpu.memory_space<vmem>>, vector<1x32x128xf32>
    %357 = vector.shape_cast %356 : vector<1x32x128xf32> to vector<32x128xf32>
    %c1_112 = arith.constant 1 : index
    %c0_113 = arith.constant 0 : index
    %c0_114 = arith.constant 0 : index
    %358 = vector.load %arg7[%c1_112, %c0_113, %c0_114] : memref<2x32x128xf32, #tpu.memory_space<vmem>>, vector<1x32x128xf32>
    %359 = vector.shape_cast %358 : vector<1x32x128xf32> to vector<32x128xf32>
    %cst_115 = arith.constant 0.000000e+00 : f32
    %360 = vector.broadcast %cst_115 : f32 to vector<8x32xf32>
    %cst_116 = arith.constant 0.000000e+00 : f32
    %361 = vector.broadcast %cst_116 : f32 to vector<8x32xf32>
    %cst_117 = arith.constant 0.000000e+00 : f32
    %362 = vector.broadcast %cst_117 : f32 to vector<8x32xf32>
    %cst_118 = arith.constant 0.000000e+00 : f32
    %363 = vector.broadcast %cst_118 : f32 to vector<8x32xf32>
    %364 = vector.extract_strided_slice %344 {offsets = [0, 0], sizes = [8, 128], strides = [1, 1]} : vector<64x128xf32> to vector<8x128xf32>
    %cst_119 = arith.constant dense<0.000000e+00> : vector<8x128xf32>
    %365 = tpu.matmul %360, %357, %cst_119 {dimension_numbers = #tpu.dot_dimension_numbers<[1], [0], [0], [1], [0, 0, 1, 1], [], []>} : vector<8x32xf32>, vector<32x128xf32>, vector<8x128xf32> -> vector<8x128xf32>
    %366 = arith.addf %364, %365 : vector<8x128xf32>
    %367 = arith.negf %366 : vector<8x128xf32>
    %368 = math.exp %367 : vector<8x128xf32>
    %cst_120 = arith.constant 1.000000e+00 : f32
    %369 = vector.broadcast %cst_120 : f32 to vector<8x128xf32>
    %370 = arith.addf %369, %368 : vector<8x128xf32>
    %371 = arith.divf %369, %370 : vector<8x128xf32>
    %372 = math.tanh %366 : vector<8x128xf32>
    %373 = vector.extract_strided_slice %371 {offsets = [0, 0], sizes = [8, 32], strides = [1, 1]} : vector<8x128xf32> to vector<8x32xf32>
    %374 = vector.extract_strided_slice %371 {offsets = [0, 32], sizes = [8, 32], strides = [1, 1]} : vector<8x128xf32> to vector<8x32xf32>
    %375 = vector.extract_strided_slice %372 {offsets = [0, 64], sizes = [8, 32], strides = [1, 1]} : vector<8x128xf32> to vector<8x32xf32>
    %376 = vector.extract_strided_slice %371 {offsets = [0, 96], sizes = [8, 32], strides = [1, 1]} : vector<8x128xf32> to vector<8x32xf32>
    %377 = arith.mulf %374, %361 : vector<8x32xf32>
    %378 = arith.mulf %373, %375 : vector<8x32xf32>
    %379 = arith.addf %377, %378 : vector<8x32xf32>
    %380 = math.tanh %379 : vector<8x32xf32>
    %381 = arith.mulf %376, %380 : vector<8x32xf32>
    %c0_121 = arith.constant 0 : index
    %c0_122 = arith.constant 0 : index
    %382 = vector.load %arg14[%c0_121, %c0_122] : memref<64x32xf32, #tpu.memory_space<vmem>>, vector<8x32xf32>
    tpu.vector_store %arg14[%c0_121, %c0_122], %381 {strides = array<i32>} : memref<64x32xf32, #tpu.memory_space<vmem>>, vector<8x32xf32>,
    %383 = vector.extract_strided_slice %355 {offsets = [56, 0], sizes = [8, 128], strides = [1, 1]} : vector<64x128xf32> to vector<8x128xf32>
    %cst_123 = arith.constant dense<0.000000e+00> : vector<8x128xf32>
    %384 = tpu.matmul %362, %359, %cst_123 {dimension_numbers = #tpu.dot_dimension_numbers<[1], [0], [0], [1], [0, 0, 1, 1], [], []>} : vector<8x32xf32>, vector<32x128xf32>, vector<8x128xf32> -> vector<8x128xf32>
    %385 = arith.addf %383, %384 : vector<8x128xf32>
    %386 = arith.negf %385 : vector<8x128xf32>
    %387 = math.exp %386 : vector<8x128xf32>
    %cst_124 = arith.constant 1.000000e+00 : f32
    %388 = vector.broadcast %cst_124 : f32 to vector<8x128xf32>
    %389 = arith.addf %388, %387 : vector<8x128xf32>
    %390 = arith.divf %388, %389 : vector<8x128xf32>
    %391 = math.tanh %385 : vector<8x128xf32>
    %392 = vector.extract_strided_slice %390 {offsets = [0, 0], sizes = [8, 32], strides = [1, 1]} : vector<8x128xf32> to vector<8x32xf32>
    %393 = vector.extract_strided_slice %390 {offsets = [0, 32], sizes = [8, 32], strides = [1, 1]} : vector<8x128xf32> to vector<8x32xf32>
    %394 = vector.extract_strided_slice %391 {offsets = [0, 64], sizes = [8, 32], strides = [1, 1]} : vector<8x128xf32> to vector<8x32xf32>
    %395 = vector.extract_strided_slice %390 {offsets = [0, 96], sizes = [8, 32], strides = [1, 1]} : vector<8x128xf32> to vector<8x32xf32>
    %396 = arith.mulf %393, %363 : vector<8x32xf32>
    %397 = arith.mulf %392, %394 : vector<8x32xf32>
    %398 = arith.addf %396, %397 : vector<8x32xf32>
    %399 = math.tanh %398 : vector<8x32xf32>
    %400 = arith.mulf %395, %399 : vector<8x32xf32>
    %c56_125 = arith.constant 56 : index
    %c0_126 = arith.constant 0 : index
    %401 = vector.load %arg15[%c56_125, %c0_126] : memref<64x32xf32, #tpu.memory_space<vmem>>, vector<8x32xf32>
    tpu.vector_store %arg15[%c56_125, %c0_126], %400 {strides = array<i32>} : memref<64x32xf32, #tpu.memory_space<vmem>>, vector<8x32xf32>,
    %402 = vector.extract_strided_slice %344 {offsets = [8, 0], sizes = [8, 128], strides = [1, 1]} : vector<64x128xf32> to vector<8x128xf32>
    %cst_127 = arith.constant dense<0.000000e+00> : vector<8x128xf32>
    %403 = tpu.matmul %381, %357, %cst_127 {dimension_numbers = #tpu.dot_dimension_numbers<[1], [0], [0], [1], [0, 0, 1, 1], [], []>} : vector<8x32xf32>, vector<32x128xf32>, vector<8x128xf32> -> vector<8x128xf32>
    %404 = arith.addf %402, %403 : vector<8x128xf32>
    %405 = arith.negf %404 : vector<8x128xf32>
    %406 = math.exp %405 : vector<8x128xf32>
    %cst_128 = arith.constant 1.000000e+00 : f32
    %407 = vector.broadcast %cst_128 : f32 to vector<8x128xf32>
    %408 = arith.addf %407, %406 : vector<8x128xf32>
    %409 = arith.divf %407, %408 : vector<8x128xf32>
    %410 = math.tanh %404 : vector<8x128xf32>
    %411 = vector.extract_strided_slice %409 {offsets = [0, 0], sizes = [8, 32], strides = [1, 1]} : vector<8x128xf32> to vector<8x32xf32>
    %412 = vector.extract_strided_slice %409 {offsets = [0, 32], sizes = [8, 32], strides = [1, 1]} : vector<8x128xf32> to vector<8x32xf32>
    %413 = vector.extract_strided_slice %410 {offsets = [0, 64], sizes = [8, 32], strides = [1, 1]} : vector<8x128xf32> to vector<8x32xf32>
    %414 = vector.extract_strided_slice %409 {offsets = [0, 96], sizes = [8, 32], strides = [1, 1]} : vector<8x128xf32> to vector<8x32xf32>
    %415 = arith.mulf %412, %379 : vector<8x32xf32>
    %416 = arith.mulf %411, %413 : vector<8x32xf32>
    %417 = arith.addf %415, %416 : vector<8x32xf32>
    %418 = math.tanh %417 : vector<8x32xf32>
    %419 = arith.mulf %414, %418 : vector<8x32xf32>
    %c8_129 = arith.constant 8 : index
    %c0_130 = arith.constant 0 : index
    %420 = vector.load %arg14[%c8_129, %c0_130] : memref<64x32xf32, #tpu.memory_space<vmem>>, vector<8x32xf32>
    tpu.vector_store %arg14[%c8_129, %c0_130], %419 {strides = array<i32>} : memref<64x32xf32, #tpu.memory_space<vmem>>, vector<8x32xf32>,
    %421 = vector.extract_strided_slice %355 {offsets = [48, 0], sizes = [8, 128], strides = [1, 1]} : vector<64x128xf32> to vector<8x128xf32>
    %cst_131 = arith.constant dense<0.000000e+00> : vector<8x128xf32>
    %422 = tpu.matmul %400, %359, %cst_131 {dimension_numbers = #tpu.dot_dimension_numbers<[1], [0], [0], [1], [0, 0, 1, 1], [], []>} : vector<8x32xf32>, vector<32x128xf32>, vector<8x128xf32> -> vector<8x128xf32>
    %423 = arith.addf %421, %422 : vector<8x128xf32>
    %424 = arith.negf %423 : vector<8x128xf32>
    %425 = math.exp %424 : vector<8x128xf32>
    %cst_132 = arith.constant 1.000000e+00 : f32
    %426 = vector.broadcast %cst_132 : f32 to vector<8x128xf32>
    %427 = arith.addf %426, %425 : vector<8x128xf32>
    %428 = arith.divf %426, %427 : vector<8x128xf32>
    %429 = math.tanh %423 : vector<8x128xf32>
    %430 = vector.extract_strided_slice %428 {offsets = [0, 0], sizes = [8, 32], strides = [1, 1]} : vector<8x128xf32> to vector<8x32xf32>
    %431 = vector.extract_strided_slice %428 {offsets = [0, 32], sizes = [8, 32], strides = [1, 1]} : vector<8x128xf32> to vector<8x32xf32>
    %432 = vector.extract_strided_slice %429 {offsets = [0, 64], sizes = [8, 32], strides = [1, 1]} : vector<8x128xf32> to vector<8x32xf32>
    %433 = vector.extract_strided_slice %428 {offsets = [0, 96], sizes = [8, 32], strides = [1, 1]} : vector<8x128xf32> to vector<8x32xf32>
    %434 = arith.mulf %431, %398 : vector<8x32xf32>
    %435 = arith.mulf %430, %432 : vector<8x32xf32>
    %436 = arith.addf %434, %435 : vector<8x32xf32>
    %437 = math.tanh %436 : vector<8x32xf32>
    %438 = arith.mulf %433, %437 : vector<8x32xf32>
    %c48_133 = arith.constant 48 : index
    %c0_134 = arith.constant 0 : index
    %439 = vector.load %arg15[%c48_133, %c0_134] : memref<64x32xf32, #tpu.memory_space<vmem>>, vector<8x32xf32>
    tpu.vector_store %arg15[%c48_133, %c0_134], %438 {strides = array<i32>} : memref<64x32xf32, #tpu.memory_space<vmem>>, vector<8x32xf32>,
    %440 = vector.extract_strided_slice %344 {offsets = [16, 0], sizes = [8, 128], strides = [1, 1]} : vector<64x128xf32> to vector<8x128xf32>
    %cst_135 = arith.constant dense<0.000000e+00> : vector<8x128xf32>
    %441 = tpu.matmul %419, %357, %cst_135 {dimension_numbers = #tpu.dot_dimension_numbers<[1], [0], [0], [1], [0, 0, 1, 1], [], []>} : vector<8x32xf32>, vector<32x128xf32>, vector<8x128xf32> -> vector<8x128xf32>
    %442 = arith.addf %440, %441 : vector<8x128xf32>
    %443 = arith.negf %442 : vector<8x128xf32>
    %444 = math.exp %443 : vector<8x128xf32>
    %cst_136 = arith.constant 1.000000e+00 : f32
    %445 = vector.broadcast %cst_136 : f32 to vector<8x128xf32>
    %446 = arith.addf %445, %444 : vector<8x128xf32>
    %447 = arith.divf %445, %446 : vector<8x128xf32>
    %448 = math.tanh %442 : vector<8x128xf32>
    %449 = vector.extract_strided_slice %447 {offsets = [0, 0], sizes = [8, 32], strides = [1, 1]} : vector<8x128xf32> to vector<8x32xf32>
    %450 = vector.extract_strided_slice %447 {offsets = [0, 32], sizes = [8, 32], strides = [1, 1]} : vector<8x128xf32> to vector<8x32xf32>
    %451 = vector.extract_strided_slice %448 {offsets = [0, 64], sizes = [8, 32], strides = [1, 1]} : vector<8x128xf32> to vector<8x32xf32>
    %452 = vector.extract_strided_slice %447 {offsets = [0, 96], sizes = [8, 32], strides = [1, 1]} : vector<8x128xf32> to vector<8x32xf32>
    %453 = arith.mulf %450, %417 : vector<8x32xf32>
    %454 = arith.mulf %449, %451 : vector<8x32xf32>
    %455 = arith.addf %453, %454 : vector<8x32xf32>
    %456 = math.tanh %455 : vector<8x32xf32>
    %457 = arith.mulf %452, %456 : vector<8x32xf32>
    %c16_137 = arith.constant 16 : index
    %c0_138 = arith.constant 0 : index
    %458 = vector.load %arg14[%c16_137, %c0_138] : memref<64x32xf32, #tpu.memory_space<vmem>>, vector<8x32xf32>
    tpu.vector_store %arg14[%c16_137, %c0_138], %457 {strides = array<i32>} : memref<64x32xf32, #tpu.memory_space<vmem>>, vector<8x32xf32>,
    %459 = vector.extract_strided_slice %355 {offsets = [40, 0], sizes = [8, 128], strides = [1, 1]} : vector<64x128xf32> to vector<8x128xf32>
    %cst_139 = arith.constant dense<0.000000e+00> : vector<8x128xf32>
    %460 = tpu.matmul %438, %359, %cst_139 {dimension_numbers = #tpu.dot_dimension_numbers<[1], [0], [0], [1], [0, 0, 1, 1], [], []>} : vector<8x32xf32>, vector<32x128xf32>, vector<8x128xf32> -> vector<8x128xf32>
    %461 = arith.addf %459, %460 : vector<8x128xf32>
    %462 = arith.negf %461 : vector<8x128xf32>
    %463 = math.exp %462 : vector<8x128xf32>
    %cst_140 = arith.constant 1.000000e+00 : f32
    %464 = vector.broadcast %cst_140 : f32 to vector<8x128xf32>
    %465 = arith.addf %464, %463 : vector<8x128xf32>
    %466 = arith.divf %464, %465 : vector<8x128xf32>
    %467 = math.tanh %461 : vector<8x128xf32>
    %468 = vector.extract_strided_slice %466 {offsets = [0, 0], sizes = [8, 32], strides = [1, 1]} : vector<8x128xf32> to vector<8x32xf32>
    %469 = vector.extract_strided_slice %466 {offsets = [0, 32], sizes = [8, 32], strides = [1, 1]} : vector<8x128xf32> to vector<8x32xf32>
    %470 = vector.extract_strided_slice %467 {offsets = [0, 64], sizes = [8, 32], strides = [1, 1]} : vector<8x128xf32> to vector<8x32xf32>
    %471 = vector.extract_strided_slice %466 {offsets = [0, 96], sizes = [8, 32], strides = [1, 1]} : vector<8x128xf32> to vector<8x32xf32>
    %472 = arith.mulf %469, %436 : vector<8x32xf32>
    %473 = arith.mulf %468, %470 : vector<8x32xf32>
    %474 = arith.addf %472, %473 : vector<8x32xf32>
    %475 = math.tanh %474 : vector<8x32xf32>
    %476 = arith.mulf %471, %475 : vector<8x32xf32>
    %c40_141 = arith.constant 40 : index
    %c0_142 = arith.constant 0 : index
    %477 = vector.load %arg15[%c40_141, %c0_142] : memref<64x32xf32, #tpu.memory_space<vmem>>, vector<8x32xf32>
    tpu.vector_store %arg15[%c40_141, %c0_142], %476 {strides = array<i32>} : memref<64x32xf32, #tpu.memory_space<vmem>>, vector<8x32xf32>,
    %478 = vector.extract_strided_slice %344 {offsets = [24, 0], sizes = [8, 128], strides = [1, 1]} : vector<64x128xf32> to vector<8x128xf32>
    %cst_143 = arith.constant dense<0.000000e+00> : vector<8x128xf32>
    %479 = tpu.matmul %457, %357, %cst_143 {dimension_numbers = #tpu.dot_dimension_numbers<[1], [0], [0], [1], [0, 0, 1, 1], [], []>} : vector<8x32xf32>, vector<32x128xf32>, vector<8x128xf32> -> vector<8x128xf32>
    %480 = arith.addf %478, %479 : vector<8x128xf32>
    %481 = arith.negf %480 : vector<8x128xf32>
    %482 = math.exp %481 : vector<8x128xf32>
    %cst_144 = arith.constant 1.000000e+00 : f32
    %483 = vector.broadcast %cst_144 : f32 to vector<8x128xf32>
    %484 = arith.addf %483, %482 : vector<8x128xf32>
    %485 = arith.divf %483, %484 : vector<8x128xf32>
    %486 = math.tanh %480 : vector<8x128xf32>
    %487 = vector.extract_strided_slice %485 {offsets = [0, 0], sizes = [8, 32], strides = [1, 1]} : vector<8x128xf32> to vector<8x32xf32>
    %488 = vector.extract_strided_slice %485 {offsets = [0, 32], sizes = [8, 32], strides = [1, 1]} : vector<8x128xf32> to vector<8x32xf32>
    %489 = vector.extract_strided_slice %486 {offsets = [0, 64], sizes = [8, 32], strides = [1, 1]} : vector<8x128xf32> to vector<8x32xf32>
    %490 = vector.extract_strided_slice %485 {offsets = [0, 96], sizes = [8, 32], strides = [1, 1]} : vector<8x128xf32> to vector<8x32xf32>
    %491 = arith.mulf %488, %455 : vector<8x32xf32>
    %492 = arith.mulf %487, %489 : vector<8x32xf32>
    %493 = arith.addf %491, %492 : vector<8x32xf32>
    %494 = math.tanh %493 : vector<8x32xf32>
    %495 = arith.mulf %490, %494 : vector<8x32xf32>
    %c24_145 = arith.constant 24 : index
    %c0_146 = arith.constant 0 : index
    %496 = vector.load %arg14[%c24_145, %c0_146] : memref<64x32xf32, #tpu.memory_space<vmem>>, vector<8x32xf32>
    tpu.vector_store %arg14[%c24_145, %c0_146], %495 {strides = array<i32>} : memref<64x32xf32, #tpu.memory_space<vmem>>, vector<8x32xf32>,
    %497 = vector.extract_strided_slice %355 {offsets = [32, 0], sizes = [8, 128], strides = [1, 1]} : vector<64x128xf32> to vector<8x128xf32>
    %cst_147 = arith.constant dense<0.000000e+00> : vector<8x128xf32>
    %498 = tpu.matmul %476, %359, %cst_147 {dimension_numbers = #tpu.dot_dimension_numbers<[1], [0], [0], [1], [0, 0, 1, 1], [], []>} : vector<8x32xf32>, vector<32x128xf32>, vector<8x128xf32> -> vector<8x128xf32>
    %499 = arith.addf %497, %498 : vector<8x128xf32>
    %500 = arith.negf %499 : vector<8x128xf32>
    %501 = math.exp %500 : vector<8x128xf32>
    %cst_148 = arith.constant 1.000000e+00 : f32
    %502 = vector.broadcast %cst_148 : f32 to vector<8x128xf32>
    %503 = arith.addf %502, %501 : vector<8x128xf32>
    %504 = arith.divf %502, %503 : vector<8x128xf32>
    %505 = math.tanh %499 : vector<8x128xf32>
    %506 = vector.extract_strided_slice %504 {offsets = [0, 0], sizes = [8, 32], strides = [1, 1]} : vector<8x128xf32> to vector<8x32xf32>
    %507 = vector.extract_strided_slice %504 {offsets = [0, 32], sizes = [8, 32], strides = [1, 1]} : vector<8x128xf32> to vector<8x32xf32>
    %508 = vector.extract_strided_slice %505 {offsets = [0, 64], sizes = [8, 32], strides = [1, 1]} : vector<8x128xf32> to vector<8x32xf32>
    %509 = vector.extract_strided_slice %504 {offsets = [0, 96], sizes = [8, 32], strides = [1, 1]} : vector<8x128xf32> to vector<8x32xf32>
    %510 = arith.mulf %507, %474 : vector<8x32xf32>
    %511 = arith.mulf %506, %508 : vector<8x32xf32>
    %512 = arith.addf %510, %511 : vector<8x32xf32>
    %513 = math.tanh %512 : vector<8x32xf32>
    %514 = arith.mulf %509, %513 : vector<8x32xf32>
    %c32_149 = arith.constant 32 : index
    %c0_150 = arith.constant 0 : index
    %515 = vector.load %arg15[%c32_149, %c0_150] : memref<64x32xf32, #tpu.memory_space<vmem>>, vector<8x32xf32>
    tpu.vector_store %arg15[%c32_149, %c0_150], %514 {strides = array<i32>} : memref<64x32xf32, #tpu.memory_space<vmem>>, vector<8x32xf32>,
    %516 = vector.extract_strided_slice %344 {offsets = [32, 0], sizes = [8, 128], strides = [1, 1]} : vector<64x128xf32> to vector<8x128xf32>
    %cst_151 = arith.constant dense<0.000000e+00> : vector<8x128xf32>
    %517 = tpu.matmul %495, %357, %cst_151 {dimension_numbers = #tpu.dot_dimension_numbers<[1], [0], [0], [1], [0, 0, 1, 1], [], []>} : vector<8x32xf32>, vector<32x128xf32>, vector<8x128xf32> -> vector<8x128xf32>
    %518 = arith.addf %516, %517 : vector<8x128xf32>
    %519 = arith.negf %518 : vector<8x128xf32>
    %520 = math.exp %519 : vector<8x128xf32>
    %cst_152 = arith.constant 1.000000e+00 : f32
    %521 = vector.broadcast %cst_152 : f32 to vector<8x128xf32>
    %522 = arith.addf %521, %520 : vector<8x128xf32>
    %523 = arith.divf %521, %522 : vector<8x128xf32>
    %524 = math.tanh %518 : vector<8x128xf32>
    %525 = vector.extract_strided_slice %523 {offsets = [0, 0], sizes = [8, 32], strides = [1, 1]} : vector<8x128xf32> to vector<8x32xf32>
    %526 = vector.extract_strided_slice %523 {offsets = [0, 32], sizes = [8, 32], strides = [1, 1]} : vector<8x128xf32> to vector<8x32xf32>
    %527 = vector.extract_strided_slice %524 {offsets = [0, 64], sizes = [8, 32], strides = [1, 1]} : vector<8x128xf32> to vector<8x32xf32>
    %528 = vector.extract_strided_slice %523 {offsets = [0, 96], sizes = [8, 32], strides = [1, 1]} : vector<8x128xf32> to vector<8x32xf32>
    %529 = arith.mulf %526, %493 : vector<8x32xf32>
    %530 = arith.mulf %525, %527 : vector<8x32xf32>
    %531 = arith.addf %529, %530 : vector<8x32xf32>
    %532 = math.tanh %531 : vector<8x32xf32>
    %533 = arith.mulf %528, %532 : vector<8x32xf32>
    %c32_153 = arith.constant 32 : index
    %c0_154 = arith.constant 0 : index
    %534 = vector.load %arg14[%c32_153, %c0_154] : memref<64x32xf32, #tpu.memory_space<vmem>>, vector<8x32xf32>
    tpu.vector_store %arg14[%c32_153, %c0_154], %533 {strides = array<i32>} : memref<64x32xf32, #tpu.memory_space<vmem>>, vector<8x32xf32>,
    %535 = vector.extract_strided_slice %355 {offsets = [24, 0], sizes = [8, 128], strides = [1, 1]} : vector<64x128xf32> to vector<8x128xf32>
    %cst_155 = arith.constant dense<0.000000e+00> : vector<8x128xf32>
    %536 = tpu.matmul %514, %359, %cst_155 {dimension_numbers = #tpu.dot_dimension_numbers<[1], [0], [0], [1], [0, 0, 1, 1], [], []>} : vector<8x32xf32>, vector<32x128xf32>, vector<8x128xf32> -> vector<8x128xf32>
    %537 = arith.addf %535, %536 : vector<8x128xf32>
    %538 = arith.negf %537 : vector<8x128xf32>
    %539 = math.exp %538 : vector<8x128xf32>
    %cst_156 = arith.constant 1.000000e+00 : f32
    %540 = vector.broadcast %cst_156 : f32 to vector<8x128xf32>
    %541 = arith.addf %540, %539 : vector<8x128xf32>
    %542 = arith.divf %540, %541 : vector<8x128xf32>
    %543 = math.tanh %537 : vector<8x128xf32>
    %544 = vector.extract_strided_slice %542 {offsets = [0, 0], sizes = [8, 32], strides = [1, 1]} : vector<8x128xf32> to vector<8x32xf32>
    %545 = vector.extract_strided_slice %542 {offsets = [0, 32], sizes = [8, 32], strides = [1, 1]} : vector<8x128xf32> to vector<8x32xf32>
    %546 = vector.extract_strided_slice %543 {offsets = [0, 64], sizes = [8, 32], strides = [1, 1]} : vector<8x128xf32> to vector<8x32xf32>
    %547 = vector.extract_strided_slice %542 {offsets = [0, 96], sizes = [8, 32], strides = [1, 1]} : vector<8x128xf32> to vector<8x32xf32>
    %548 = arith.mulf %545, %512 : vector<8x32xf32>
    %549 = arith.mulf %544, %546 : vector<8x32xf32>
    %550 = arith.addf %548, %549 : vector<8x32xf32>
    %551 = math.tanh %550 : vector<8x32xf32>
    %552 = arith.mulf %547, %551 : vector<8x32xf32>
    %c24_157 = arith.constant 24 : index
    %c0_158 = arith.constant 0 : index
    %553 = vector.load %arg15[%c24_157, %c0_158] : memref<64x32xf32, #tpu.memory_space<vmem>>, vector<8x32xf32>
    tpu.vector_store %arg15[%c24_157, %c0_158], %552 {strides = array<i32>} : memref<64x32xf32, #tpu.memory_space<vmem>>, vector<8x32xf32>,
    %554 = vector.extract_strided_slice %344 {offsets = [40, 0], sizes = [8, 128], strides = [1, 1]} : vector<64x128xf32> to vector<8x128xf32>
    %cst_159 = arith.constant dense<0.000000e+00> : vector<8x128xf32>
    %555 = tpu.matmul %533, %357, %cst_159 {dimension_numbers = #tpu.dot_dimension_numbers<[1], [0], [0], [1], [0, 0, 1, 1], [], []>} : vector<8x32xf32>, vector<32x128xf32>, vector<8x128xf32> -> vector<8x128xf32>
    %556 = arith.addf %554, %555 : vector<8x128xf32>
    %557 = arith.negf %556 : vector<8x128xf32>
    %558 = math.exp %557 : vector<8x128xf32>
    %cst_160 = arith.constant 1.000000e+00 : f32
    %559 = vector.broadcast %cst_160 : f32 to vector<8x128xf32>
    %560 = arith.addf %559, %558 : vector<8x128xf32>
    %561 = arith.divf %559, %560 : vector<8x128xf32>
    %562 = math.tanh %556 : vector<8x128xf32>
    %563 = vector.extract_strided_slice %561 {offsets = [0, 0], sizes = [8, 32], strides = [1, 1]} : vector<8x128xf32> to vector<8x32xf32>
    %564 = vector.extract_strided_slice %561 {offsets = [0, 32], sizes = [8, 32], strides = [1, 1]} : vector<8x128xf32> to vector<8x32xf32>
    %565 = vector.extract_strided_slice %562 {offsets = [0, 64], sizes = [8, 32], strides = [1, 1]} : vector<8x128xf32> to vector<8x32xf32>
    %566 = vector.extract_strided_slice %561 {offsets = [0, 96], sizes = [8, 32], strides = [1, 1]} : vector<8x128xf32> to vector<8x32xf32>
    %567 = arith.mulf %564, %531 : vector<8x32xf32>
    %568 = arith.mulf %563, %565 : vector<8x32xf32>
    %569 = arith.addf %567, %568 : vector<8x32xf32>
    %570 = math.tanh %569 : vector<8x32xf32>
    %571 = arith.mulf %566, %570 : vector<8x32xf32>
    %c40_161 = arith.constant 40 : index
    %c0_162 = arith.constant 0 : index
    %572 = vector.load %arg14[%c40_161, %c0_162] : memref<64x32xf32, #tpu.memory_space<vmem>>, vector<8x32xf32>
    tpu.vector_store %arg14[%c40_161, %c0_162], %571 {strides = array<i32>} : memref<64x32xf32, #tpu.memory_space<vmem>>, vector<8x32xf32>,
    %573 = vector.extract_strided_slice %355 {offsets = [16, 0], sizes = [8, 128], strides = [1, 1]} : vector<64x128xf32> to vector<8x128xf32>
    %cst_163 = arith.constant dense<0.000000e+00> : vector<8x128xf32>
    %574 = tpu.matmul %552, %359, %cst_163 {dimension_numbers = #tpu.dot_dimension_numbers<[1], [0], [0], [1], [0, 0, 1, 1], [], []>} : vector<8x32xf32>, vector<32x128xf32>, vector<8x128xf32> -> vector<8x128xf32>
    %575 = arith.addf %573, %574 : vector<8x128xf32>
    %576 = arith.negf %575 : vector<8x128xf32>
    %577 = math.exp %576 : vector<8x128xf32>
    %cst_164 = arith.constant 1.000000e+00 : f32
    %578 = vector.broadcast %cst_164 : f32 to vector<8x128xf32>
    %579 = arith.addf %578, %577 : vector<8x128xf32>
    %580 = arith.divf %578, %579 : vector<8x128xf32>
    %581 = math.tanh %575 : vector<8x128xf32>
    %582 = vector.extract_strided_slice %580 {offsets = [0, 0], sizes = [8, 32], strides = [1, 1]} : vector<8x128xf32> to vector<8x32xf32>
    %583 = vector.extract_strided_slice %580 {offsets = [0, 32], sizes = [8, 32], strides = [1, 1]} : vector<8x128xf32> to vector<8x32xf32>
    %584 = vector.extract_strided_slice %581 {offsets = [0, 64], sizes = [8, 32], strides = [1, 1]} : vector<8x128xf32> to vector<8x32xf32>
    %585 = vector.extract_strided_slice %580 {offsets = [0, 96], sizes = [8, 32], strides = [1, 1]} : vector<8x128xf32> to vector<8x32xf32>
    %586 = arith.mulf %583, %550 : vector<8x32xf32>
    %587 = arith.mulf %582, %584 : vector<8x32xf32>
    %588 = arith.addf %586, %587 : vector<8x32xf32>
    %589 = math.tanh %588 : vector<8x32xf32>
    %590 = arith.mulf %585, %589 : vector<8x32xf32>
    %c16_165 = arith.constant 16 : index
    %c0_166 = arith.constant 0 : index
    %591 = vector.load %arg15[%c16_165, %c0_166] : memref<64x32xf32, #tpu.memory_space<vmem>>, vector<8x32xf32>
    tpu.vector_store %arg15[%c16_165, %c0_166], %590 {strides = array<i32>} : memref<64x32xf32, #tpu.memory_space<vmem>>, vector<8x32xf32>,
    %592 = vector.extract_strided_slice %344 {offsets = [48, 0], sizes = [8, 128], strides = [1, 1]} : vector<64x128xf32> to vector<8x128xf32>
    %cst_167 = arith.constant dense<0.000000e+00> : vector<8x128xf32>
    %593 = tpu.matmul %571, %357, %cst_167 {dimension_numbers = #tpu.dot_dimension_numbers<[1], [0], [0], [1], [0, 0, 1, 1], [], []>} : vector<8x32xf32>, vector<32x128xf32>, vector<8x128xf32> -> vector<8x128xf32>
    %594 = arith.addf %592, %593 : vector<8x128xf32>
    %595 = arith.negf %594 : vector<8x128xf32>
    %596 = math.exp %595 : vector<8x128xf32>
    %cst_168 = arith.constant 1.000000e+00 : f32
    %597 = vector.broadcast %cst_168 : f32 to vector<8x128xf32>
    %598 = arith.addf %597, %596 : vector<8x128xf32>
    %599 = arith.divf %597, %598 : vector<8x128xf32>
    %600 = math.tanh %594 : vector<8x128xf32>
    %601 = vector.extract_strided_slice %599 {offsets = [0, 0], sizes = [8, 32], strides = [1, 1]} : vector<8x128xf32> to vector<8x32xf32>
    %602 = vector.extract_strided_slice %599 {offsets = [0, 32], sizes = [8, 32], strides = [1, 1]} : vector<8x128xf32> to vector<8x32xf32>
    %603 = vector.extract_strided_slice %600 {offsets = [0, 64], sizes = [8, 32], strides = [1, 1]} : vector<8x128xf32> to vector<8x32xf32>
    %604 = vector.extract_strided_slice %599 {offsets = [0, 96], sizes = [8, 32], strides = [1, 1]} : vector<8x128xf32> to vector<8x32xf32>
    %605 = arith.mulf %602, %569 : vector<8x32xf32>
    %606 = arith.mulf %601, %603 : vector<8x32xf32>
    %607 = arith.addf %605, %606 : vector<8x32xf32>
    %608 = math.tanh %607 : vector<8x32xf32>
    %609 = arith.mulf %604, %608 : vector<8x32xf32>
    %c48_169 = arith.constant 48 : index
    %c0_170 = arith.constant 0 : index
    %610 = vector.load %arg14[%c48_169, %c0_170] : memref<64x32xf32, #tpu.memory_space<vmem>>, vector<8x32xf32>
    tpu.vector_store %arg14[%c48_169, %c0_170], %609 {strides = array<i32>} : memref<64x32xf32, #tpu.memory_space<vmem>>, vector<8x32xf32>,
    %611 = vector.extract_strided_slice %355 {offsets = [8, 0], sizes = [8, 128], strides = [1, 1]} : vector<64x128xf32> to vector<8x128xf32>
    %cst_171 = arith.constant dense<0.000000e+00> : vector<8x128xf32>
    %612 = tpu.matmul %590, %359, %cst_171 {dimension_numbers = #tpu.dot_dimension_numbers<[1], [0], [0], [1], [0, 0, 1, 1], [], []>} : vector<8x32xf32>, vector<32x128xf32>, vector<8x128xf32> -> vector<8x128xf32>
    %613 = arith.addf %611, %612 : vector<8x128xf32>
    %614 = arith.negf %613 : vector<8x128xf32>
    %615 = math.exp %614 : vector<8x128xf32>
    %cst_172 = arith.constant 1.000000e+00 : f32
    %616 = vector.broadcast %cst_172 : f32 to vector<8x128xf32>
    %617 = arith.addf %616, %615 : vector<8x128xf32>
    %618 = arith.divf %616, %617 : vector<8x128xf32>
    %619 = math.tanh %613 : vector<8x128xf32>
    %620 = vector.extract_strided_slice %618 {offsets = [0, 0], sizes = [8, 32], strides = [1, 1]} : vector<8x128xf32> to vector<8x32xf32>
    %621 = vector.extract_strided_slice %618 {offsets = [0, 32], sizes = [8, 32], strides = [1, 1]} : vector<8x128xf32> to vector<8x32xf32>
    %622 = vector.extract_strided_slice %619 {offsets = [0, 64], sizes = [8, 32], strides = [1, 1]} : vector<8x128xf32> to vector<8x32xf32>
    %623 = vector.extract_strided_slice %618 {offsets = [0, 96], sizes = [8, 32], strides = [1, 1]} : vector<8x128xf32> to vector<8x32xf32>
    %624 = arith.mulf %621, %588 : vector<8x32xf32>
    %625 = arith.mulf %620, %622 : vector<8x32xf32>
    %626 = arith.addf %624, %625 : vector<8x32xf32>
    %627 = math.tanh %626 : vector<8x32xf32>
    %628 = arith.mulf %623, %627 : vector<8x32xf32>
    %c8_173 = arith.constant 8 : index
    %c0_174 = arith.constant 0 : index
    %629 = vector.load %arg15[%c8_173, %c0_174] : memref<64x32xf32, #tpu.memory_space<vmem>>, vector<8x32xf32>
    tpu.vector_store %arg15[%c8_173, %c0_174], %628 {strides = array<i32>} : memref<64x32xf32, #tpu.memory_space<vmem>>, vector<8x32xf32>,
    %630 = vector.extract_strided_slice %344 {offsets = [56, 0], sizes = [8, 128], strides = [1, 1]} : vector<64x128xf32> to vector<8x128xf32>
    %cst_175 = arith.constant dense<0.000000e+00> : vector<8x128xf32>
    %631 = tpu.matmul %609, %357, %cst_175 {dimension_numbers = #tpu.dot_dimension_numbers<[1], [0], [0], [1], [0, 0, 1, 1], [], []>} : vector<8x32xf32>, vector<32x128xf32>, vector<8x128xf32> -> vector<8x128xf32>
    %632 = arith.addf %630, %631 : vector<8x128xf32>
    %633 = arith.negf %632 : vector<8x128xf32>
    %634 = math.exp %633 : vector<8x128xf32>
    %cst_176 = arith.constant 1.000000e+00 : f32
    %635 = vector.broadcast %cst_176 : f32 to vector<8x128xf32>
    %636 = arith.addf %635, %634 : vector<8x128xf32>
    %637 = arith.divf %635, %636 : vector<8x128xf32>
    %638 = math.tanh %632 : vector<8x128xf32>
    %639 = vector.extract_strided_slice %637 {offsets = [0, 0], sizes = [8, 32], strides = [1, 1]} : vector<8x128xf32> to vector<8x32xf32>
    %640 = vector.extract_strided_slice %637 {offsets = [0, 32], sizes = [8, 32], strides = [1, 1]} : vector<8x128xf32> to vector<8x32xf32>
    %641 = vector.extract_strided_slice %638 {offsets = [0, 64], sizes = [8, 32], strides = [1, 1]} : vector<8x128xf32> to vector<8x32xf32>
    %642 = vector.extract_strided_slice %637 {offsets = [0, 96], sizes = [8, 32], strides = [1, 1]} : vector<8x128xf32> to vector<8x32xf32>
    %643 = arith.mulf %640, %607 : vector<8x32xf32>
    %644 = arith.mulf %639, %641 : vector<8x32xf32>
    %645 = arith.addf %643, %644 : vector<8x32xf32>
    %646 = math.tanh %645 : vector<8x32xf32>
    %647 = arith.mulf %642, %646 : vector<8x32xf32>
    %c56_177 = arith.constant 56 : index
    %c0_178 = arith.constant 0 : index
    %648 = vector.load %arg14[%c56_177, %c0_178] : memref<64x32xf32, #tpu.memory_space<vmem>>, vector<8x32xf32>
    tpu.vector_store %arg14[%c56_177, %c0_178], %647 {strides = array<i32>} : memref<64x32xf32, #tpu.memory_space<vmem>>, vector<8x32xf32>,
    %649 = vector.extract_strided_slice %355 {offsets = [0, 0], sizes = [8, 128], strides = [1, 1]} : vector<64x128xf32> to vector<8x128xf32>
    %cst_179 = arith.constant dense<0.000000e+00> : vector<8x128xf32>
    %650 = tpu.matmul %628, %359, %cst_179 {dimension_numbers = #tpu.dot_dimension_numbers<[1], [0], [0], [1], [0, 0, 1, 1], [], []>} : vector<8x32xf32>, vector<32x128xf32>, vector<8x128xf32> -> vector<8x128xf32>
    %651 = arith.addf %649, %650 : vector<8x128xf32>
    %652 = arith.negf %651 : vector<8x128xf32>
    %653 = math.exp %652 : vector<8x128xf32>
    %cst_180 = arith.constant 1.000000e+00 : f32
    %654 = vector.broadcast %cst_180 : f32 to vector<8x128xf32>
    %655 = arith.addf %654, %653 : vector<8x128xf32>
    %656 = arith.divf %654, %655 : vector<8x128xf32>
    %657 = math.tanh %651 : vector<8x128xf32>
    %658 = vector.extract_strided_slice %656 {offsets = [0, 0], sizes = [8, 32], strides = [1, 1]} : vector<8x128xf32> to vector<8x32xf32>
    %659 = vector.extract_strided_slice %656 {offsets = [0, 32], sizes = [8, 32], strides = [1, 1]} : vector<8x128xf32> to vector<8x32xf32>
    %660 = vector.extract_strided_slice %657 {offsets = [0, 64], sizes = [8, 32], strides = [1, 1]} : vector<8x128xf32> to vector<8x32xf32>
    %661 = vector.extract_strided_slice %656 {offsets = [0, 96], sizes = [8, 32], strides = [1, 1]} : vector<8x128xf32> to vector<8x32xf32>
    %662 = arith.mulf %659, %626 : vector<8x32xf32>
    %663 = arith.mulf %658, %660 : vector<8x32xf32>
    %664 = arith.addf %662, %663 : vector<8x32xf32>
    %665 = math.tanh %664 : vector<8x32xf32>
    %666 = arith.mulf %661, %665 : vector<8x32xf32>
    %c0_181 = arith.constant 0 : index
    %c0_182 = arith.constant 0 : index
    %667 = vector.load %arg15[%c0_181, %c0_182] : memref<64x32xf32, #tpu.memory_space<vmem>>, vector<8x32xf32>
    tpu.vector_store %arg15[%c0_181, %c0_182], %666 {strides = array<i32>} : memref<64x32xf32, #tpu.memory_space<vmem>>, vector<8x32xf32>,
    %c0_183 = arith.constant 0 : index
    %c0_184 = arith.constant 0 : index
    %668 = vector.load %arg14[%c0_183, %c0_184] : memref<64x32xf32, #tpu.memory_space<vmem>>, vector<64x32xf32>
    %c0_185 = arith.constant 0 : index
    %c0_186 = arith.constant 0 : index
    %c0_187 = arith.constant 0 : index
    %669 = vector.load %arg9[%c0_185, %c0_186, %c0_187] : memref<2x32x128xf32, #tpu.memory_space<vmem>>, vector<1x32x128xf32>
    %670 = vector.shape_cast %669 : vector<1x32x128xf32> to vector<32x128xf32>
    %cst_188 = arith.constant dense<0.000000e+00> : vector<64x128xf32>
    %671 = tpu.matmul %668, %670, %cst_188 {dimension_numbers = #tpu.dot_dimension_numbers<[1], [0], [0], [1], [0, 0, 1, 1], [], []>} : vector<64x32xf32>, vector<32x128xf32>, vector<64x128xf32> -> vector<64x128xf32>
    %c0_189 = arith.constant 0 : index
    %c0_190 = arith.constant 0 : index
    %672 = vector.load %arg15[%c0_189, %c0_190] : memref<64x32xf32, #tpu.memory_space<vmem>>, vector<64x32xf32>
    %c1_191 = arith.constant 1 : index
    %c0_192 = arith.constant 0 : index
    %c0_193 = arith.constant 0 : index
    %673 = vector.load %arg9[%c1_191, %c0_192, %c0_193] : memref<2x32x128xf32, #tpu.memory_space<vmem>>, vector<1x32x128xf32>
    %674 = vector.shape_cast %673 : vector<1x32x128xf32> to vector<32x128xf32>
    %cst_194 = arith.constant dense<0.000000e+00> : vector<64x128xf32>
    %675 = tpu.matmul %672, %674, %cst_194 {dimension_numbers = #tpu.dot_dimension_numbers<[1], [0], [0], [1], [0, 0, 1, 1], [], []>} : vector<64x32xf32>, vector<32x128xf32>, vector<64x128xf32> -> vector<64x128xf32>
    %676 = arith.addf %671, %675 : vector<64x128xf32>
    %c0_195 = arith.constant 0 : index
    %c0_196 = arith.constant 0 : index
    %677 = vector.load %arg10[%c0_195, %c0_196] : memref<1x128xf32, #tpu.memory_space<vmem>>, vector<1x128xf32>
    %678 = vector.broadcast %677 : vector<1x128xf32> to vector<64x128xf32>
    %679 = arith.addf %676, %678 : vector<64x128xf32>
    %c0_197 = arith.constant 0 : index
    %c0_198 = arith.constant 0 : index
    %680 = vector.load %arg11[%c0_197, %c0_198] : memref<64x128xf32, #tpu.memory_space<vmem>>, vector<64x128xf32>
    tpu.vector_store %arg11[%c0_197, %c0_198], %679 {strides = array<i32>} : memref<64x128xf32, #tpu.memory_space<vmem>>, vector<64x128xf32>,
    return
  }
}

</mosaic_0001>

<llo_original>
// kernel: forward_pallas.1
$region0: #{forward_pallas.1}
  #allocation0 [shape = 'u32[]', space=smem, size = 0x4, offset = 0x4, fixed_abs, tag = 'smem constant byte address 0x4 - core index']
  #allocation1 [shape = 'u32[144,128]{1,0:T(1,128)}', space=vmem, size = 0x12000, scoped, tag = 'internal scratch']
  #allocation2 [shape = 'f32[64,32]{1,0:T(8,128)}', space=vmem, size = 0x8000, scoped, tag = 'scratch operand']
  #allocation3 [shape = 'f32[64,32]{1,0:T(8,128)}', space=vmem, size = 0x8000, scoped, tag = 'scratch operand']
  #allocation4 [shape = 'f32[64,32]{1,0:T(8,128)}', space=vmem, size = 0x8000, scoped, tag = 'scratch operand']
  #allocation5 [shape = 'f32[64,32]{1,0:T(8,128)}', space=vmem, size = 0x8000, scoped, tag = 'scratch operand']
  %s0 = inlined_call_operand.vmem [shape: f32[64,12], index: 0, kind: input, shape index: {}]
  %s1 = inlined_call_operand.vmem [shape: f32[12,32], index: 1, kind: input, shape index: {}]
  %s2 = inlined_call_operand.vmem [shape: f32[1,32], index: 2, kind: input, shape index: {}]
  %s3 = inlined_call_operand.vmem [shape: f32[2,32,128], index: 3, kind: input, shape index: {}]
  %s4 = inlined_call_operand.vmem [shape: f32[2,32,128], index: 4, kind: input, shape index: {}]
  %s5 = inlined_call_operand.vmem [shape: f32[2,1,128], index: 5, kind: input, shape index: {}]
  %s6 = inlined_call_operand.vmem [shape: f32[4,32,128], index: 6, kind: input, shape index: {}]
  %s7 = inlined_call_operand.vmem [shape: f32[2,32,128], index: 7, kind: input, shape index: {}]
  %s8 = inlined_call_operand.vmem [shape: f32[2,1,128], index: 8, kind: input, shape index: {}]
  %s9 = inlined_call_operand.vmem [shape: f32[2,32,128], index: 9, kind: input, shape index: {}]
  %s10 = inlined_call_operand.vmem [shape: f32[1,128], index: 10, kind: input, shape index: {}]
  %s11 = inlined_call_operand.vmem [shape: f32[64,128], index: 11, kind: output, shape index: {}]
  %s12 = sld [smem:[#allocation0]]
  $region54: #{forward_pallas.1} parent=0
    _
  %s14 = ssub.s32 1, %s12
  %s15 = scalar_select 0, %s14, %s12
  // Predicated region
  $region2: #{forward_pallas.1} parent=0 // pred_check
    _
  $region3: #{forward_pallas.1} parent=0 // pred_check_branch
    %17 = sbr.rel (0) target = $region5
  $region4: #{forward_pallas.1} parent=0 // pred_region
    _
  $region5: #{forward_pallas.1} parent=0 // pred_fallthru
    _
  // Predicated region
  $region6: #{forward_pallas.1} parent=0 // pred_check
    _
  $region7: #{forward_pallas.1} parent=0 // pred_check_branch
    %19 = sbr.rel (0) target = $region9
  $region8: #{forward_pallas.1} parent=0 // pred_region
    _
  $region9: #{forward_pallas.1} parent=0 // pred_fallthru
    _
  // Predicated region
  $region10: #{forward_pallas.1} parent=0 // pred_check
    _
  $region11: #{forward_pallas.1} parent=0 // pred_check_branch
    %21 = sbr.rel (0) target = $region13
  $region12: #{forward_pallas.1} parent=0 // pred_region
    _
  $region13: #{forward_pallas.1} parent=0 // pred_fallthru
    _
  // Predicated region
  $region14: #{forward_pallas.1} parent=0 // pred_check
    _
  $region15: #{forward_pallas.1} parent=0 // pred_check_branch
    %23 = sbr.rel (0) target = $region17
  $region16: #{forward_pallas.1} parent=0 // pred_region
    _
  $region17: #{forward_pallas.1} parent=0 // pred_fallthru
    _
  // Predicated region
  $region18: #{forward_pallas.1} parent=0 // pred_check
    _
  $region19: #{forward_pallas.1} parent=0 // pred_check_branch
    %25 = sbr.rel (0) target = $region21
  $region20: #{forward_pallas.1} parent=0 // pred_region
    _
  $region21: #{forward_pallas.1} parent=0 // pred_fallthru
    _
  // Predicated region
  $region22: #{forward_pallas.1} parent=0 // pred_check
    _
  $region23: #{forward_pallas.1} parent=0 // pred_check_branch
    %27 = sbr.rel (0) target = $region25
  $region24: #{forward_pallas.1} parent=0 // pred_region
    _
  $region25: #{forward_pallas.1} parent=0 // pred_fallthru
    _
  // Predicated region
  $region26: #{forward_pallas.1} parent=0 // pred_check
    _
  $region27: #{forward_pallas.1} parent=0 // pred_check_branch
    %29 = sbr.rel (0) target = $region29
  $region28: #{forward_pallas.1} parent=0 // pred_region
    _
  $region29: #{forward_pallas.1} parent=0 // pred_fallthru
    _
  // Predicated region
  $region30: #{forward_pallas.1} parent=0 // pred_check
    _
  $region31: #{forward_pallas.1} parent=0 // pred_check_branch
    %31 = sbr.rel (0) target = $region33
  $region32: #{forward_pallas.1} parent=0 // pred_region
    _
  $region33: #{forward_pallas.1} parent=0 // pred_fallthru
    _
  // Predicated region
  $region34: #{forward_pallas.1} parent=0 // pred_check
    _
  $region35: #{forward_pallas.1} parent=0 // pred_check_branch
    %33 = sbr.rel (0) target = $region37
  $region36: #{forward_pallas.1} parent=0 // pred_region
    _
  $region37: #{forward_pallas.1} parent=0 // pred_fallthru
    _
  // Predicated region
  $region38: #{forward_pallas.1} parent=0 // pred_check
    _
  $region39: #{forward_pallas.1} parent=0 // pred_check_branch
    %35 = sbr.rel (0) target = $region41
  $region40: #{forward_pallas.1} parent=0 // pred_region
    _
  $region41: #{forward_pallas.1} parent=0 // pred_fallthru
    _
  // Predicated region
  $region42: #{forward_pallas.1} parent=0 // pred_check
    _
  $region43: #{forward_pallas.1} parent=0 // pred_check_branch
    %37 = sbr.rel (0) target = $region45
  $region44: #{forward_pallas.1} parent=0 // pred_region
    _
  $region45: #{forward_pallas.1} parent=0 // pred_fallthru
    _
  %v38 = vld [vmem:[%s0] sm:$0xff]
  %v39 = vld [vmem:[%s0 + $0x8] sm:$0xff]
  %v40 = vld [vmem:[%s0 + $0x10] sm:$0xff]
  %v41 = vld [vmem:[%s0 + $0x18] sm:$0xff]
  %v42 = vld [vmem:[%s0 + $0x20] sm:$0xff]
  %v43 = vld [vmem:[%s0 + $0x28] sm:$0xff]
  %v44 = vld [vmem:[%s0 + $0x30] sm:$0xff]
  %v45 = vld [vmem:[%s0 + $0x38] sm:$0xff]
  %v46 = vld [vmem:[%s1] sm:$0xff]
  %v47 = vld [vmem:[%s1 + $0x8] sm:$0xf]
  %v48 = vld [vmem:[%s2] sm:$0x1]
  %v50 = vlaneseq
  %v51 = vshrl.u32 %v50, 7
  %v52 = vsub.s32 0, %v51
  %v53 = vrot.slane %v48, %v52
  %vm55 = vcmask 97280
  %v57 = vsel %vm55, %v38, 0
  %v60 = vsel %vm55, %v39, 0
  %v63 = vsel %vm55, %v40, 0
  %v66 = vsel %vm55, %v41, 0
  %v69 = vsel %vm55, %v42, 0
  %v72 = vsel %vm55, %v43, 0
  %v75 = vsel %vm55, %v44, 0
  %v78 = vsel %vm55, %v45, 0
  %vm80 = vcmask 1043456
  %v82 = vsel %vm80, %v47, 0
  %84 = vmatprep.subr.mxu0 0.0
  %85 = vmatpush1.msra.mxu0 %v46
  %86 = vmatprep.subr.mxu0 0.0
  %87 = vmatpush1.msra.mxu0 %v82
  %88 = vmatprep.subr.mxu0 0.0
  %89 = vmatpush1.msra.mxu0 0.0
  %90 = vmatprep.subr.mxu0 0.0
  %91 = vmatpush1.msra.mxu0 0.0
  %92 = vmatprep.subr.mxu0 0.0
  %93 = vmatpush1.msra.mxu0 0.0
  %94 = vmatprep.subr.mxu0 0.0
  %95 = vmatpush1.msra.mxu0 0.0
  %96 = vmatprep.subr.mxu0 0.0
  %97 = vmatpush1.msra.mxu0 0.0
  %98 = vmatprep.subr.mxu0 0.0
  %99 = vmatpush1.msra.mxu0 0.0
  %100 = vmatprep.subr.mxu0 0.0
  %101 = vmatpush1.msra.mxu0 0.0
  %102 = vmatprep.subr.mxu0 0.0
  %103 = vmatpush1.msra.mxu0 0.0
  %104 = vmatprep.subr.mxu0 0.0
  %105 = vmatpush1.msra.mxu0 0.0
  %106 = vmatprep.subr.mxu0 0.0
  %107 = vmatpush1.msra.mxu0 0.0
  %108 = vmatprep.subr.mxu0 0.0
  %109 = vmatpush1.msra.mxu0 0.0
  %110 = vmatprep.subr.mxu0 0.0
  %111 = vmatpush1.msra.mxu0 0.0
  %112 = vmatprep.subr.mxu0 0.0
  %113 = vmatpush1.msra.mxu0 0.0
  %114 = vmatprep.subr.mxu0 0.0
  %115 = vmatpush1.msra.mxu0 0.0
  %116 = vmatprep.subr.mxu0 0.0
  %117 = vmatpush1.msra.mxu0 0.0
  %118 = vmatprep.subr.mxu0 0.0
  %119 = vmatpush1.msra.mxu0 0.0
  %120 = vmatprep.subr.mxu0 0.0
  %121 = vmatpush1.msra.mxu0 0.0
  %122 = vmatprep.subr.mxu0 0.0
  %123 = vmatpush1.msra.mxu0 0.0
  %124 = vmatprep.subr.mxu0 0.0
  %125 = vmatpush1.msra.mxu0 0.0
  %126 = vmatprep.subr.mxu0 0.0
  %127 = vmatpush1.msra.mxu0 0.0
  %128 = vmatprep.subr.mxu0 0.0
  %129 = vmatpush1.msra.mxu0 0.0
  %130 = vmatprep.subr.mxu0 0.0
  %131 = vmatpush1.msra.mxu0 0.0
  %132 = vmatprep.subr.mxu0 0.0
  %133 = vmatpush1.msra.mxu0 0.0
  %134 = vmatprep.subr.mxu0 0.0
  %135 = vmatpush1.msra.mxu0 0.0
  %136 = vmatprep.subr.mxu0 0.0
  %137 = vmatpush1.msra.mxu0 0.0
  %138 = vmatprep.subr.mxu0 0.0
  %139 = vmatpush1.msra.mxu0 0.0
  %140 = vmatprep.subr.mxu0 0.0
  %141 = vmatpush1.msra.mxu0 0.0
  %142 = vmatprep.subr.mxu0 0.0
  %143 = vmatpush1.msra.mxu0 0.0
  %144 = vmatprep.subr.mxu0 0.0
  %145 = vmatpush1.msra.mxu0 0.0
  %146 = vmatprep.subr.mxu0 0.0
  %147 = vmatpush1.msra.mxu0 0.0
  %148 = vmatprep.mubr.f32.mxu0 0.0
  %149 = vmatmul.mubr.f32.gmra.mrb[0].mxu0 %v57
  %v150 = vpop.f32.mrb[0].mxu0
  %v151 = vadd.f32 %v53, %v150
  %v152 = vpop.f32.mrb[0].mxu0
  %153 = vmatprep.mubr.f32.mxu0 0.0
  %154 = vmatmul.mubr.f32.gmra.mrb[0].mxu0 %v60
  %v155 = vpop.f32.mrb[0].mxu0
  %v156 = vadd.f32 %v53, %v155
  %v157 = vpop.f32.mrb[0].mxu0
  %158 = vmatprep.mubr.f32.mxu0 0.0
  %159 = vmatmul.mubr.f32.gmra.mrb[0].mxu0 %v63
  %v160 = vpop.f32.mrb[0].mxu0
  %v161 = vadd.f32 %v53, %v160
  %v162 = vpop.f32.mrb[0].mxu0
  %163 = vmatprep.mubr.f32.mxu0 0.0
  %164 = vmatmul.mubr.f32.gmra.mrb[0].mxu0 %v66
  %v165 = vpop.f32.mrb[0].mxu0
  %v166 = vadd.f32 %v53, %v165
  %v167 = vpop.f32.mrb[0].mxu0
  %168 = vmatprep.mubr.f32.mxu0 0.0
  %169 = vmatmul.mubr.f32.gmra.mrb[0].mxu0 %v69
  %v170 = vpop.f32.mrb[0].mxu0
  %v171 = vadd.f32 %v53, %v170
  %v172 = vpop.f32.mrb[0].mxu0
  %173 = vmatprep.mubr.f32.mxu0 0.0
  %174 = vmatmul.mubr.f32.gmra.mrb[0].mxu0 %v72
  %v175 = vpop.f32.mrb[0].mxu0
  %v176 = vadd.f32 %v53, %v175
  %v177 = vpop.f32.mrb[0].mxu0
  %178 = vmatprep.mubr.f32.mxu0 0.0
  %179 = vmatmul.mubr.f32.gmra.mrb[0].mxu0 %v75
  %v180 = vpop.f32.mrb[0].mxu0
  %v181 = vadd.f32 %v53, %v180
  %v182 = vpop.f32.mrb[0].mxu0
  %183 = vmatprep.mubr.f32.mxu0 0.0
  %184 = vmatmul.mubr.f32.gmra.mrb[0].mxu0 %v78
  %v185 = vpop.f32.mrb[0].mxu0
  %v186 = vadd.f32 %v53, %v185
  %v187 = vpop.f32.mrb[0].mxu0
  %188 = vdwg.mxu0
  %v189 = vld [vmem:[%s3] sm:$0xff]
  %v190 = vld [vmem:[%s3 + $0x8] sm:$0xff]
  %v191 = vld [vmem:[%s3 + $0x10] sm:$0xff]
  %v192 = vld [vmem:[%s3 + $0x18] sm:$0xff]
  %v193 = vld [vmem:[%s5] sm:$0x1]
  %v195 = vlaneseq
  %v196 = vshrl.u32 %v195, 7
  %v197 = vsub.s32 0, %v196
  %v198 = vrot.slane %v193, %v197
  %vm200 = vcmask 261120
  %v202 = vsel %vm200, %v151, 0
  %v205 = vsel %vm200, %v156, 0
  %v208 = vsel %vm200, %v161, 0
  %v211 = vsel %vm200, %v166, 0
  %v214 = vsel %vm200, %v171, 0
  %v217 = vsel %vm200, %v176, 0
  %v220 = vsel %vm200, %v181, 0
  %v223 = vsel %vm200, %v186, 0
  %225 = vmatprep.subr.mxu0 0.0
  %226 = vmatpush1.msra.mxu0 %v189
  %227 = vmatprep.subr.mxu0 0.0
  %228 = vmatpush1.msra.mxu0 %v190
  %229 = vmatprep.subr.mxu0 0.0
  %230 = vmatpush1.msra.mxu0 %v191
  %231 = vmatprep.subr.mxu0 0.0
  %232 = vmatpush1.msra.mxu0 %v192
  %233 = vmatprep.subr.mxu0 0.0
  %234 = vmatpush1.msra.mxu0 0.0
  %235 = vmatprep.subr.mxu0 0.0
  %236 = vmatpush1.msra.mxu0 0.0
  %237 = vmatprep.subr.mxu0 0.0
  %238 = vmatpush1.msra.mxu0 0.0
  %239 = vmatprep.subr.mxu0 0.0
  %240 = vmatpush1.msra.mxu0 0.0
  %241 = vmatprep.subr.mxu0 0.0
  %242 = vmatpush1.msra.mxu0 0.0
  %243 = vmatprep.subr.mxu0 0.0
  %244 = vmatpush1.msra.mxu0 0.0
  %245 = vmatprep.subr.mxu0 0.0
  %246 = vmatpush1.msra.mxu0 0.0
  %247 = vmatprep.subr.mxu0 0.0
  %248 = vmatpush1.msra.mxu0 0.0
  %249 = vmatprep.subr.mxu0 0.0
  %250 = vmatpush1.msra.mxu0 0.0
  %251 = vmatprep.subr.mxu0 0.0
  %252 = vmatpush1.msra.mxu0 0.0
  %253 = vmatprep.subr.mxu0 0.0
  %254 = vmatpush1.msra.mxu0 0.0
  %255 = vmatprep.subr.mxu0 0.0
  %256 = vmatpush1.msra.mxu0 0.0
  %257 = vmatprep.subr.mxu0 0.0
  %258 = vmatpush1.msra.mxu0 0.0
  %259 = vmatprep.subr.mxu0 0.0
  %260 = vmatpush1.msra.mxu0 0.0
  %261 = vmatprep.subr.mxu0 0.0
  %262 = vmatpush1.msra.mxu0 0.0
  %263 = vmatprep.subr.mxu0 0.0
  %264 = vmatpush1.msra.mxu0 0.0
  %265 = vmatprep.subr.mxu0 0.0
  %266 = vmatpush1.msra.mxu0 0.0
  %267 = vmatprep.subr.mxu0 0.0
  %268 = vmatpush1.msra.mxu0 0.0
  %269 = vmatprep.subr.mxu0 0.0
  %270 = vmatpush1.msra.mxu0 0.0
  %271 = vmatprep.subr.mxu0 0.0
  %272 = vmatpush1.msra.mxu0 0.0
  %273 = vmatprep.subr.mxu0 0.0
  %274 = vmatpush1.msra.mxu0 0.0
  %275 = vmatprep.subr.mxu0 0.0
  %276 = vmatpush1.msra.mxu0 0.0
  %277 = vmatprep.subr.mxu0 0.0
  %278 = vmatpush1.msra.mxu0 0.0
  %279 = vmatprep.subr.mxu0 0.0
  %280 = vmatpush1.msra.mxu0 0.0
  %281 = vmatprep.subr.mxu0 0.0
  %282 = vmatpush1.msra.mxu0 0.0
  %283 = vmatprep.subr.mxu0 0.0
  %284 = vmatpush1.msra.mxu0 0.0
  %285 = vmatprep.subr.mxu0 0.0
  %286 = vmatpush1.msra.mxu0 0.0
  %287 = vmatprep.subr.mxu0 0.0
  %288 = vmatpush1.msra.mxu0 0.0
  %289 = vmatprep.mubr.f32.mxu0 0.0
  %290 = vmatmul.mubr.f32.gmra.mrb[0].mxu0 %v202
  %v291 = vpop.f32.mrb[0].mxu0
  %v292 = vadd.f32 %v198, %v291
  %v293 = vpop.f32.mrb[0].mxu0
  %294 = vmatprep.mubr.f32.mxu0 0.0
  %295 = vmatmul.mubr.f32.gmra.mrb[0].mxu0 %v205
  %v296 = vpop.f32.mrb[0].mxu0
  %v297 = vadd.f32 %v198, %v296
  %v298 = vpop.f32.mrb[0].mxu0
  %299 = vmatprep.mubr.f32.mxu0 0.0
  %300 = vmatmul.mubr.f32.gmra.mrb[0].mxu0 %v208
  %v301 = vpop.f32.mrb[0].mxu0
  %v302 = vadd.f32 %v198, %v301
  %v303 = vpop.f32.mrb[0].mxu0
  %304 = vmatprep.mubr.f32.mxu0 0.0
  %305 = vmatmul.mubr.f32.gmra.mrb[0].mxu0 %v211
  %v306 = vpop.f32.mrb[0].mxu0
  %v307 = vadd.f32 %v198, %v306
  %v308 = vpop.f32.mrb[0].mxu0
  %309 = vmatprep.mubr.f32.mxu0 0.0
  %310 = vmatmul.mubr.f32.gmra.mrb[0].mxu0 %v214
  %v311 = vpop.f32.mrb[0].mxu0
  %v312 = vadd.f32 %v198, %v311
  %v313 = vpop.f32.mrb[0].mxu0
  %314 = vmatprep.mubr.f32.mxu0 0.0
  %315 = vmatmul.mubr.f32.gmra.mrb[0].mxu0 %v217
  %v316 = vpop.f32.mrb[0].mxu0
  %v317 = vadd.f32 %v198, %v316
  %v318 = vpop.f32.mrb[0].mxu0
  %319 = vmatprep.mubr.f32.mxu0 0.0
  %320 = vmatmul.mubr.f32.gmra.mrb[0].mxu0 %v220
  %v321 = vpop.f32.mrb[0].mxu0
  %v322 = vadd.f32 %v198, %v321
  %v323 = vpop.f32.mrb[0].mxu0
  %324 = vmatprep.mubr.f32.mxu0 0.0
  %325 = vmatmul.mubr.f32.gmra.mrb[0].mxu0 %v223
  %v326 = vpop.f32.mrb[0].mxu0
  %v327 = vadd.f32 %v198, %v326
  %v328 = vpop.f32.mrb[0].mxu0
  %329 = vdwg.mxu0
  %s330 = scalar_lea.vmem %s3, 32
  %v331 = vld [vmem:[%s330] sm:$0xff]
  %v332 = vld [vmem:[%s330 + $0x8] sm:$0xff]
  %v333 = vld [vmem:[%s330 + $0x10] sm:$0xff]
  %v334 = vld [vmem:[%s330 + $0x18] sm:$0xff]
  %s335 = scalar_lea.vmem %s5, 1
  %v336 = vld [vmem:[%s335] sm:$0x1]
  %v338 = vlaneseq
  %v339 = vshrl.u32 %v338, 7
  %v340 = vsub.s32 0, %v339
  %v341 = vrot.slane %v336, %v340
  %343 = vmatprep.subr.mxu0 0.0
  %344 = vmatpush1.msra.mxu0 %v331
  %345 = vmatprep.subr.mxu0 0.0
  %346 = vmatpush1.msra.mxu0 %v332
  %347 = vmatprep.subr.mxu0 0.0
  %348 = vmatpush1.msra.mxu0 %v333
  %349 = vmatprep.subr.mxu0 0.0
  %350 = vmatpush1.msra.mxu0 %v334
  %351 = vmatprep.subr.mxu0 0.0
  %352 = vmatpush1.msra.mxu0 0.0
  %353 = vmatprep.subr.mxu0 0.0
  %354 = vmatpush1.msra.mxu0 0.0
  %355 = vmatprep.subr.mxu0 0.0
  %356 = vmatpush1.msra.mxu0 0.0
  %357 = vmatprep.subr.mxu0 0.0
  %358 = vmatpush1.msra.mxu0 0.0
  %359 = vmatprep.subr.mxu0 0.0
  %360 = vmatpush1.msra.mxu0 0.0
  %361 = vmatprep.subr.mxu0 0.0
  %362 = vmatpush1.msra.mxu0 0.0
  %363 = vmatprep.subr.mxu0 0.0
  %364 = vmatpush1.msra.mxu0 0.0
  %365 = vmatprep.subr.mxu0 0.0
  %366 = vmatpush1.msra.mxu0 0.0
  %367 = vmatprep.subr.mxu0 0.0
  %368 = vmatpush1.msra.mxu0 0.0
  %369 = vmatprep.subr.mxu0 0.0
  %370 = vmatpush1.msra.mxu0 0.0
  %371 = vmatprep.subr.mxu0 0.0
  %372 = vmatpush1.msra.mxu0 0.0
  %373 = vmatprep.subr.mxu0 0.0
  %374 = vmatpush1.msra.mxu0 0.0
  %375 = vmatprep.subr.mxu0 0.0
  %376 = vmatpush1.msra.mxu0 0.0
  %377 = vmatprep.subr.mxu0 0.0
  %378 = vmatpush1.msra.mxu0 0.0
  %379 = vmatprep.subr.mxu0 0.0
  %380 = vmatpush1.msra.mxu0 0.0
  %381 = vmatprep.subr.mxu0 0.0
  %382 = vmatpush1.msra.mxu0 0.0
  %383 = vmatprep.subr.mxu0 0.0
  %384 = vmatpush1.msra.mxu0 0.0
  %385 = vmatprep.subr.mxu0 0.0
  %386 = vmatpush1.msra.mxu0 0.0
  %387 = vmatprep.subr.mxu0 0.0
  %388 = vmatpush1.msra.mxu0 0.0
  %389 = vmatprep.subr.mxu0 0.0
  %390 = vmatpush1.msra.mxu0 0.0
  %391 = vmatprep.subr.mxu0 0.0
  %392 = vmatpush1.msra.mxu0 0.0
  %393 = vmatprep.subr.mxu0 0.0
  %394 = vmatpush1.msra.mxu0 0.0
  %395 = vmatprep.subr.mxu0 0.0
  %396 = vmatpush1.msra.mxu0 0.0
  %397 = vmatprep.subr.mxu0 0.0
  %398 = vmatpush1.msra.mxu0 0.0
  %399 = vmatprep.subr.mxu0 0.0
  %400 = vmatpush1.msra.mxu0 0.0
  %401 = vmatprep.subr.mxu0 0.0
  %402 = vmatpush1.msra.mxu0 0.0
  %403 = vmatprep.subr.mxu0 0.0
  %404 = vmatpush1.msra.mxu0 0.0
  %405 = vmatprep.subr.mxu0 0.0
  %406 = vmatpush1.msra.mxu0 0.0
  %407 = vmatprep.mubr.f32.mxu0 0.0
  %408 = vmatmul.mubr.f32.gmra.mrb[0].mxu0 %v202
  %v409 = vpop.f32.mrb[0].mxu0
  %v410 = vadd.f32 %v341, %v409
  %v411 = vpop.f32.mrb[0].mxu0
  %412 = vmatprep.mubr.f32.mxu0 0.0
  %413 = vmatmul.mubr.f32.gmra.mrb[0].mxu0 %v205
  %v414 = vpop.f32.mrb[0].mxu0
  %v415 = vadd.f32 %v341, %v414
  %v416 = vpop.f32.mrb[0].mxu0
  %417 = vmatprep.mubr.f32.mxu0 0.0
  %418 = vmatmul.mubr.f32.gmra.mrb[0].mxu0 %v208
  %v419 = vpop.f32.mrb[0].mxu0
  %v420 = vadd.f32 %v341, %v419
  %v421 = vpop.f32.mrb[0].mxu0
  %422 = vmatprep.mubr.f32.mxu0 0.0
  %423 = vmatmul.mubr.f32.gmra.mrb[0].mxu0 %v211
  %v424 = vpop.f32.mrb[0].mxu0
  %v425 = vadd.f32 %v341, %v424
  %v426 = vpop.f32.mrb[0].mxu0
  %427 = vmatprep.mubr.f32.mxu0 0.0
  %428 = vmatmul.mubr.f32.gmra.mrb[0].mxu0 %v214
  %v429 = vpop.f32.mrb[0].mxu0
  %v430 = vadd.f32 %v341, %v429
  %v431 = vpop.f32.mrb[0].mxu0
  %432 = vmatprep.mubr.f32.mxu0 0.0
  %433 = vmatmul.mubr.f32.gmra.mrb[0].mxu0 %v217
  %v434 = vpop.f32.mrb[0].mxu0
  %v435 = vadd.f32 %v341, %v434
  %v436 = vpop.f32.mrb[0].mxu0
  %437 = vmatprep.mubr.f32.mxu0 0.0
  %438 = vmatmul.mubr.f32.gmra.mrb[0].mxu0 %v220
  %v439 = vpop.f32.mrb[0].mxu0
  %v440 = vadd.f32 %v341, %v439
  %v441 = vpop.f32.mrb[0].mxu0
  %442 = vmatprep.mubr.f32.mxu0 0.0
  %443 = vmatmul.mubr.f32.gmra.mrb[0].mxu0 %v223
  %v444 = vpop.f32.mrb[0].mxu0
  %v445 = vadd.f32 %v341, %v444
  %v446 = vpop.f32.mrb[0].mxu0
  %447 = vdwg.mxu0
  %v448 = vld [vmem:[%s4] sm:$0xff]
  %v449 = vld [vmem:[%s4 + $0x8] sm:$0xff]
  %v450 = vld [vmem:[%s4 + $0x10] sm:$0xff]
  %v451 = vld [vmem:[%s4 + $0x18] sm:$0xff]
  %s452 = scalar_lea.vmem %s4, 32
  %v453 = vld [vmem:[%s452] sm:$0xff]
  %v454 = vld [vmem:[%s452 + $0x8] sm:$0xff]
  %v455 = vld [vmem:[%s452 + $0x10] sm:$0xff]
  %v456 = vld [vmem:[%s452 + $0x18] sm:$0xff]
  %v458 = vsel %vm200, 0.0, 0
  %460 = vmatprep.subr.mxu0 0.0
  %461 = vmatpush1.msra.mxu0 %v448
  %462 = vmatprep.subr.mxu0 0.0
  %463 = vmatpush1.msra.mxu0 %v449
  %464 = vmatprep.subr.mxu0 0.0
  %465 = vmatpush1.msra.mxu0 %v450
  %466 = vmatprep.subr.mxu0 0.0
  %467 = vmatpush1.msra.mxu0 %v451
  %468 = vmatprep.subr.mxu0 0.0
  %469 = vmatpush1.msra.mxu0 0.0
  %470 = vmatprep.subr.mxu0 0.0
  %471 = vmatpush1.msra.mxu0 0.0
  %472 = vmatprep.subr.mxu0 0.0
  %473 = vmatpush1.msra.mxu0 0.0
  %474 = vmatprep.subr.mxu0 0.0
  %475 = vmatpush1.msra.mxu0 0.0
  %476 = vmatprep.subr.mxu0 0.0
  %477 = vmatpush1.msra.mxu0 0.0
  %478 = vmatprep.subr.mxu0 0.0
  %479 = vmatpush1.msra.mxu0 0.0
  %480 = vmatprep.subr.mxu0 0.0
  %481 = vmatpush1.msra.mxu0 0.0
  %482 = vmatprep.subr.mxu0 0.0
  %483 = vmatpush1.msra.mxu0 0.0
  %484 = vmatprep.subr.mxu0 0.0
  %485 = vmatpush1.msra.mxu0 0.0
  %486 = vmatprep.subr.mxu0 0.0
  %487 = vmatpush1.msra.mxu0 0.0
  %488 = vmatprep.subr.mxu0 0.0
  %489 = vmatpush1.msra.mxu0 0.0
  %490 = vmatprep.subr.mxu0 0.0
  %491 = vmatpush1.msra.mxu0 0.0
  %492 = vmatprep.subr.mxu0 0.0
  %493 = vmatpush1.msra.mxu0 0.0
  %494 = vmatprep.subr.mxu0 0.0
  %495 = vmatpush1.msra.mxu0 0.0
  %496 = vmatprep.subr.mxu0 0.0
  %497 = vmatpush1.msra.mxu0 0.0
  %498 = vmatprep.subr.mxu0 0.0
  %499 = vmatpush1.msra.mxu0 0.0
  %500 = vmatprep.subr.mxu0 0.0
  %501 = vmatpush1.msra.mxu0 0.0
  %502 = vmatprep.subr.mxu0 0.0
  %503 = vmatpush1.msra.mxu0 0.0
  %504 = vmatprep.subr.mxu0 0.0
  %505 = vmatpush1.msra.mxu0 0.0
  %506 = vmatprep.subr.mxu0 0.0
  %507 = vmatpush1.msra.mxu0 0.0
  %508 = vmatprep.subr.mxu0 0.0
  %509 = vmatpush1.msra.mxu0 0.0
  %510 = vmatprep.subr.mxu0 0.0
  %511 = vmatpush1.msra.mxu0 0.0
  %512 = vmatprep.subr.mxu0 0.0
  %513 = vmatpush1.msra.mxu0 0.0
  %514 = vmatprep.subr.mxu0 0.0
  %515 = vmatpush1.msra.mxu0 0.0
  %516 = vmatprep.subr.mxu0 0.0
  %517 = vmatpush1.msra.mxu0 0.0
  %518 = vmatprep.subr.mxu0 0.0
  %519 = vmatpush1.msra.mxu0 0.0
  %520 = vmatprep.subr.mxu0 0.0
  %521 = vmatpush1.msra.mxu0 0.0
  %522 = vmatprep.subr.mxu0 0.0
  %523 = vmatpush1.msra.mxu0 0.0
  %524 = vmatprep.mubr.f32.mxu0 0.0
  %525 = vmatmul.mubr.f32.gmra.mrb[0].mxu0 %v458
  %v526 = vpop.f32.mrb[0].mxu0
  %v527 = vadd.f32 0.0, %v526
  %v528 = vpop.f32.mrb[0].mxu0
  %529 = vdwg.mxu0
  %v530 = vadd.f32 %v292, %v527
  %v531 = vxor.u32 %v530, 2147483648
  %v532 = vmul.f32 %v531, 1.442695
  %v533 = vpow.pop %v532
  %v534 = vadd.f32 %v533, 1.0
  %v535 = vrcp.pop %v534
  %v536 = vmul.f32 1.0, %v535
  %v537 = vtanh.pop %v530
  %v538 = vmul.f32 %v536, 0.0
  %540 = vrot.lane.b32.xlu0 %v537, 64
  %v541 = vpop.permute.xlu0 %540
  %v543 = vmul.f32 %v536, %v541
  %545 = vrot.lane.b32.xlu0 %v543, 32
  %v546 = vpop.permute.xlu0 %545
  %v548 = vadd.f32 %v538, %v546
  %v549 = vtanh.pop %v548
  %551 = vrot.lane.b32.xlu0 %v549, 64
  %v552 = vpop.permute.xlu0 %551
  %v554 = vmul.f32 %v536, %v552
  %556 = vrot.lane.b32.xlu0 %v554, 32
  %v557 = vpop.permute.xlu0 %556
  %559 = vst.msk [vmem:[#allocation2] sm:$0xff] %vm200, %v557
  %560 = vmatprep.subr.mxu0 0.0
  %561 = vmatpush1.msra.mxu0 %v453
  %562 = vmatprep.subr.mxu0 0.0
  %563 = vmatpush1.msra.mxu0 %v454
  %564 = vmatprep.subr.mxu0 0.0
  %565 = vmatpush1.msra.mxu0 %v455
  %566 = vmatprep.subr.mxu0 0.0
  %567 = vmatpush1.msra.mxu0 %v456
  %568 = vmatprep.subr.mxu0 0.0
  %569 = vmatpush1.msra.mxu0 0.0
  %570 = vmatprep.subr.mxu0 0.0
  %571 = vmatpush1.msra.mxu0 0.0
  %572 = vmatprep.subr.mxu0 0.0
  %573 = vmatpush1.msra.mxu0 0.0
  %574 = vmatprep.subr.mxu0 0.0
  %575 = vmatpush1.msra.mxu0 0.0
  %576 = vmatprep.subr.mxu0 0.0
  %577 = vmatpush1.msra.mxu0 0.0
  %578 = vmatprep.subr.mxu0 0.0
  %579 = vmatpush1.msra.mxu0 0.0
  %580 = vmatprep.subr.mxu0 0.0
  %581 = vmatpush1.msra.mxu0 0.0
  %582 = vmatprep.subr.mxu0 0.0
  %583 = vmatpush1.msra.mxu0 0.0
  %584 = vmatprep.subr.mxu0 0.0
  %585 = vmatpush1.msra.mxu0 0.0
  %586 = vmatprep.subr.mxu0 0.0
  %587 = vmatpush1.msra.mxu0 0.0
  %588 = vmatprep.subr.mxu0 0.0
  %589 = vmatpush1.msra.mxu0 0.0
  %590 = vmatprep.subr.mxu0 0.0
  %591 = vmatpush1.msra.mxu0 0.0
  %592 = vmatprep.subr.mxu0 0.0
  %593 = vmatpush1.msra.mxu0 0.0
  %594 = vmatprep.subr.mxu0 0.0
  %595 = vmatpush1.msra.mxu0 0.0
  %596 = vmatprep.subr.mxu0 0.0
  %597 = vmatpush1.msra.mxu0 0.0
  %598 = vmatprep.subr.mxu0 0.0
  %599 = vmatpush1.msra.mxu0 0.0
  %600 = vmatprep.subr.mxu0 0.0
  %601 = vmatpush1.msra.mxu0 0.0
  %602 = vmatprep.subr.mxu0 0.0
  %603 = vmatpush1.msra.mxu0 0.0
  %604 = vmatprep.subr.mxu0 0.0
  %605 = vmatpush1.msra.mxu0 0.0
  %606 = vmatprep.subr.mxu0 0.0
  %607 = vmatpush1.msra.mxu0 0.0
  %608 = vmatprep.subr.mxu0 0.0
  %609 = vmatpush1.msra.mxu0 0.0
  %610 = vmatprep.subr.mxu0 0.0
  %611 = vmatpush1.msra.mxu0 0.0
  %612 = vmatprep.subr.mxu0 0.0
  %613 = vmatpush1.msra.mxu0 0.0
  %614 = vmatprep.subr.mxu0 0.0
  %615 = vmatpush1.msra.mxu0 0.0
  %616 = vmatprep.subr.mxu0 0.0
  %617 = vmatpush1.msra.mxu0 0.0
  %618 = vmatprep.subr.mxu0 0.0
  %619 = vmatpush1.msra.mxu0 0.0
  %620 = vmatprep.subr.mxu0 0.0
  %621 = vmatpush1.msra.mxu0 0.0
  %622 = vmatprep.subr.mxu0 0.0
  %623 = vmatpush1.msra.mxu0 0.0
  %624 = vmatprep.mubr.f32.mxu0 0.0
  %625 = vmatmul.mubr.f32.gmra.mrb[0].mxu0 %v458
  %v626 = vpop.f32.mrb[0].mxu0
  %v627 = vadd.f32 0.0, %v626
  %v628 = vpop.f32.mrb[0].mxu0
  %629 = vdwg.mxu0
  %v630 = vadd.f32 %v445, %v627
  %v631 = vxor.u32 %v630, 2147483648
  %v632 = vmul.f32 %v631, 1.442695
  %v633 = vpow.pop %v632
  %v634 = vadd.f32 %v633, 1.0
  %v635 = vrcp.pop %v634
  %v636 = vmul.f32 1.0, %v635
  %v637 = vtanh.pop %v630
  %v638 = vmul.f32 %v636, 0.0
  %640 = vrot.lane.b32.xlu0 %v637, 64
  %v641 = vpop.permute.xlu0 %640
  %v643 = vmul.f32 %v636, %v641
  %645 = vrot.lane.b32.xlu0 %v643, 32
  %v646 = vpop.permute.xlu0 %645
  %v648 = vadd.f32 %v638, %v646
  %v649 = vtanh.pop %v648
  %651 = vrot.lane.b32.xlu0 %v649, 64
  %v652 = vpop.permute.xlu0 %651
  %v654 = vmul.f32 %v636, %v652
  %656 = vrot.lane.b32.xlu0 %v654, 32
  %v657 = vpop.permute.xlu0 %656
  %659 = vst.msk [vmem:[#allocation3 + $0x38] sm:$0xff] %vm200, %v657
  %v660 = vsel %vm200, %v557, 0
  %662 = vmatprep.subr.mxu0 0.0
  %663 = vmatpush1.msra.mxu0 %v448
  %664 = vmatprep.subr.mxu0 0.0
  %665 = vmatpush1.msra.mxu0 %v449
  %666 = vmatprep.subr.mxu0 0.0
  %667 = vmatpush1.msra.mxu0 %v450
  %668 = vmatprep.subr.mxu0 0.0
  %669 = vmatpush1.msra.mxu0 %v451
  %670 = vmatprep.subr.mxu0 0.0
  %671 = vmatpush1.msra.mxu0 0.0
  %672 = vmatprep.subr.mxu0 0.0
  %673 = vmatpush1.msra.mxu0 0.0
  %674 = vmatprep.subr.mxu0 0.0
  %675 = vmatpush1.msra.mxu0 0.0
  %676 = vmatprep.subr.mxu0 0.0
  %677 = vmatpush1.msra.mxu0 0.0
  %678 = vmatprep.subr.mxu0 0.0
  %679 = vmatpush1.msra.mxu0 0.0
  %680 = vmatprep.subr.mxu0 0.0
  %681 = vmatpush1.msra.mxu0 0.0
  %682 = vmatprep.subr.mxu0 0.0
  %683 = vmatpush1.msra.mxu0 0.0
  %684 = vmatprep.subr.mxu0 0.0
  %685 = vmatpush1.msra.mxu0 0.0
  %686 = vmatprep.subr.mxu0 0.0
  %687 = vmatpush1.msra.mxu0 0.0
  %688 = vmatprep.subr.mxu0 0.0
  %689 = vmatpush1.msra.mxu0 0.0
  %690 = vmatprep.subr.mxu0 0.0
  %691 = vmatpush1.msra.mxu0 0.0
  %692 = vmatprep.subr.mxu0 0.0
  %693 = vmatpush1.msra.mxu0 0.0
  %694 = vmatprep.subr.mxu0 0.0
  %695 = vmatpush1.msra.mxu0 0.0
  %696 = vmatprep.subr.mxu0 0.0
  %697 = vmatpush1.msra.mxu0 0.0
  %698 = vmatprep.subr.mxu0 0.0
  %699 = vmatpush1.msra.mxu0 0.0
  %700 = vmatprep.subr.mxu0 0.0
  %701 = vmatpush1.msra.mxu0 0.0
  %702 = vmatprep.subr.mxu0 0.0
  %703 = vmatpush1.msra.mxu0 0.0
  %704 = vmatprep.subr.mxu0 0.0
  %705 = vmatpush1.msra.mxu0 0.0
  %706 = vmatprep.subr.mxu0 0.0
  %707 = vmatpush1.msra.mxu0 0.0
  %708 = vmatprep.subr.mxu0 0.0
  %709 = vmatpush1.msra.mxu0 0.0
  %710 = vmatprep.subr.mxu0 0.0
  %711 = vmatpush1.msra.mxu0 0.0
  %712 = vmatprep.subr.mxu0 0.0
  %713 = vmatpush1.msra.mxu0 0.0
  %714 = vmatprep.subr.mxu0 0.0
  %715 = vmatpush1.msra.mxu0 0.0
  %716 = vmatprep.subr.mxu0 0.0
  %717 = vmatpush1.msra.mxu0 0.0
  %718 = vmatprep.subr.mxu0 0.0
  %719 = vmatpush1.msra.mxu0 0.0
  %720 = vmatprep.subr.mxu0 0.0
  %721 = vmatpush1.msra.mxu0 0.0
  %722 = vmatprep.subr.mxu0 0.0
  %723 = vmatpush1.msra.mxu0 0.0
  %724 = vmatprep.subr.mxu0 0.0
  %725 = vmatpush1.msra.mxu0 0.0
  %726 = vmatprep.mubr.f32.mxu0 0.0
  %727 = vmatmul.mubr.f32.gmra.mrb[0].mxu0 %v660
  %v728 = vpop.f32.mrb[0].mxu0
  %v729 = vadd.f32 0.0, %v728
  %v730 = vpop.f32.mrb[0].mxu0
  %731 = vdwg.mxu0
  %v732 = vadd.f32 %v297, %v729
  %v733 = vxor.u32 %v732, 2147483648
  %v734 = vmul.f32 %v733, 1.442695
  %v735 = vpow.pop %v734
  %v736 = vadd.f32 %v735, 1.0
  %v737 = vrcp.pop %v736
  %v738 = vmul.f32 1.0, %v737
  %v739 = vtanh.pop %v732
  %v740 = vmul.f32 %v738, %v548
  %742 = vrot.lane.b32.xlu0 %v739, 64
  %v743 = vpop.permute.xlu0 %742
  %v745 = vmul.f32 %v738, %v743
  %747 = vrot.lane.b32.xlu0 %v745, 32
  %v748 = vpop.permute.xlu0 %747
  %v750 = vadd.f32 %v740, %v748
  %v751 = vtanh.pop %v750
  %753 = vrot.lane.b32.xlu0 %v751, 64
  %v754 = vpop.permute.xlu0 %753
  %v756 = vmul.f32 %v738, %v754
  %758 = vrot.lane.b32.xlu0 %v756, 32
  %v759 = vpop.permute.xlu0 %758
  %761 = vst.msk [vmem:[#allocation2 + $0x8] sm:$0xff] %vm200, %v759
  %v762 = vsel %vm200, %v657, 0
  %764 = vmatprep.subr.mxu0 0.0
  %765 = vmatpush1.msra.mxu0 %v453
  %766 = vmatprep.subr.mxu0 0.0
  %767 = vmatpush1.msra.mxu0 %v454
  %768 = vmatprep.subr.mxu0 0.0
  %769 = vmatpush1.msra.mxu0 %v455
  %770 = vmatprep.subr.mxu0 0.0
  %771 = vmatpush1.msra.mxu0 %v456
  %772 = vmatprep.subr.mxu0 0.0
  %773 = vmatpush1.msra.mxu0 0.0
  %774 = vmatprep.subr.mxu0 0.0
  %775 = vmatpush1.msra.mxu0 0.0
  %776 = vmatprep.subr.mxu0 0.0
  %777 = vmatpush1.msra.mxu0 0.0
  %778 = vmatprep.subr.mxu0 0.0
  %779 = vmatpush1.msra.mxu0 0.0
  %780 = vmatprep.subr.mxu0 0.0
  %781 = vmatpush1.msra.mxu0 0.0
  %782 = vmatprep.subr.mxu0 0.0
  %783 = vmatpush1.msra.mxu0 0.0
  %784 = vmatprep.subr.mxu0 0.0
  %785 = vmatpush1.msra.mxu0 0.0
  %786 = vmatprep.subr.mxu0 0.0
  %787 = vmatpush1.msra.mxu0 0.0
  %788 = vmatprep.subr.mxu0 0.0
  %789 = vmatpush1.msra.mxu0 0.0
  %790 = vmatprep.subr.mxu0 0.0
  %791 = vmatpush1.msra.mxu0 0.0
  %792 = vmatprep.subr.mxu0 0.0
  %793 = vmatpush1.msra.mxu0 0.0
  %794 = vmatprep.subr.mxu0 0.0
  %795 = vmatpush1.msra.mxu0 0.0
  %796 = vmatprep.subr.mxu0 0.0
  %797 = vmatpush1.msra.mxu0 0.0
  %798 = vmatprep.subr.mxu0 0.0
  %799 = vmatpush1.msra.mxu0 0.0
  %800 = vmatprep.subr.mxu0 0.0
  %801 = vmatpush1.msra.mxu0 0.0
  %802 = vmatprep.subr.mxu0 0.0
  %803 = vmatpush1.msra.mxu0 0.0
  %804 = vmatprep.subr.mxu0 0.0
  %805 = vmatpush1.msra.mxu0 0.0
  %806 = vmatprep.subr.mxu0 0.0
  %807 = vmatpush1.msra.mxu0 0.0
  %808 = vmatprep.subr.mxu0 0.0
  %809 = vmatpush1.msra.mxu0 0.0
  %810 = vmatprep.subr.mxu0 0.0
  %811 = vmatpush1.msra.mxu0 0.0
  %812 = vmatprep.subr.mxu0 0.0
  %813 = vmatpush1.msra.mxu0 0.0
  %814 = vmatprep.subr.mxu0 0.0
  %815 = vmatpush1.msra.mxu0 0.0
  %816 = vmatprep.subr.mxu0 0.0
  %817 = vmatpush1.msra.mxu0 0.0
  %818 = vmatprep.subr.mxu0 0.0
  %819 = vmatpush1.msra.mxu0 0.0
  %820 = vmatprep.subr.mxu0 0.0
  %821 = vmatpush1.msra.mxu0 0.0
  %822 = vmatprep.subr.mxu0 0.0
  %823 = vmatpush1.msra.mxu0 0.0
  %824 = vmatprep.subr.mxu0 0.0
  %825 = vmatpush1.msra.mxu0 0.0
  %826 = vmatprep.subr.mxu0 0.0
  %827 = vmatpush1.msra.mxu0 0.0
  %828 = vmatprep.mubr.f32.mxu0 0.0
  %829 = vmatmul.mubr.f32.gmra.mrb[0].mxu0 %v762
  %v830 = vpop.f32.mrb[0].mxu0
  %v831 = vadd.f32 0.0, %v830
  %v832 = vpop.f32.mrb[0].mxu0
  %833 = vdwg.mxu0
  %v834 = vadd.f32 %v440, %v831
  %v835 = vxor.u32 %v834, 2147483648
  %v836 = vmul.f32 %v835, 1.442695
  %v837 = vpow.pop %v836
  %v838 = vadd.f32 %v837, 1.0
  %v839 = vrcp.pop %v838
  %v840 = vmul.f32 1.0, %v839
  %v841 = vtanh.pop %v834
  %v842 = vmul.f32 %v840, %v648
  %844 = vrot.lane.b32.xlu0 %v841, 64
  %v845 = vpop.permute.xlu0 %844
  %v847 = vmul.f32 %v840, %v845
  %849 = vrot.lane.b32.xlu0 %v847, 32
  %v850 = vpop.permute.xlu0 %849
  %v852 = vadd.f32 %v842, %v850
  %v853 = vtanh.pop %v852
  %855 = vrot.lane.b32.xlu0 %v853, 64
  %v856 = vpop.permute.xlu0 %855
  %v858 = vmul.f32 %v840, %v856
  %860 = vrot.lane.b32.xlu0 %v858, 32
  %v861 = vpop.permute.xlu0 %860
  %863 = vst.msk [vmem:[#allocation3 + $0x30] sm:$0xff] %vm200, %v861
  %v864 = vsel %vm200, %v759, 0
  %866 = vmatprep.subr.mxu0 0.0
  %867 = vmatpush1.msra.mxu0 %v448
  %868 = vmatprep.subr.mxu0 0.0
  %869 = vmatpush1.msra.mxu0 %v449
  %870 = vmatprep.subr.mxu0 0.0
  %871 = vmatpush1.msra.mxu0 %v450
  %872 = vmatprep.subr.mxu0 0.0
  %873 = vmatpush1.msra.mxu0 %v451
  %874 = vmatprep.subr.mxu0 0.0
  %875 = vmatpush1.msra.mxu0 0.0
  %876 = vmatprep.subr.mxu0 0.0
  %877 = vmatpush1.msra.mxu0 0.0
  %878 = vmatprep.subr.mxu0 0.0
  %879 = vmatpush1.msra.mxu0 0.0
  %880 = vmatprep.subr.mxu0 0.0
  %881 = vmatpush1.msra.mxu0 0.0
  %882 = vmatprep.subr.mxu0 0.0
  %883 = vmatpush1.msra.mxu0 0.0
  %884 = vmatprep.subr.mxu0 0.0
  %885 = vmatpush1.msra.mxu0 0.0
  %886 = vmatprep.subr.mxu0 0.0
  %887 = vmatpush1.msra.mxu0 0.0
  %888 = vmatprep.subr.mxu0 0.0
  %889 = vmatpush1.msra.mxu0 0.0
  %890 = vmatprep.subr.mxu0 0.0
  %891 = vmatpush1.msra.mxu0 0.0
  %892 = vmatprep.subr.mxu0 0.0
  %893 = vmatpush1.msra.mxu0 0.0
  %894 = vmatprep.subr.mxu0 0.0
  %895 = vmatpush1.msra.mxu0 0.0
  %896 = vmatprep.subr.mxu0 0.0
  %897 = vmatpush1.msra.mxu0 0.0
  %898 = vmatprep.subr.mxu0 0.0
  %899 = vmatpush1.msra.mxu0 0.0
  %900 = vmatprep.subr.mxu0 0.0
  %901 = vmatpush1.msra.mxu0 0.0
  %902 = vmatprep.subr.mxu0 0.0
  %903 = vmatpush1.msra.mxu0 0.0
  %904 = vmatprep.subr.mxu0 0.0
  %905 = vmatpush1.msra.mxu0 0.0
  %906 = vmatprep.subr.mxu0 0.0
  %907 = vmatpush1.msra.mxu0 0.0
  %908 = vmatprep.subr.mxu0 0.0
  %909 = vmatpush1.msra.mxu0 0.0
  %910 = vmatprep.subr.mxu0 0.0
  %911 = vmatpush1.msra.mxu0 0.0
  %912 = vmatprep.subr.mxu0 0.0
  %913 = vmatpush1.msra.mxu0 0.0
  %914 = vmatprep.subr.mxu0 0.0
  %915 = vmatpush1.msra.mxu0 0.0
  %916 = vmatprep.subr.mxu0 0.0
  %917 = vmatpush1.msra.mxu0 0.0
  %918 = vmatprep.subr.mxu0 0.0
  %919 = vmatpush1.msra.mxu0 0.0
  %920 = vmatprep.subr.mxu0 0.0
  %921 = vmatpush1.msra.mxu0 0.0
  %922 = vmatprep.subr.mxu0 0.0
  %923 = vmatpush1.msra.mxu0 0.0
  %924 = vmatprep.subr.mxu0 0.0
  %925 = vmatpush1.msra.mxu0 0.0
  %926 = vmatprep.subr.mxu0 0.0
  %927 = vmatpush1.msra.mxu0 0.0
  %928 = vmatprep.subr.mxu0 0.0
  %929 = vmatpush1.msra.mxu0 0.0
  %930 = vmatprep.mubr.f32.mxu0 0.0
  %931 = vmatmul.mubr.f32.gmra.mrb[0].mxu0 %v864
  %v932 = vpop.f32.mrb[0].mxu0
  %v933 = vadd.f32 0.0, %v932
  %v934 = vpop.f32.mrb[0].mxu0
  %935 = vdwg.mxu0
  %v936 = vadd.f32 %v302, %v933
  %v937 = vxor.u32 %v936, 2147483648
  %v938 = vmul.f32 %v937, 1.442695
  %v939 = vpow.pop %v938
  %v940 = vadd.f32 %v939, 1.0
  %v941 = vrcp.pop %v940
  %v942 = vmul.f32 1.0, %v941
  %v943 = vtanh.pop %v936
  %v944 = vmul.f32 %v942, %v750
  %946 = vrot.lane.b32.xlu0 %v943, 64
  %v947 = vpop.permute.xlu0 %946
  %v949 = vmul.f32 %v942, %v947
  %951 = vrot.lane.b32.xlu0 %v949, 32
  %v952 = vpop.permute.xlu0 %951
  %v954 = vadd.f32 %v944, %v952
  %v955 = vtanh.pop %v954
  %957 = vrot.lane.b32.xlu0 %v955, 64
  %v958 = vpop.permute.xlu0 %957
  %v960 = vmul.f32 %v942, %v958
  %962 = vrot.lane.b32.xlu0 %v960, 32
  %v963 = vpop.permute.xlu0 %962
  %965 = vst.msk [vmem:[#allocation2 + $0x10] sm:$0xff] %vm200, %v963
  %v966 = vsel %vm200, %v861, 0
  %968 = vmatprep.subr.mxu0 0.0
  %969 = vmatpush1.msra.mxu0 %v453
  %970 = vmatprep.subr.mxu0 0.0
  %971 = vmatpush1.msra.mxu0 %v454
  %972 = vmatprep.subr.mxu0 0.0
  %973 = vmatpush1.msra.mxu0 %v455
  %974 = vmatprep.subr.mxu0 0.0
  %975 = vmatpush1.msra.mxu0 %v456
  %976 = vmatprep.subr.mxu0 0.0
  %977 = vmatpush1.msra.mxu0 0.0
  %978 = vmatprep.subr.mxu0 0.0
  %979 = vmatpush1.msra.mxu0 0.0
  %980 = vmatprep.subr.mxu0 0.0
  %981 = vmatpush1.msra.mxu0 0.0
  %982 = vmatprep.subr.mxu0 0.0
  %983 = vmatpush1.msra.mxu0 0.0
  %984 = vmatprep.subr.mxu0 0.0
  %985 = vmatpush1.msra.mxu0 0.0
  %986 = vmatprep.subr.mxu0 0.0
  %987 = vmatpush1.msra.mxu0 0.0
  %988 = vmatprep.subr.mxu0 0.0
  %989 = vmatpush1.msra.mxu0 0.0
  %990 = vmatprep.subr.mxu0 0.0
  %991 = vmatpush1.msra.mxu0 0.0
  %992 = vmatprep.subr.mxu0 0.0
  %993 = vmatpush1.msra.mxu0 0.0
  %994 = vmatprep.subr.mxu0 0.0
  %995 = vmatpush1.msra.mxu0 0.0
  %996 = vmatprep.subr.mxu0 0.0
  %997 = vmatpush1.msra.mxu0 0.0
  %998 = vmatprep.subr.mxu0 0.0
  %999 = vmatpush1.msra.mxu0 0.0
  %1000 = vmatprep.subr.mxu0 0.0
  %1001 = vmatpush1.msra.mxu0 0.0
  %1002 = vmatprep.subr.mxu0 0.0
  %1003 = vmatpush1.msra.mxu0 0.0
  %1004 = vmatprep.subr.mxu0 0.0
  %1005 = vmatpush1.msra.mxu0 0.0
  %1006 = vmatprep.subr.mxu0 0.0
  %1007 = vmatpush1.msra.mxu0 0.0
  %1008 = vmatprep.subr.mxu0 0.0
  %1009 = vmatpush1.msra.mxu0 0.0
  %1010 = vmatprep.subr.mxu0 0.0
  %1011 = vmatpush1.msra.mxu0 0.0
  %1012 = vmatprep.subr.mxu0 0.0
  %1013 = vmatpush1.msra.mxu0 0.0
  %1014 = vmatprep.subr.mxu0 0.0
  %1015 = vmatpush1.msra.mxu0 0.0
  %1016 = vmatprep.subr.mxu0 0.0
  %1017 = vmatpush1.msra.mxu0 0.0
  %1018 = vmatprep.subr.mxu0 0.0
  %1019 = vmatpush1.msra.mxu0 0.0
  %1020 = vmatprep.subr.mxu0 0.0
  %1021 = vmatpush1.msra.mxu0 0.0
  %1022 = vmatprep.subr.mxu0 0.0
  %1023 = vmatpush1.msra.mxu0 0.0
  %1024 = vmatprep.subr.mxu0 0.0
  %1025 = vmatpush1.msra.mxu0 0.0
  %1026 = vmatprep.subr.mxu0 0.0
  %1027 = vmatpush1.msra.mxu0 0.0
  %1028 = vmatprep.subr.mxu0 0.0
  %1029 = vmatpush1.msra.mxu0 0.0
  %1030 = vmatprep.subr.mxu0 0.0
  %1031 = vmatpush1.msra.mxu0 0.0
  %1032 = vmatprep.mubr.f32.mxu0 0.0
  %1033 = vmatmul.mubr.f32.gmra.mrb[0].mxu0 %v966
  %v1034 = vpop.f32.mrb[0].mxu0
  %v1035 = vadd.f32 0.0, %v1034
  %v1036 = vpop.f32.mrb[0].mxu0
  %1037 = vdwg.mxu0
  %v1038 = vadd.f32 %v435, %v1035
  %v1039 = vxor.u32 %v1038, 2147483648
  %v1040 = vmul.f32 %v1039, 1.442695
  %v1041 = vpow.pop %v1040
  %v1042 = vadd.f32 %v1041, 1.0
  %v1043 = vrcp.pop %v1042
  %v1044 = vmul.f32 1.0, %v1043
  %v1045 = vtanh.pop %v1038
  %v1046 = vmul.f32 %v1044, %v852
  %1048 = vrot.lane.b32.xlu0 %v1045, 64
  %v1049 = vpop.permute.xlu0 %1048
  %v1051 = vmul.f32 %v1044, %v1049
  %1053 = vrot.lane.b32.xlu0 %v1051, 32
  %v1054 = vpop.permute.xlu0 %1053
  %v1056 = vadd.f32 %v1046, %v1054
  %v1057 = vtanh.pop %v1056
  %1059 = vrot.lane.b32.xlu0 %v1057, 64
  %v1060 = vpop.permute.xlu0 %1059
  %v1062 = vmul.f32 %v1044, %v1060
  %1064 = vrot.lane.b32.xlu0 %v1062, 32
  %v1065 = vpop.permute.xlu0 %1064
  %1067 = vst.msk [vmem:[#allocation3 + $0x28] sm:$0xff] %vm200, %v1065
  %v1068 = vsel %vm200, %v963, 0
  %1070 = vmatprep.subr.mxu0 0.0
  %1071 = vmatpush1.msra.mxu0 %v448
  %1072 = vmatprep.subr.mxu0 0.0
  %1073 = vmatpush1.msra.mxu0 %v449
  %1074 = vmatprep.subr.mxu0 0.0
  %1075 = vmatpush1.msra.mxu0 %v450
  %1076 = vmatprep.subr.mxu0 0.0
  %1077 = vmatpush1.msra.mxu0 %v451
  %1078 = vmatprep.subr.mxu0 0.0
  %1079 = vmatpush1.msra.mxu0 0.0
  %1080 = vmatprep.subr.mxu0 0.0
  %1081 = vmatpush1.msra.mxu0 0.0
  %1082 = vmatprep.subr.mxu0 0.0
  %1083 = vmatpush1.msra.mxu0 0.0
  %1084 = vmatprep.subr.mxu0 0.0
  %1085 = vmatpush1.msra.mxu0 0.0
  %1086 = vmatprep.subr.mxu0 0.0
  %1087 = vmatpush1.msra.mxu0 0.0
  %1088 = vmatprep.subr.mxu0 0.0
  %1089 = vmatpush1.msra.mxu0 0.0
  %1090 = vmatprep.subr.mxu0 0.0
  %1091 = vmatpush1.msra.mxu0 0.0
  %1092 = vmatprep.subr.mxu0 0.0
  %1093 = vmatpush1.msra.mxu0 0.0
  %1094 = vmatprep.subr.mxu0 0.0
  %1095 = vmatpush1.msra.mxu0 0.0
  %1096 = vmatprep.subr.mxu0 0.0
  %1097 = vmatpush1.msra.mxu0 0.0
  %1098 = vmatprep.subr.mxu0 0.0
  %1099 = vmatpush1.msra.mxu0 0.0
  %1100 = vmatprep.subr.mxu0 0.0
  %1101 = vmatpush1.msra.mxu0 0.0
  %1102 = vmatprep.subr.mxu0 0.0
  %1103 = vmatpush1.msra.mxu0 0.0
  %1104 = vmatprep.subr.mxu0 0.0
  %1105 = vmatpush1.msra.mxu0 0.0
  %1106 = vmatprep.subr.mxu0 0.0
  %1107 = vmatpush1.msra.mxu0 0.0
  %1108 = vmatprep.subr.mxu0 0.0
  %1109 = vmatpush1.msra.mxu0 0.0
  %1110 = vmatprep.subr.mxu0 0.0
  %1111 = vmatpush1.msra.mxu0 0.0
  %1112 = vmatprep.subr.mxu0 0.0
  %1113 = vmatpush1.msra.mxu0 0.0
  %1114 = vmatprep.subr.mxu0 0.0
  %1115 = vmatpush1.msra.mxu0 0.0
  %1116 = vmatprep.subr.mxu0 0.0
  %1117 = vmatpush1.msra.mxu0 0.0
  %1118 = vmatprep.subr.mxu0 0.0
  %1119 = vmatpush1.msra.mxu0 0.0
  %1120 = vmatprep.subr.mxu0 0.0
  %1121 = vmatpush1.msra.mxu0 0.0
  %1122 = vmatprep.subr.mxu0 0.0
  %1123 = vmatpush1.msra.mxu0 0.0
  %1124 = vmatprep.subr.mxu0 0.0
  %1125 = vmatpush1.msra.mxu0 0.0
  %1126 = vmatprep.subr.mxu0 0.0
  %1127 = vmatpush1.msra.mxu0 0.0
  %1128 = vmatprep.subr.mxu0 0.0
  %1129 = vmatpush1.msra.mxu0 0.0
  %1130 = vmatprep.subr.mxu0 0.0
  %1131 = vmatpush1.msra.mxu0 0.0
  %1132 = vmatprep.subr.mxu0 0.0
  %1133 = vmatpush1.msra.mxu0 0.0
  %1134 = vmatprep.mubr.f32.mxu0 0.0
  %1135 = vmatmul.mubr.f32.gmra.mrb[0].mxu0 %v1068
  %v1136 = vpop.f32.mrb[0].mxu0
  %v1137 = vadd.f32 0.0, %v1136
  %v1138 = vpop.f32.mrb[0].mxu0
  %1139 = vdwg.mxu0
  %v1140 = vadd.f32 %v307, %v1137
  %v1141 = vxor.u32 %v1140, 2147483648
  %v1142 = vmul.f32 %v1141, 1.442695
  %v1143 = vpow.pop %v1142
  %v1144 = vadd.f32 %v1143, 1.0
  %v1145 = vrcp.pop %v1144
  %v1146 = vmul.f32 1.0, %v1145
  %v1147 = vtanh.pop %v1140
  %v1148 = vmul.f32 %v1146, %v954
  %1150 = vrot.lane.b32.xlu0 %v1147, 64
  %v1151 = vpop.permute.xlu0 %1150
  %v1153 = vmul.f32 %v1146, %v1151
  %1155 = vrot.lane.b32.xlu0 %v1153, 32
  %v1156 = vpop.permute.xlu0 %1155
  %v1158 = vadd.f32 %v1148, %v1156
  %v1159 = vtanh.pop %v1158
  %1161 = vrot.lane.b32.xlu0 %v1159, 64
  %v1162 = vpop.permute.xlu0 %1161
  %v1164 = vmul.f32 %v1146, %v1162
  %1166 = vrot.lane.b32.xlu0 %v1164, 32
  %v1167 = vpop.permute.xlu0 %1166
  %1169 = vst.msk [vmem:[#allocation2 + $0x18] sm:$0xff] %vm200, %v1167
  %v1170 = vsel %vm200, %v1065, 0
  %1172 = vmatprep.subr.mxu0 0.0
  %1173 = vmatpush1.msra.mxu0 %v453
  %1174 = vmatprep.subr.mxu0 0.0
  %1175 = vmatpush1.msra.mxu0 %v454
  %1176 = vmatprep.subr.mxu0 0.0
  %1177 = vmatpush1.msra.mxu0 %v455
  %1178 = vmatprep.subr.mxu0 0.0
  %1179 = vmatpush1.msra.mxu0 %v456
  %1180 = vmatprep.subr.mxu0 0.0
  %1181 = vmatpush1.msra.mxu0 0.0
  %1182 = vmatprep.subr.mxu0 0.0
  %1183 = vmatpush1.msra.mxu0 0.0
  %1184 = vmatprep.subr.mxu0 0.0
  %1185 = vmatpush1.msra.mxu0 0.0
  %1186 = vmatprep.subr.mxu0 0.0
  %1187 = vmatpush1.msra.mxu0 0.0
  %1188 = vmatprep.subr.mxu0 0.0
  %1189 = vmatpush1.msra.mxu0 0.0
  %1190 = vmatprep.subr.mxu0 0.0
  %1191 = vmatpush1.msra.mxu0 0.0
  %1192 = vmatprep.subr.mxu0 0.0
  %1193 = vmatpush1.msra.mxu0 0.0
  %1194 = vmatprep.subr.mxu0 0.0
  %1195 = vmatpush1.msra.mxu0 0.0
  %1196 = vmatprep.subr.mxu0 0.0
  %1197 = vmatpush1.msra.mxu0 0.0
  %1198 = vmatprep.subr.mxu0 0.0
  %1199 = vmatpush1.msra.mxu0 0.0
  %1200 = vmatprep.subr.mxu0 0.0
  %1201 = vmatpush1.msra.mxu0 0.0
  %1202 = vmatprep.subr.mxu0 0.0
  %1203 = vmatpush1.msra.mxu0 0.0
  %1204 = vmatprep.subr.mxu0 0.0
  %1205 = vmatpush1.msra.mxu0 0.0
  %1206 = vmatprep.subr.mxu0 0.0
  %1207 = vmatpush1.msra.mxu0 0.0
  %1208 = vmatprep.subr.mxu0 0.0
  %1209 = vmatpush1.msra.mxu0 0.0
  %1210 = vmatprep.subr.mxu0 0.0
  %1211 = vmatpush1.msra.mxu0 0.0
  %1212 = vmatprep.subr.mxu0 0.0
  %1213 = vmatpush1.msra.mxu0 0.0
  %1214 = vmatprep.subr.mxu0 0.0
  %1215 = vmatpush1.msra.mxu0 0.0
  %1216 = vmatprep.subr.mxu0 0.0
  %1217 = vmatpush1.msra.mxu0 0.0
  %1218 = vmatprep.subr.mxu0 0.0
  %1219 = vmatpush1.msra.mxu0 0.0
  %1220 = vmatprep.subr.mxu0 0.0
  %1221 = vmatpush1.msra.mxu0 0.0
  %1222 = vmatprep.subr.mxu0 0.0
  %1223 = vmatpush1.msra.mxu0 0.0
  %1224 = vmatprep.subr.mxu0 0.0
  %1225 = vmatpush1.msra.mxu0 0.0
  %1226 = vmatprep.subr.mxu0 0.0
  %1227 = vmatpush1.msra.mxu0 0.0
  %1228 = vmatprep.subr.mxu0 0.0
  %1229 = vmatpush1.msra.mxu0 0.0
  %1230 = vmatprep.subr.mxu0 0.0
  %1231 = vmatpush1.msra.mxu0 0.0
  %1232 = vmatprep.subr.mxu0 0.0
  %1233 = vmatpush1.msra.mxu0 0.0
  %1234 = vmatprep.subr.mxu0 0.0
  %1235 = vmatpush1.msra.mxu0 0.0
  %1236 = vmatprep.mubr.f32.mxu0 0.0
  %1237 = vmatmul.mubr.f32.gmra.mrb[0].mxu0 %v1170
  %v1238 = vpop.f32.mrb[0].mxu0
  %v1239 = vadd.f32 0.0, %v1238
  %v1240 = vpop.f32.mrb[0].mxu0
  %1241 = vdwg.mxu0
  %v1242 = vadd.f32 %v430, %v1239
  %v1243 = vxor.u32 %v1242, 2147483648
  %v1244 = vmul.f32 %v1243, 1.442695
  %v1245 = vpow.pop %v1244
  %v1246 = vadd.f32 %v1245, 1.0
  %v1247 = vrcp.pop %v1246
  %v1248 = vmul.f32 1.0, %v1247
  %v1249 = vtanh.pop %v1242
  %v1250 = vmul.f32 %v1248, %v1056
  %1252 = vrot.lane.b32.xlu0 %v1249, 64
  %v1253 = vpop.permute.xlu0 %1252
  %v1255 = vmul.f32 %v1248, %v1253
  %1257 = vrot.lane.b32.xlu0 %v1255, 32
  %v1258 = vpop.permute.xlu0 %1257
  %v1260 = vadd.f32 %v1250, %v1258
  %v1261 = vtanh.pop %v1260
  %1263 = vrot.lane.b32.xlu0 %v1261, 64
  %v1264 = vpop.permute.xlu0 %1263
  %v1266 = vmul.f32 %v1248, %v1264
  %1268 = vrot.lane.b32.xlu0 %v1266, 32
  %v1269 = vpop.permute.xlu0 %1268
  %1271 = vst.msk [vmem:[#allocation3 + $0x20] sm:$0xff] %vm200, %v1269
  %v1272 = vsel %vm200, %v1167, 0
  %1274 = vmatprep.subr.mxu0 0.0
  %1275 = vmatpush1.msra.mxu0 %v448
  %1276 = vmatprep.subr.mxu0 0.0
  %1277 = vmatpush1.msra.mxu0 %v449
  %1278 = vmatprep.subr.mxu0 0.0
  %1279 = vmatpush1.msra.mxu0 %v450
  %1280 = vmatprep.subr.mxu0 0.0
  %1281 = vmatpush1.msra.mxu0 %v451
  %1282 = vmatprep.subr.mxu0 0.0
  %1283 = vmatpush1.msra.mxu0 0.0
  %1284 = vmatprep.subr.mxu0 0.0
  %1285 = vmatpush1.msra.mxu0 0.0
  %1286 = vmatprep.subr.mxu0 0.0
  %1287 = vmatpush1.msra.mxu0 0.0
  %1288 = vmatprep.subr.mxu0 0.0
  %1289 = vmatpush1.msra.mxu0 0.0
  %1290 = vmatprep.subr.mxu0 0.0
  %1291 = vmatpush1.msra.mxu0 0.0
  %1292 = vmatprep.subr.mxu0 0.0
  %1293 = vmatpush1.msra.mxu0 0.0
  %1294 = vmatprep.subr.mxu0 0.0
  %1295 = vmatpush1.msra.mxu0 0.0
  %1296 = vmatprep.subr.mxu0 0.0
  %1297 = vmatpush1.msra.mxu0 0.0
  %1298 = vmatprep.subr.mxu0 0.0
  %1299 = vmatpush1.msra.mxu0 0.0
  %1300 = vmatprep.subr.mxu0 0.0
  %1301 = vmatpush1.msra.mxu0 0.0
  %1302 = vmatprep.subr.mxu0 0.0
  %1303 = vmatpush1.msra.mxu0 0.0
  %1304 = vmatprep.subr.mxu0 0.0
  %1305 = vmatpush1.msra.mxu0 0.0
  %1306 = vmatprep.subr.mxu0 0.0
  %1307 = vmatpush1.msra.mxu0 0.0
  %1308 = vmatprep.subr.mxu0 0.0
  %1309 = vmatpush1.msra.mxu0 0.0
  %1310 = vmatprep.subr.mxu0 0.0
  %1311 = vmatpush1.msra.mxu0 0.0
  %1312 = vmatprep.subr.mxu0 0.0
  %1313 = vmatpush1.msra.mxu0 0.0
  %1314 = vmatprep.subr.mxu0 0.0
  %1315 = vmatpush1.msra.mxu0 0.0
  %1316 = vmatprep.subr.mxu0 0.0
  %1317 = vmatpush1.msra.mxu0 0.0
  %1318 = vmatprep.subr.mxu0 0.0
  %1319 = vmatpush1.msra.mxu0 0.0
  %1320 = vmatprep.subr.mxu0 0.0
  %1321 = vmatpush1.msra.mxu0 0.0
  %1322 = vmatprep.subr.mxu0 0.0
  %1323 = vmatpush1.msra.mxu0 0.0
  %1324 = vmatprep.subr.mxu0 0.0
  %1325 = vmatpush1.msra.mxu0 0.0
  %1326 = vmatprep.subr.mxu0 0.0
  %1327 = vmatpush1.msra.mxu0 0.0
  %1328 = vmatprep.subr.mxu0 0.0
  %1329 = vmatpush1.msra.mxu0 0.0
  %1330 = vmatprep.subr.mxu0 0.0
  %1331 = vmatpush1.msra.mxu0 0.0
  %1332 = vmatprep.subr.mxu0 0.0
  %1333 = vmatpush1.msra.mxu0 0.0
  %1334 = vmatprep.subr.mxu0 0.0
  %1335 = vmatpush1.msra.mxu0 0.0
  %1336 = vmatprep.subr.mxu0 0.0
  %1337 = vmatpush1.msra.mxu0 0.0
  %1338 = vmatprep.mubr.f32.mxu0 0.0
  %1339 = vmatmul.mubr.f32.gmra.mrb[0].mxu0 %v1272
  %v1340 = vpop.f32.mrb[0].mxu0
  %v1341 = vadd.f32 0.0, %v1340
  %v1342 = vpop.f32.mrb[0].mxu0
  %1343 = vdwg.mxu0
  %v1344 = vadd.f32 %v312, %v1341
  %v1345 = vxor.u32 %v1344, 2147483648
  %v1346 = vmul.f32 %v1345, 1.442695
  %v1347 = vpow.pop %v1346
  %v1348 = vadd.f32 %v1347, 1.0
  %v1349 = vrcp.pop %v1348
  %v1350 = vmul.f32 1.0, %v1349
  %v1351 = vtanh.pop %v1344
  %v1352 = vmul.f32 %v1350, %v1158
  %1354 = vrot.lane.b32.xlu0 %v1351, 64
  %v1355 = vpop.permute.xlu0 %1354
  %v1357 = vmul.f32 %v1350, %v1355
  %1359 = vrot.lane.b32.xlu0 %v1357, 32
  %v1360 = vpop.permute.xlu0 %1359
  %v1362 = vadd.f32 %v1352, %v1360
  %v1363 = vtanh.pop %v1362
  %1365 = vrot.lane.b32.xlu0 %v1363, 64
  %v1366 = vpop.permute.xlu0 %1365
  %v1368 = vmul.f32 %v1350, %v1366
  %1370 = vrot.lane.b32.xlu0 %v1368, 32
  %v1371 = vpop.permute.xlu0 %1370
  %1373 = vst.msk [vmem:[#allocation2 + $0x20] sm:$0xff] %vm200, %v1371
  %v1374 = vsel %vm200, %v1269, 0
  %1376 = vmatprep.subr.mxu0 0.0
  %1377 = vmatpush1.msra.mxu0 %v453
  %1378 = vmatprep.subr.mxu0 0.0
  %1379 = vmatpush1.msra.mxu0 %v454
  %1380 = vmatprep.subr.mxu0 0.0
  %1381 = vmatpush1.msra.mxu0 %v455
  %1382 = vmatprep.subr.mxu0 0.0
  %1383 = vmatpush1.msra.mxu0 %v456
  %1384 = vmatprep.subr.mxu0 0.0
  %1385 = vmatpush1.msra.mxu0 0.0
  %1386 = vmatprep.subr.mxu0 0.0
  %1387 = vmatpush1.msra.mxu0 0.0
  %1388 = vmatprep.subr.mxu0 0.0
  %1389 = vmatpush1.msra.mxu0 0.0
  %1390 = vmatprep.subr.mxu0 0.0
  %1391 = vmatpush1.msra.mxu0 0.0
  %1392 = vmatprep.subr.mxu0 0.0
  %1393 = vmatpush1.msra.mxu0 0.0
  %1394 = vmatprep.subr.mxu0 0.0
  %1395 = vmatpush1.msra.mxu0 0.0
  %1396 = vmatprep.subr.mxu0 0.0
  %1397 = vmatpush1.msra.mxu0 0.0
  %1398 = vmatprep.subr.mxu0 0.0
  %1399 = vmatpush1.msra.mxu0 0.0
  %1400 = vmatprep.subr.mxu0 0.0
  %1401 = vmatpush1.msra.mxu0 0.0
  %1402 = vmatprep.subr.mxu0 0.0
  %1403 = vmatpush1.msra.mxu0 0.0
  %1404 = vmatprep.subr.mxu0 0.0
  %1405 = vmatpush1.msra.mxu0 0.0
  %1406 = vmatprep.subr.mxu0 0.0
  %1407 = vmatpush1.msra.mxu0 0.0
  %1408 = vmatprep.subr.mxu0 0.0
  %1409 = vmatpush1.msra.mxu0 0.0
  %1410 = vmatprep.subr.mxu0 0.0
  %1411 = vmatpush1.msra.mxu0 0.0
  %1412 = vmatprep.subr.mxu0 0.0
  %1413 = vmatpush1.msra.mxu0 0.0
  %1414 = vmatprep.subr.mxu0 0.0
  %1415 = vmatpush1.msra.mxu0 0.0
  %1416 = vmatprep.subr.mxu0 0.0
  %1417 = vmatpush1.msra.mxu0 0.0
  %1418 = vmatprep.subr.mxu0 0.0
  %1419 = vmatpush1.msra.mxu0 0.0
  %1420 = vmatprep.subr.mxu0 0.0
  %1421 = vmatpush1.msra.mxu0 0.0
  %1422 = vmatprep.subr.mxu0 0.0
  %1423 = vmatpush1.msra.mxu0 0.0
  %1424 = vmatprep.subr.mxu0 0.0
  %1425 = vmatpush1.msra.mxu0 0.0
  %1426 = vmatprep.subr.mxu0 0.0
  %1427 = vmatpush1.msra.mxu0 0.0
  %1428 = vmatprep.subr.mxu0 0.0
  %1429 = vmatpush1.msra.mxu0 0.0
  %1430 = vmatprep.subr.mxu0 0.0
  %1431 = vmatpush1.msra.mxu0 0.0
  %1432 = vmatprep.subr.mxu0 0.0
  %1433 = vmatpush1.msra.mxu0 0.0
  %1434 = vmatprep.subr.mxu0 0.0
  %1435 = vmatpush1.msra.mxu0 0.0
  %1436 = vmatprep.subr.mxu0 0.0
  %1437 = vmatpush1.msra.mxu0 0.0
  %1438 = vmatprep.subr.mxu0 0.0
  %1439 = vmatpush1.msra.mxu0 0.0
  %1440 = vmatprep.mubr.f32.mxu0 0.0
  %1441 = vmatmul.mubr.f32.gmra.mrb[0].mxu0 %v1374
  %v1442 = vpop.f32.mrb[0].mxu0
  %v1443 = vadd.f32 0.0, %v1442
  %v1444 = vpop.f32.mrb[0].mxu0
  %1445 = vdwg.mxu0
  %v1446 = vadd.f32 %v425, %v1443
  %v1447 = vxor.u32 %v1446, 2147483648
  %v1448 = vmul.f32 %v1447, 1.442695
  %v1449 = vpow.pop %v1448
  %v1450 = vadd.f32 %v1449, 1.0
  %v1451 = vrcp.pop %v1450
  %v1452 = vmul.f32 1.0, %v1451
  %v1453 = vtanh.pop %v1446
  %v1454 = vmul.f32 %v1452, %v1260
  %1456 = vrot.lane.b32.xlu0 %v1453, 64
  %v1457 = vpop.permute.xlu0 %1456
  %v1459 = vmul.f32 %v1452, %v1457
  %1461 = vrot.lane.b32.xlu0 %v1459, 32
  %v1462 = vpop.permute.xlu0 %1461
  %v1464 = vadd.f32 %v1454, %v1462
  %v1465 = vtanh.pop %v1464
  %1467 = vrot.lane.b32.xlu0 %v1465, 64
  %v1468 = vpop.permute.xlu0 %1467
  %v1470 = vmul.f32 %v1452, %v1468
  %1472 = vrot.lane.b32.xlu0 %v1470, 32
  %v1473 = vpop.permute.xlu0 %1472
  %1475 = vst.msk [vmem:[#allocation3 + $0x18] sm:$0xff] %vm200, %v1473
  %v1476 = vsel %vm200, %v1371, 0
  %1478 = vmatprep.subr.mxu0 0.0
  %1479 = vmatpush1.msra.mxu0 %v448
  %1480 = vmatprep.subr.mxu0 0.0
  %1481 = vmatpush1.msra.mxu0 %v449
  %1482 = vmatprep.subr.mxu0 0.0
  %1483 = vmatpush1.msra.mxu0 %v450
  %1484 = vmatprep.subr.mxu0 0.0
  %1485 = vmatpush1.msra.mxu0 %v451
  %1486 = vmatprep.subr.mxu0 0.0
  %1487 = vmatpush1.msra.mxu0 0.0
  %1488 = vmatprep.subr.mxu0 0.0
  %1489 = vmatpush1.msra.mxu0 0.0
  %1490 = vmatprep.subr.mxu0 0.0
  %1491 = vmatpush1.msra.mxu0 0.0
  %1492 = vmatprep.subr.mxu0 0.0
  %1493 = vmatpush1.msra.mxu0 0.0
  %1494 = vmatprep.subr.mxu0 0.0
  %1495 = vmatpush1.msra.mxu0 0.0
  %1496 = vmatprep.subr.mxu0 0.0
  %1497 = vmatpush1.msra.mxu0 0.0
  %1498 = vmatprep.subr.mxu0 0.0
  %1499 = vmatpush1.msra.mxu0 0.0
  %1500 = vmatprep.subr.mxu0 0.0
  %1501 = vmatpush1.msra.mxu0 0.0
  %1502 = vmatprep.subr.mxu0 0.0
  %1503 = vmatpush1.msra.mxu0 0.0
  %1504 = vmatprep.subr.mxu0 0.0
  %1505 = vmatpush1.msra.mxu0 0.0
  %1506 = vmatprep.subr.mxu0 0.0
  %1507 = vmatpush1.msra.mxu0 0.0
  %1508 = vmatprep.subr.mxu0 0.0
  %1509 = vmatpush1.msra.mxu0 0.0
  %1510 = vmatprep.subr.mxu0 0.0
  %1511 = vmatpush1.msra.mxu0 0.0
  %1512 = vmatprep.subr.mxu0 0.0
  %1513 = vmatpush1.msra.mxu0 0.0
  %1514 = vmatprep.subr.mxu0 0.0
  %1515 = vmatpush1.msra.mxu0 0.0
  %1516 = vmatprep.subr.mxu0 0.0
  %1517 = vmatpush1.msra.mxu0 0.0
  %1518 = vmatprep.subr.mxu0 0.0
  %1519 = vmatpush1.msra.mxu0 0.0
  %1520 = vmatprep.subr.mxu0 0.0
  %1521 = vmatpush1.msra.mxu0 0.0
  %1522 = vmatprep.subr.mxu0 0.0
  %1523 = vmatpush1.msra.mxu0 0.0
  %1524 = vmatprep.subr.mxu0 0.0
  %1525 = vmatpush1.msra.mxu0 0.0
  %1526 = vmatprep.subr.mxu0 0.0
  %1527 = vmatpush1.msra.mxu0 0.0
  %1528 = vmatprep.subr.mxu0 0.0
  %1529 = vmatpush1.msra.mxu0 0.0
  %1530 = vmatprep.subr.mxu0 0.0
  %1531 = vmatpush1.msra.mxu0 0.0
  %1532 = vmatprep.subr.mxu0 0.0
  %1533 = vmatpush1.msra.mxu0 0.0
  %1534 = vmatprep.subr.mxu0 0.0
  %1535 = vmatpush1.msra.mxu0 0.0
  %1536 = vmatprep.subr.mxu0 0.0
  %1537 = vmatpush1.msra.mxu0 0.0
  %1538 = vmatprep.subr.mxu0 0.0
  %1539 = vmatpush1.msra.mxu0 0.0
  %1540 = vmatprep.subr.mxu0 0.0
  %1541 = vmatpush1.msra.mxu0 0.0
  %1542 = vmatprep.mubr.f32.mxu0 0.0
  %1543 = vmatmul.mubr.f32.gmra.mrb[0].mxu0 %v1476
  %v1544 = vpop.f32.mrb[0].mxu0
  %v1545 = vadd.f32 0.0, %v1544
  %v1546 = vpop.f32.mrb[0].mxu0
  %1547 = vdwg.mxu0
  %v1548 = vadd.f32 %v317, %v1545
  %v1549 = vxor.u32 %v1548, 2147483648
  %v1550 = vmul.f32 %v1549, 1.442695
  %v1551 = vpow.pop %v1550
  %v1552 = vadd.f32 %v1551, 1.0
  %v1553 = vrcp.pop %v1552
  %v1554 = vmul.f32 1.0, %v1553
  %v1555 = vtanh.pop %v1548
  %v1556 = vmul.f32 %v1554, %v1362
  %1558 = vrot.lane.b32.xlu0 %v1555, 64
  %v1559 = vpop.permute.xlu0 %1558
  %v1561 = vmul.f32 %v1554, %v1559
  %1563 = vrot.lane.b32.xlu0 %v1561, 32
  %v1564 = vpop.permute.xlu0 %1563
  %v1566 = vadd.f32 %v1556, %v1564
  %v1567 = vtanh.pop %v1566
  %1569 = vrot.lane.b32.xlu0 %v1567, 64
  %v1570 = vpop.permute.xlu0 %1569
  %v1572 = vmul.f32 %v1554, %v1570
  %1574 = vrot.lane.b32.xlu0 %v1572, 32
  %v1575 = vpop.permute.xlu0 %1574
  %1577 = vst.msk [vmem:[#allocation2 + $0x28] sm:$0xff] %vm200, %v1575
  %v1578 = vsel %vm200, %v1473, 0
  %1580 = vmatprep.subr.mxu0 0.0
  %1581 = vmatpush1.msra.mxu0 %v453
  %1582 = vmatprep.subr.mxu0 0.0
  %1583 = vmatpush1.msra.mxu0 %v454
  %1584 = vmatprep.subr.mxu0 0.0
  %1585 = vmatpush1.msra.mxu0 %v455
  %1586 = vmatprep.subr.mxu0 0.0
  %1587 = vmatpush1.msra.mxu0 %v456
  %1588 = vmatprep.subr.mxu0 0.0
  %1589 = vmatpush1.msra.mxu0 0.0
  %1590 = vmatprep.subr.mxu0 0.0
  %1591 = vmatpush1.msra.mxu0 0.0
  %1592 = vmatprep.subr.mxu0 0.0
  %1593 = vmatpush1.msra.mxu0 0.0
  %1594 = vmatprep.subr.mxu0 0.0
  %1595 = vmatpush1.msra.mxu0 0.0
  %1596 = vmatprep.subr.mxu0 0.0
  %1597 = vmatpush1.msra.mxu0 0.0
  %1598 = vmatprep.subr.mxu0 0.0
  %1599 = vmatpush1.msra.mxu0 0.0
  %1600 = vmatprep.subr.mxu0 0.0
  %1601 = vmatpush1.msra.mxu0 0.0
  %1602 = vmatprep.subr.mxu0 0.0
  %1603 = vmatpush1.msra.mxu0 0.0
  %1604 = vmatprep.subr.mxu0 0.0
  %1605 = vmatpush1.msra.mxu0 0.0
  %1606 = vmatprep.subr.mxu0 0.0
  %1607 = vmatpush1.msra.mxu0 0.0
  %1608 = vmatprep.subr.mxu0 0.0
  %1609 = vmatpush1.msra.mxu0 0.0
  %1610 = vmatprep.subr.mxu0 0.0
  %1611 = vmatpush1.msra.mxu0 0.0
  %1612 = vmatprep.subr.mxu0 0.0
  %1613 = vmatpush1.msra.mxu0 0.0
  %1614 = vmatprep.subr.mxu0 0.0
  %1615 = vmatpush1.msra.mxu0 0.0
  %1616 = vmatprep.subr.mxu0 0.0
  %1617 = vmatpush1.msra.mxu0 0.0
  %1618 = vmatprep.subr.mxu0 0.0
  %1619 = vmatpush1.msra.mxu0 0.0
  %1620 = vmatprep.subr.mxu0 0.0
  %1621 = vmatpush1.msra.mxu0 0.0
  %1622 = vmatprep.subr.mxu0 0.0
  %1623 = vmatpush1.msra.mxu0 0.0
  %1624 = vmatprep.subr.mxu0 0.0
  %1625 = vmatpush1.msra.mxu0 0.0
  %1626 = vmatprep.subr.mxu0 0.0
  %1627 = vmatpush1.msra.mxu0 0.0
  %1628 = vmatprep.subr.mxu0 0.0
  %1629 = vmatpush1.msra.mxu0 0.0
  %1630 = vmatprep.subr.mxu0 0.0
  %1631 = vmatpush1.msra.mxu0 0.0
  %1632 = vmatprep.subr.mxu0 0.0
  %1633 = vmatpush1.msra.mxu0 0.0
  %1634 = vmatprep.subr.mxu0 0.0
  %1635 = vmatpush1.msra.mxu0 0.0
  %1636 = vmatprep.subr.mxu0 0.0
  %1637 = vmatpush1.msra.mxu0 0.0
  %1638 = vmatprep.subr.mxu0 0.0
  %1639 = vmatpush1.msra.mxu0 0.0
  %1640 = vmatprep.subr.mxu0 0.0
  %1641 = vmatpush1.msra.mxu0 0.0
  %1642 = vmatprep.subr.mxu0 0.0
  %1643 = vmatpush1.msra.mxu0 0.0
  %1644 = vmatprep.mubr.f32.mxu0 0.0
  %1645 = vmatmul.mubr.f32.gmra.mrb[0].mxu0 %v1578
  %v1646 = vpop.f32.mrb[0].mxu0
  %v1647 = vadd.f32 0.0, %v1646
  %v1648 = vpop.f32.mrb[0].mxu0
  %1649 = vdwg.mxu0
  %v1650 = vadd.f32 %v420, %v1647
  %v1651 = vxor.u32 %v1650, 2147483648
  %v1652 = vmul.f32 %v1651, 1.442695
  %v1653 = vpow.pop %v1652
  %v1654 = vadd.f32 %v1653, 1.0
  %v1655 = vrcp.pop %v1654
  %v1656 = vmul.f32 1.0, %v1655
  %v1657 = vtanh.pop %v1650
  %v1658 = vmul.f32 %v1656, %v1464
  %1660 = vrot.lane.b32.xlu0 %v1657, 64
  %v1661 = vpop.permute.xlu0 %1660
  %v1663 = vmul.f32 %v1656, %v1661
  %1665 = vrot.lane.b32.xlu0 %v1663, 32
  %v1666 = vpop.permute.xlu0 %1665
  %v1668 = vadd.f32 %v1658, %v1666
  %v1669 = vtanh.pop %v1668
  %1671 = vrot.lane.b32.xlu0 %v1669, 64
  %v1672 = vpop.permute.xlu0 %1671
  %v1674 = vmul.f32 %v1656, %v1672
  %1676 = vrot.lane.b32.xlu0 %v1674, 32
  %v1677 = vpop.permute.xlu0 %1676
  %1679 = vst.msk [vmem:[#allocation3 + $0x10] sm:$0xff] %vm200, %v1677
  %v1680 = vsel %vm200, %v1575, 0
  %1682 = vmatprep.subr.mxu0 0.0
  %1683 = vmatpush1.msra.mxu0 %v448
  %1684 = vmatprep.subr.mxu0 0.0
  %1685 = vmatpush1.msra.mxu0 %v449
  %1686 = vmatprep.subr.mxu0 0.0
  %1687 = vmatpush1.msra.mxu0 %v450
  %1688 = vmatprep.subr.mxu0 0.0
  %1689 = vmatpush1.msra.mxu0 %v451
  %1690 = vmatprep.subr.mxu0 0.0
  %1691 = vmatpush1.msra.mxu0 0.0
  %1692 = vmatprep.subr.mxu0 0.0
  %1693 = vmatpush1.msra.mxu0 0.0
  %1694 = vmatprep.subr.mxu0 0.0
  %1695 = vmatpush1.msra.mxu0 0.0
  %1696 = vmatprep.subr.mxu0 0.0
  %1697 = vmatpush1.msra.mxu0 0.0
  %1698 = vmatprep.subr.mxu0 0.0
  %1699 = vmatpush1.msra.mxu0 0.0
  %1700 = vmatprep.subr.mxu0 0.0
  %1701 = vmatpush1.msra.mxu0 0.0
  %1702 = vmatprep.subr.mxu0 0.0
  %1703 = vmatpush1.msra.mxu0 0.0
  %1704 = vmatprep.subr.mxu0 0.0
  %1705 = vmatpush1.msra.mxu0 0.0
  %1706 = vmatprep.subr.mxu0 0.0
  %1707 = vmatpush1.msra.mxu0 0.0
  %1708 = vmatprep.subr.mxu0 0.0
  %1709 = vmatpush1.msra.mxu0 0.0
  %1710 = vmatprep.subr.mxu0 0.0
  %1711 = vmatpush1.msra.mxu0 0.0
  %1712 = vmatprep.subr.mxu0 0.0
  %1713 = vmatpush1.msra.mxu0 0.0
  %1714 = vmatprep.subr.mxu0 0.0
  %1715 = vmatpush1.msra.mxu0 0.0
  %1716 = vmatprep.subr.mxu0 0.0
  %1717 = vmatpush1.msra.mxu0 0.0
  %1718 = vmatprep.subr.mxu0 0.0
  %1719 = vmatpush1.msra.mxu0 0.0
  %1720 = vmatprep.subr.mxu0 0.0
  %1721 = vmatpush1.msra.mxu0 0.0
  %1722 = vmatprep.subr.mxu0 0.0
  %1723 = vmatpush1.msra.mxu0 0.0
  %1724 = vmatprep.subr.mxu0 0.0
  %1725 = vmatpush1.msra.mxu0 0.0
  %1726 = vmatprep.subr.mxu0 0.0
  %1727 = vmatpush1.msra.mxu0 0.0
  %1728 = vmatprep.subr.mxu0 0.0
  %1729 = vmatpush1.msra.mxu0 0.0
  %1730 = vmatprep.subr.mxu0 0.0
  %1731 = vmatpush1.msra.mxu0 0.0
  %1732 = vmatprep.subr.mxu0 0.0
  %1733 = vmatpush1.msra.mxu0 0.0
  %1734 = vmatprep.subr.mxu0 0.0
  %1735 = vmatpush1.msra.mxu0 0.0
  %1736 = vmatprep.subr.mxu0 0.0
  %1737 = vmatpush1.msra.mxu0 0.0
  %1738 = vmatprep.subr.mxu0 0.0
  %1739 = vmatpush1.msra.mxu0 0.0
  %1740 = vmatprep.subr.mxu0 0.0
  %1741 = vmatpush1.msra.mxu0 0.0
  %1742 = vmatprep.subr.mxu0 0.0
  %1743 = vmatpush1.msra.mxu0 0.0
  %1744 = vmatprep.subr.mxu0 0.0
  %1745 = vmatpush1.msra.mxu0 0.0
  %1746 = vmatprep.mubr.f32.mxu0 0.0
  %1747 = vmatmul.mubr.f32.gmra.mrb[0].mxu0 %v1680
  %v1748 = vpop.f32.mrb[0].mxu0
  %v1749 = vadd.f32 0.0, %v1748
  %v1750 = vpop.f32.mrb[0].mxu0
  %1751 = vdwg.mxu0
  %v1752 = vadd.f32 %v322, %v1749
  %v1753 = vxor.u32 %v1752, 2147483648
  %v1754 = vmul.f32 %v1753, 1.442695
  %v1755 = vpow.pop %v1754
  %v1756 = vadd.f32 %v1755, 1.0
  %v1757 = vrcp.pop %v1756
  %v1758 = vmul.f32 1.0, %v1757
  %v1759 = vtanh.pop %v1752
  %v1760 = vmul.f32 %v1758, %v1566
  %1762 = vrot.lane.b32.xlu0 %v1759, 64
  %v1763 = vpop.permute.xlu0 %1762
  %v1765 = vmul.f32 %v1758, %v1763
  %1767 = vrot.lane.b32.xlu0 %v1765, 32
  %v1768 = vpop.permute.xlu0 %1767
  %v1770 = vadd.f32 %v1760, %v1768
  %v1771 = vtanh.pop %v1770
  %1773 = vrot.lane.b32.xlu0 %v1771, 64
  %v1774 = vpop.permute.xlu0 %1773
  %v1776 = vmul.f32 %v1758, %v1774
  %1778 = vrot.lane.b32.xlu0 %v1776, 32
  %v1779 = vpop.permute.xlu0 %1778
  %1781 = vst.msk [vmem:[#allocation2 + $0x30] sm:$0xff] %vm200, %v1779
  %v1782 = vsel %vm200, %v1677, 0
  %1784 = vmatprep.subr.mxu0 0.0
  %1785 = vmatpush1.msra.mxu0 %v453
  %1786 = vmatprep.subr.mxu0 0.0
  %1787 = vmatpush1.msra.mxu0 %v454
  %1788 = vmatprep.subr.mxu0 0.0
  %1789 = vmatpush1.msra.mxu0 %v455
  %1790 = vmatprep.subr.mxu0 0.0
  %1791 = vmatpush1.msra.mxu0 %v456
  %1792 = vmatprep.subr.mxu0 0.0
  %1793 = vmatpush1.msra.mxu0 0.0
  %1794 = vmatprep.subr.mxu0 0.0
  %1795 = vmatpush1.msra.mxu0 0.0
  %1796 = vmatprep.subr.mxu0 0.0
  %1797 = vmatpush1.msra.mxu0 0.0
  %1798 = vmatprep.subr.mxu0 0.0
  %1799 = vmatpush1.msra.mxu0 0.0
  %1800 = vmatprep.subr.mxu0 0.0
  %1801 = vmatpush1.msra.mxu0 0.0
  %1802 = vmatprep.subr.mxu0 0.0
  %1803 = vmatpush1.msra.mxu0 0.0
  %1804 = vmatprep.subr.mxu0 0.0
  %1805 = vmatpush1.msra.mxu0 0.0
  %1806 = vmatprep.subr.mxu0 0.0
  %1807 = vmatpush1.msra.mxu0 0.0
  %1808 = vmatprep.subr.mxu0 0.0
  %1809 = vmatpush1.msra.mxu0 0.0
  %1810 = vmatprep.subr.mxu0 0.0
  %1811 = vmatpush1.msra.mxu0 0.0
  %1812 = vmatprep.subr.mxu0 0.0
  %1813 = vmatpush1.msra.mxu0 0.0
  %1814 = vmatprep.subr.mxu0 0.0
  %1815 = vmatpush1.msra.mxu0 0.0
  %1816 = vmatprep.subr.mxu0 0.0
  %1817 = vmatpush1.msra.mxu0 0.0
  %1818 = vmatprep.subr.mxu0 0.0
  %1819 = vmatpush1.msra.mxu0 0.0
  %1820 = vmatprep.subr.mxu0 0.0
  %1821 = vmatpush1.msra.mxu0 0.0
  %1822 = vmatprep.subr.mxu0 0.0
  %1823 = vmatpush1.msra.mxu0 0.0
  %1824 = vmatprep.subr.mxu0 0.0
  %1825 = vmatpush1.msra.mxu0 0.0
  %1826 = vmatprep.subr.mxu0 0.0
  %1827 = vmatpush1.msra.mxu0 0.0
  %1828 = vmatprep.subr.mxu0 0.0
  %1829 = vmatpush1.msra.mxu0 0.0
  %1830 = vmatprep.subr.mxu0 0.0
  %1831 = vmatpush1.msra.mxu0 0.0
  %1832 = vmatprep.subr.mxu0 0.0
  %1833 = vmatpush1.msra.mxu0 0.0
  %1834 = vmatprep.subr.mxu0 0.0
  %1835 = vmatpush1.msra.mxu0 0.0
  %1836 = vmatprep.subr.mxu0 0.0
  %1837 = vmatpush1.msra.mxu0 0.0
  %1838 = vmatprep.subr.mxu0 0.0
  %1839 = vmatpush1.msra.mxu0 0.0
  %1840 = vmatprep.subr.mxu0 0.0
  %1841 = vmatpush1.msra.mxu0 0.0
  %1842 = vmatprep.subr.mxu0 0.0
  %1843 = vmatpush1.msra.mxu0 0.0
  %1844 = vmatprep.subr.mxu0 0.0
  %1845 = vmatpush1.msra.mxu0 0.0
  %1846 = vmatprep.subr.mxu0 0.0
  %1847 = vmatpush1.msra.mxu0 0.0
  %1848 = vmatprep.mubr.f32.mxu0 0.0
  %1849 = vmatmul.mubr.f32.gmra.mrb[0].mxu0 %v1782
  %v1850 = vpop.f32.mrb[0].mxu0
  %v1851 = vadd.f32 0.0, %v1850
  %v1852 = vpop.f32.mrb[0].mxu0
  %1853 = vdwg.mxu0
  %v1854 = vadd.f32 %v415, %v1851
  %v1855 = vxor.u32 %v1854, 2147483648
  %v1856 = vmul.f32 %v1855, 1.442695
  %v1857 = vpow.pop %v1856
  %v1858 = vadd.f32 %v1857, 1.0
  %v1859 = vrcp.pop %v1858
  %v1860 = vmul.f32 1.0, %v1859
  %v1861 = vtanh.pop %v1854
  %v1862 = vmul.f32 %v1860, %v1668
  %1864 = vrot.lane.b32.xlu0 %v1861, 64
  %v1865 = vpop.permute.xlu0 %1864
  %v1867 = vmul.f32 %v1860, %v1865
  %1869 = vrot.lane.b32.xlu0 %v1867, 32
  %v1870 = vpop.permute.xlu0 %1869
  %v1872 = vadd.f32 %v1862, %v1870
  %v1873 = vtanh.pop %v1872
  %1875 = vrot.lane.b32.xlu0 %v1873, 64
  %v1876 = vpop.permute.xlu0 %1875
  %v1878 = vmul.f32 %v1860, %v1876
  %1880 = vrot.lane.b32.xlu0 %v1878, 32
  %v1881 = vpop.permute.xlu0 %1880
  %1883 = vst.msk [vmem:[#allocation3 + $0x8] sm:$0xff] %vm200, %v1881
  %v1884 = vsel %vm200, %v1779, 0
  %1886 = vmatprep.subr.mxu0 0.0
  %1887 = vmatpush1.msra.mxu0 %v448
  %1888 = vmatprep.subr.mxu0 0.0
  %1889 = vmatpush1.msra.mxu0 %v449
  %1890 = vmatprep.subr.mxu0 0.0
  %1891 = vmatpush1.msra.mxu0 %v450
  %1892 = vmatprep.subr.mxu0 0.0
  %1893 = vmatpush1.msra.mxu0 %v451
  %1894 = vmatprep.subr.mxu0 0.0
  %1895 = vmatpush1.msra.mxu0 0.0
  %1896 = vmatprep.subr.mxu0 0.0
  %1897 = vmatpush1.msra.mxu0 0.0
  %1898 = vmatprep.subr.mxu0 0.0
  %1899 = vmatpush1.msra.mxu0 0.0
  %1900 = vmatprep.subr.mxu0 0.0
  %1901 = vmatpush1.msra.mxu0 0.0
  %1902 = vmatprep.subr.mxu0 0.0
  %1903 = vmatpush1.msra.mxu0 0.0
  %1904 = vmatprep.subr.mxu0 0.0
  %1905 = vmatpush1.msra.mxu0 0.0
  %1906 = vmatprep.subr.mxu0 0.0
  %1907 = vmatpush1.msra.mxu0 0.0
  %1908 = vmatprep.subr.mxu0 0.0
  %1909 = vmatpush1.msra.mxu0 0.0
  %1910 = vmatprep.subr.mxu0 0.0
  %1911 = vmatpush1.msra.mxu0 0.0
  %1912 = vmatprep.subr.mxu0 0.0
  %1913 = vmatpush1.msra.mxu0 0.0
  %1914 = vmatprep.subr.mxu0 0.0
  %1915 = vmatpush1.msra.mxu0 0.0
  %1916 = vmatprep.subr.mxu0 0.0
  %1917 = vmatpush1.msra.mxu0 0.0
  %1918 = vmatprep.subr.mxu0 0.0
  %1919 = vmatpush1.msra.mxu0 0.0
  %1920 = vmatprep.subr.mxu0 0.0
  %1921 = vmatpush1.msra.mxu0 0.0
  %1922 = vmatprep.subr.mxu0 0.0
  %1923 = vmatpush1.msra.mxu0 0.0
  %1924 = vmatprep.subr.mxu0 0.0
  %1925 = vmatpush1.msra.mxu0 0.0
  %1926 = vmatprep.subr.mxu0 0.0
  %1927 = vmatpush1.msra.mxu0 0.0
  %1928 = vmatprep.subr.mxu0 0.0
  %1929 = vmatpush1.msra.mxu0 0.0
  %1930 = vmatprep.subr.mxu0 0.0
  %1931 = vmatpush1.msra.mxu0 0.0
  %1932 = vmatprep.subr.mxu0 0.0
  %1933 = vmatpush1.msra.mxu0 0.0
  %1934 = vmatprep.subr.mxu0 0.0
  %1935 = vmatpush1.msra.mxu0 0.0
  %1936 = vmatprep.subr.mxu0 0.0
  %1937 = vmatpush1.msra.mxu0 0.0
  %1938 = vmatprep.subr.mxu0 0.0
  %1939 = vmatpush1.msra.mxu0 0.0
  %1940 = vmatprep.subr.mxu0 0.0
  %1941 = vmatpush1.msra.mxu0 0.0
  %1942 = vmatprep.subr.mxu0 0.0
  %1943 = vmatpush1.msra.mxu0 0.0
  %1944 = vmatprep.subr.mxu0 0.0
  %1945 = vmatpush1.msra.mxu0 0.0
  %1946 = vmatprep.subr.mxu0 0.0
  %1947 = vmatpush1.msra.mxu0 0.0
  %1948 = vmatprep.subr.mxu0 0.0
  %1949 = vmatpush1.msra.mxu0 0.0
  %1950 = vmatprep.mubr.f32.mxu0 0.0
  %1951 = vmatmul.mubr.f32.gmra.mrb[0].mxu0 %v1884
  %v1952 = vpop.f32.mrb[0].mxu0
  %v1953 = vadd.f32 0.0, %v1952
  %v1954 = vpop.f32.mrb[0].mxu0
  %1955 = vdwg.mxu0
  %v1956 = vadd.f32 %v327, %v1953
  %v1957 = vxor.u32 %v1956, 2147483648
  %v1958 = vmul.f32 %v1957, 1.442695
  %v1959 = vpow.pop %v1958
  %v1960 = vadd.f32 %v1959, 1.0
  %v1961 = vrcp.pop %v1960
  %v1962 = vmul.f32 1.0, %v1961
  %v1963 = vtanh.pop %v1956
  %v1964 = vmul.f32 %v1962, %v1770
  %1966 = vrot.lane.b32.xlu0 %v1963, 64
  %v1967 = vpop.permute.xlu0 %1966
  %v1969 = vmul.f32 %v1962, %v1967
  %1971 = vrot.lane.b32.xlu0 %v1969, 32
  %v1972 = vpop.permute.xlu0 %1971
  %v1974 = vadd.f32 %v1964, %v1972
  %v1975 = vtanh.pop %v1974
  %1977 = vrot.lane.b32.xlu0 %v1975, 64
  %v1978 = vpop.permute.xlu0 %1977
  %v1980 = vmul.f32 %v1962, %v1978
  %1982 = vrot.lane.b32.xlu0 %v1980, 32
  %v1983 = vpop.permute.xlu0 %1982
  %1985 = vst.msk [vmem:[#allocation2 + $0x38] sm:$0xff] %vm200, %v1983
  %v1986 = vsel %vm200, %v1881, 0
  %1988 = vmatprep.subr.mxu0 0.0
  %1989 = vmatpush1.msra.mxu0 %v453
  %1990 = vmatprep.subr.mxu0 0.0
  %1991 = vmatpush1.msra.mxu0 %v454
  %1992 = vmatprep.subr.mxu0 0.0
  %1993 = vmatpush1.msra.mxu0 %v455
  %1994 = vmatprep.subr.mxu0 0.0
  %1995 = vmatpush1.msra.mxu0 %v456
  %1996 = vmatprep.subr.mxu0 0.0
  %1997 = vmatpush1.msra.mxu0 0.0
  %1998 = vmatprep.subr.mxu0 0.0
  %1999 = vmatpush1.msra.mxu0 0.0
  %2000 = vmatprep.subr.mxu0 0.0
  %2001 = vmatpush1.msra.mxu0 0.0
  %2002 = vmatprep.subr.mxu0 0.0
  %2003 = vmatpush1.msra.mxu0 0.0
  %2004 = vmatprep.subr.mxu0 0.0
  %2005 = vmatpush1.msra.mxu0 0.0
  %2006 = vmatprep.subr.mxu0 0.0
  %2007 = vmatpush1.msra.mxu0 0.0
  %2008 = vmatprep.subr.mxu0 0.0
  %2009 = vmatpush1.msra.mxu0 0.0
  %2010 = vmatprep.subr.mxu0 0.0
  %2011 = vmatpush1.msra.mxu0 0.0
  %2012 = vmatprep.subr.mxu0 0.0
  %2013 = vmatpush1.msra.mxu0 0.0
  %2014 = vmatprep.subr.mxu0 0.0
  %2015 = vmatpush1.msra.mxu0 0.0
  %2016 = vmatprep.subr.mxu0 0.0
  %2017 = vmatpush1.msra.mxu0 0.0
  %2018 = vmatprep.subr.mxu0 0.0
  %2019 = vmatpush1.msra.mxu0 0.0
  %2020 = vmatprep.subr.mxu0 0.0
  %2021 = vmatpush1.msra.mxu0 0.0
  %2022 = vmatprep.subr.mxu0 0.0
  %2023 = vmatpush1.msra.mxu0 0.0
  %2024 = vmatprep.subr.mxu0 0.0
  %2025 = vmatpush1.msra.mxu0 0.0
  %2026 = vmatprep.subr.mxu0 0.0
  %2027 = vmatpush1.msra.mxu0 0.0
  %2028 = vmatprep.subr.mxu0 0.0
  %2029 = vmatpush1.msra.mxu0 0.0
  %2030 = vmatprep.subr.mxu0 0.0
  %2031 = vmatpush1.msra.mxu0 0.0
  %2032 = vmatprep.subr.mxu0 0.0
  %2033 = vmatpush1.msra.mxu0 0.0
  %2034 = vmatprep.subr.mxu0 0.0
  %2035 = vmatpush1.msra.mxu0 0.0
  %2036 = vmatprep.subr.mxu0 0.0
  %2037 = vmatpush1.msra.mxu0 0.0
  %2038 = vmatprep.subr.mxu0 0.0
  %2039 = vmatpush1.msra.mxu0 0.0
  %2040 = vmatprep.subr.mxu0 0.0
  %2041 = vmatpush1.msra.mxu0 0.0
  %2042 = vmatprep.subr.mxu0 0.0
  %2043 = vmatpush1.msra.mxu0 0.0
  %2044 = vmatprep.subr.mxu0 0.0
  %2045 = vmatpush1.msra.mxu0 0.0
  %2046 = vmatprep.subr.mxu0 0.0
  %2047 = vmatpush1.msra.mxu0 0.0
  %2048 = vmatprep.subr.mxu0 0.0
  %2049 = vmatpush1.msra.mxu0 0.0
  %2050 = vmatprep.subr.mxu0 0.0
  %2051 = vmatpush1.msra.mxu0 0.0
  %2052 = vmatprep.mubr.f32.mxu0 0.0
  %2053 = vmatmul.mubr.f32.gmra.mrb[0].mxu0 %v1986
  %v2054 = vpop.f32.mrb[0].mxu0
  %v2055 = vadd.f32 0.0, %v2054
  %v2056 = vpop.f32.mrb[0].mxu0
  %2057 = vdwg.mxu0
  %v2058 = vadd.f32 %v410, %v2055
  %v2059 = vxor.u32 %v2058, 2147483648
  %v2060 = vmul.f32 %v2059, 1.442695
  %v2061 = vpow.pop %v2060
  %v2062 = vadd.f32 %v2061, 1.0
  %v2063 = vrcp.pop %v2062
  %v2064 = vmul.f32 1.0, %v2063
  %v2065 = vtanh.pop %v2058
  %v2066 = vmul.f32 %v2064, %v1872
  %2068 = vrot.lane.b32.xlu0 %v2065, 64
  %v2069 = vpop.permute.xlu0 %2068
  %v2071 = vmul.f32 %v2064, %v2069
  %2073 = vrot.lane.b32.xlu0 %v2071, 32
  %v2074 = vpop.permute.xlu0 %2073
  %v2076 = vadd.f32 %v2066, %v2074
  %v2077 = vtanh.pop %v2076
  %2079 = vrot.lane.b32.xlu0 %v2077, 64
  %v2080 = vpop.permute.xlu0 %2079
  %v2082 = vmul.f32 %v2064, %v2080
  %2084 = vrot.lane.b32.xlu0 %v2082, 32
  %v2085 = vpop.permute.xlu0 %2084
  %2087 = vst.msk [vmem:[#allocation3] sm:$0xff] %vm200, %v2085
  %v2088 = vld [vmem:[#allocation2] sm:$0xff]
  %v2089 = vld [vmem:[#allocation2 + $0x8] sm:$0xff]
  %v2090 = vld [vmem:[#allocation2 + $0x10] sm:$0xff]
  %v2091 = vld [vmem:[#allocation2 + $0x18] sm:$0xff]
  %v2092 = vld [vmem:[#allocation2 + $0x20] sm:$0xff]
  %v2093 = vld [vmem:[#allocation2 + $0x28] sm:$0xff]
  %v2094 = vld [vmem:[#allocation2 + $0x30] sm:$0xff]
  %v2095 = vld [vmem:[#allocation2 + $0x38] sm:$0xff]
  %v2096 = vld [vmem:[#allocation3] sm:$0xff]
  %v2097 = vld [vmem:[#allocation3 + $0x8] sm:$0xff]
  %v2098 = vld [vmem:[#allocation3 + $0x10] sm:$0xff]
  %v2099 = vld [vmem:[#allocation3 + $0x18] sm:$0xff]
  %v2100 = vld [vmem:[#allocation3 + $0x20] sm:$0xff]
  %v2101 = vld [vmem:[#allocation3 + $0x28] sm:$0xff]
  %v2102 = vld [vmem:[#allocation3 + $0x30] sm:$0xff]
  %v2103 = vld [vmem:[#allocation3 + $0x38] sm:$0xff]
  %v2104 = vld [vmem:[%s6] sm:$0xff]
  %v2105 = vld [vmem:[%s6 + $0x8] sm:$0xff]
  %v2106 = vld [vmem:[%s6 + $0x10] sm:$0xff]
  %v2107 = vld [vmem:[%s6 + $0x18] sm:$0xff]
  %s2108 = scalar_lea.vmem %s6, 32
  %v2109 = vld [vmem:[%s2108] sm:$0xff]
  %v2110 = vld [vmem:[%s2108 + $0x8] sm:$0xff]
  %v2111 = vld [vmem:[%s2108 + $0x10] sm:$0xff]
  %v2112 = vld [vmem:[%s2108 + $0x18] sm:$0xff]
  %v2114 = vsel %vm200, %v2096, 0
  %v2117 = vsel %vm200, %v2097, 0
  %v2120 = vsel %vm200, %v2098, 0
  %v2123 = vsel %vm200, %v2099, 0
  %v2126 = vsel %vm200, %v2100, 0
  %v2129 = vsel %vm200, %v2101, 0
  %v2132 = vsel %vm200, %v2102, 0
  %v2135 = vsel %vm200, %v2103, 0
  %2137 = vmatprep.subr.mxu0 0.0
  %2138 = vmatpush1.msra.mxu0 %v2109
  %2139 = vmatprep.subr.mxu0 0.0
  %2140 = vmatpush1.msra.mxu0 %v2110
  %2141 = vmatprep.subr.mxu0 0.0
  %2142 = vmatpush1.msra.mxu0 %v2111
  %2143 = vmatprep.subr.mxu0 0.0
  %2144 = vmatpush1.msra.mxu0 %v2112
  %2145 = vmatprep.subr.mxu0 0.0
  %2146 = vmatpush1.msra.mxu0 0.0
  %2147 = vmatprep.subr.mxu0 0.0
  %2148 = vmatpush1.msra.mxu0 0.0
  %2149 = vmatprep.subr.mxu0 0.0
  %2150 = vmatpush1.msra.mxu0 0.0
  %2151 = vmatprep.subr.mxu0 0.0
  %2152 = vmatpush1.msra.mxu0 0.0
  %2153 = vmatprep.subr.mxu0 0.0
  %2154 = vmatpush1.msra.mxu0 0.0
  %2155 = vmatprep.subr.mxu0 0.0
  %2156 = vmatpush1.msra.mxu0 0.0
  %2157 = vmatprep.subr.mxu0 0.0
  %2158 = vmatpush1.msra.mxu0 0.0
  %2159 = vmatprep.subr.mxu0 0.0
  %2160 = vmatpush1.msra.mxu0 0.0
  %2161 = vmatprep.subr.mxu0 0.0
  %2162 = vmatpush1.msra.mxu0 0.0
  %2163 = vmatprep.subr.mxu0 0.0
  %2164 = vmatpush1.msra.mxu0 0.0
  %2165 = vmatprep.subr.mxu0 0.0
  %2166 = vmatpush1.msra.mxu0 0.0
  %2167 = vmatprep.subr.mxu0 0.0
  %2168 = vmatpush1.msra.mxu0 0.0
  %2169 = vmatprep.subr.mxu0 0.0
  %2170 = vmatpush1.msra.mxu0 0.0
  %2171 = vmatprep.subr.mxu0 0.0
  %2172 = vmatpush1.msra.mxu0 0.0
  %2173 = vmatprep.subr.mxu0 0.0
  %2174 = vmatpush1.msra.mxu0 0.0
  %2175 = vmatprep.subr.mxu0 0.0
  %2176 = vmatpush1.msra.mxu0 0.0
  %2177 = vmatprep.subr.mxu0 0.0
  %2178 = vmatpush1.msra.mxu0 0.0
  %2179 = vmatprep.subr.mxu0 0.0
  %2180 = vmatpush1.msra.mxu0 0.0
  %2181 = vmatprep.subr.mxu0 0.0
  %2182 = vmatpush1.msra.mxu0 0.0
  %2183 = vmatprep.subr.mxu0 0.0
  %2184 = vmatpush1.msra.mxu0 0.0
  %2185 = vmatprep.subr.mxu0 0.0
  %2186 = vmatpush1.msra.mxu0 0.0
  %2187 = vmatprep.subr.mxu0 0.0
  %2188 = vmatpush1.msra.mxu0 0.0
  %2189 = vmatprep.subr.mxu0 0.0
  %2190 = vmatpush1.msra.mxu0 0.0
  %2191 = vmatprep.subr.mxu0 0.0
  %2192 = vmatpush1.msra.mxu0 0.0
  %2193 = vmatprep.subr.mxu0 0.0
  %2194 = vmatpush1.msra.mxu0 0.0
  %2195 = vmatprep.subr.mxu0 0.0
  %2196 = vmatpush1.msra.mxu0 0.0
  %2197 = vmatprep.subr.mxu0 0.0
  %2198 = vmatpush1.msra.mxu0 0.0
  %2199 = vmatprep.subr.mxu0 0.0
  %2200 = vmatpush1.msra.mxu0 0.0
  %2201 = vmatprep.mubr.f32.mxu0 0.0
  %2202 = vmatmul.mubr.f32.gmra.mrb[0].mxu0 %v2114
  %v2203 = vpop.f32.mrb[0].mxu0
  %v2204 = vadd.f32 0.0, %v2203
  %v2205 = vpop.f32.mrb[0].mxu0
  %2206 = vmatprep.mubr.f32.mxu0 0.0
  %2207 = vmatmul.mubr.f32.gmra.mrb[0].mxu0 %v2117
  %v2208 = vpop.f32.mrb[0].mxu0
  %v2209 = vadd.f32 0.0, %v2208
  %v2210 = vpop.f32.mrb[0].mxu0
  %2211 = vmatprep.mubr.f32.mxu0 0.0
  %2212 = vmatmul.mubr.f32.gmra.mrb[0].mxu0 %v2120
  %v2213 = vpop.f32.mrb[0].mxu0
  %v2214 = vadd.f32 0.0, %v2213
  %v2215 = vpop.f32.mrb[0].mxu0
  %2216 = vmatprep.mubr.f32.mxu0 0.0
  %2217 = vmatmul.mubr.f32.gmra.mrb[0].mxu0 %v2123
  %v2218 = vpop.f32.mrb[0].mxu0
  %v2219 = vadd.f32 0.0, %v2218
  %v2220 = vpop.f32.mrb[0].mxu0
  %2221 = vmatprep.mubr.f32.mxu0 0.0
  %2222 = vmatmul.mubr.f32.gmra.mrb[0].mxu0 %v2126
  %v2223 = vpop.f32.mrb[0].mxu0
  %v2224 = vadd.f32 0.0, %v2223
  %v2225 = vpop.f32.mrb[0].mxu0
  %2226 = vmatprep.mubr.f32.mxu0 0.0
  %2227 = vmatmul.mubr.f32.gmra.mrb[0].mxu0 %v2129
  %v2228 = vpop.f32.mrb[0].mxu0
  %v2229 = vadd.f32 0.0, %v2228
  %v2230 = vpop.f32.mrb[0].mxu0
  %2231 = vmatprep.mubr.f32.mxu0 0.0
  %2232 = vmatmul.mubr.f32.gmra.mrb[0].mxu0 %v2132
  %v2233 = vpop.f32.mrb[0].mxu0
  %v2234 = vadd.f32 0.0, %v2233
  %v2235 = vpop.f32.mrb[0].mxu0
  %2236 = vmatprep.mubr.f32.mxu0 0.0
  %2237 = vmatmul.mubr.f32.gmra.mrb[0].mxu0 %v2135
  %v2238 = vpop.f32.mrb[0].mxu0
  %v2239 = vadd.f32 0.0, %v2238
  %v2240 = vpop.f32.mrb[0].mxu0
  %2241 = vdwg.mxu0
  %v2243 = vsel %vm200, %v2088, 0
  %v2246 = vsel %vm200, %v2089, 0
  %v2249 = vsel %vm200, %v2090, 0
  %v2252 = vsel %vm200, %v2091, 0
  %v2255 = vsel %vm200, %v2092, 0
  %v2258 = vsel %vm200, %v2093, 0
  %v2261 = vsel %vm200, %v2094, 0
  %v2264 = vsel %vm200, %v2095, 0
  %2266 = vmatprep.subr.mxu0 0.0
  %2267 = vmatpush1.msra.mxu0 %v2104
  %2268 = vmatprep.subr.mxu0 0.0
  %2269 = vmatpush1.msra.mxu0 %v2105
  %2270 = vmatprep.subr.mxu0 0.0
  %2271 = vmatpush1.msra.mxu0 %v2106
  %2272 = vmatprep.subr.mxu0 0.0
  %2273 = vmatpush1.msra.mxu0 %v2107
  %2274 = vmatprep.subr.mxu0 0.0
  %2275 = vmatpush1.msra.mxu0 0.0
  %2276 = vmatprep.subr.mxu0 0.0
  %2277 = vmatpush1.msra.mxu0 0.0
  %2278 = vmatprep.subr.mxu0 0.0
  %2279 = vmatpush1.msra.mxu0 0.0
  %2280 = vmatprep.subr.mxu0 0.0
  %2281 = vmatpush1.msra.mxu0 0.0
  %2282 = vmatprep.subr.mxu0 0.0
  %2283 = vmatpush1.msra.mxu0 0.0
  %2284 = vmatprep.subr.mxu0 0.0
  %2285 = vmatpush1.msra.mxu0 0.0
  %2286 = vmatprep.subr.mxu0 0.0
  %2287 = vmatpush1.msra.mxu0 0.0
  %2288 = vmatprep.subr.mxu0 0.0
  %2289 = vmatpush1.msra.mxu0 0.0
  %2290 = vmatprep.subr.mxu0 0.0
  %2291 = vmatpush1.msra.mxu0 0.0
  %2292 = vmatprep.subr.mxu0 0.0
  %2293 = vmatpush1.msra.mxu0 0.0
  %2294 = vmatprep.subr.mxu0 0.0
  %2295 = vmatpush1.msra.mxu0 0.0
  %2296 = vmatprep.subr.mxu0 0.0
  %2297 = vmatpush1.msra.mxu0 0.0
  %2298 = vmatprep.subr.mxu0 0.0
  %2299 = vmatpush1.msra.mxu0 0.0
  %2300 = vmatprep.subr.mxu0 0.0
  %2301 = vmatpush1.msra.mxu0 0.0
  %2302 = vmatprep.subr.mxu0 0.0
  %2303 = vmatpush1.msra.mxu0 0.0
  %2304 = vmatprep.subr.mxu0 0.0
  %2305 = vmatpush1.msra.mxu0 0.0
  %2306 = vmatprep.subr.mxu0 0.0
  %2307 = vmatpush1.msra.mxu0 0.0
  %2308 = vmatprep.subr.mxu0 0.0
  %2309 = vmatpush1.msra.mxu0 0.0
  %2310 = vmatprep.subr.mxu0 0.0
  %2311 = vmatpush1.msra.mxu0 0.0
  %2312 = vmatprep.subr.mxu0 0.0
  %2313 = vmatpush1.msra.mxu0 0.0
  %2314 = vmatprep.subr.mxu0 0.0
  %2315 = vmatpush1.msra.mxu0 0.0
  %2316 = vmatprep.subr.mxu0 0.0
  %2317 = vmatpush1.msra.mxu0 0.0
  %2318 = vmatprep.subr.mxu0 0.0
  %2319 = vmatpush1.msra.mxu0 0.0
  %2320 = vmatprep.subr.mxu0 0.0
  %2321 = vmatpush1.msra.mxu0 0.0
  %2322 = vmatprep.subr.mxu0 0.0
  %2323 = vmatpush1.msra.mxu0 0.0
  %2324 = vmatprep.subr.mxu0 0.0
  %2325 = vmatpush1.msra.mxu0 0.0
  %2326 = vmatprep.subr.mxu0 0.0
  %2327 = vmatpush1.msra.mxu0 0.0
  %2328 = vmatprep.subr.mxu0 0.0
  %2329 = vmatpush1.msra.mxu0 0.0
  %2330 = vmatprep.mubr.f32.mxu0 0.0
  %2331 = vmatmul.mubr.f32.gmra.mrb[0].mxu0 %v2243
  %v2332 = vpop.f32.mrb[0].mxu0
  %v2333 = vadd.f32 %v2204, %v2332
  %v2334 = vpop.f32.mrb[0].mxu0
  %2335 = vmatprep.mubr.f32.mxu0 0.0
  %2336 = vmatmul.mubr.f32.gmra.mrb[0].mxu0 %v2246
  %v2337 = vpop.f32.mrb[0].mxu0
  %v2338 = vadd.f32 %v2209, %v2337
  %v2339 = vpop.f32.mrb[0].mxu0
  %2340 = vmatprep.mubr.f32.mxu0 0.0
  %2341 = vmatmul.mubr.f32.gmra.mrb[0].mxu0 %v2249
  %v2342 = vpop.f32.mrb[0].mxu0
  %v2343 = vadd.f32 %v2214, %v2342
  %v2344 = vpop.f32.mrb[0].mxu0
  %2345 = vmatprep.mubr.f32.mxu0 0.0
  %2346 = vmatmul.mubr.f32.gmra.mrb[0].mxu0 %v2252
  %v2347 = vpop.f32.mrb[0].mxu0
  %v2348 = vadd.f32 %v2219, %v2347
  %v2349 = vpop.f32.mrb[0].mxu0
  %2350 = vmatprep.mubr.f32.mxu0 0.0
  %2351 = vmatmul.mubr.f32.gmra.mrb[0].mxu0 %v2255
  %v2352 = vpop.f32.mrb[0].mxu0
  %v2353 = vadd.f32 %v2224, %v2352
  %v2354 = vpop.f32.mrb[0].mxu0
  %2355 = vmatprep.mubr.f32.mxu0 0.0
  %2356 = vmatmul.mubr.f32.gmra.mrb[0].mxu0 %v2258
  %v2357 = vpop.f32.mrb[0].mxu0
  %v2358 = vadd.f32 %v2229, %v2357
  %v2359 = vpop.f32.mrb[0].mxu0
  %2360 = vmatprep.mubr.f32.mxu0 0.0
  %2361 = vmatmul.mubr.f32.gmra.mrb[0].mxu0 %v2261
  %v2362 = vpop.f32.mrb[0].mxu0
  %v2363 = vadd.f32 %v2234, %v2362
  %v2364 = vpop.f32.mrb[0].mxu0
  %2365 = vmatprep.mubr.f32.mxu0 0.0
  %2366 = vmatmul.mubr.f32.gmra.mrb[0].mxu0 %v2264
  %v2367 = vpop.f32.mrb[0].mxu0
  %v2368 = vadd.f32 %v2239, %v2367
  %v2369 = vpop.f32.mrb[0].mxu0
  %2370 = vdwg.mxu0
  %v2371 = vld [vmem:[%s8] sm:$0x1]
  %v2373 = vlaneseq
  %v2374 = vshrl.u32 %v2373, 7
  %v2375 = vsub.s32 0, %v2374
  %v2376 = vrot.slane %v2371, %v2375
  %v2378 = vadd.f32 %v2333, %v2376
  %v2379 = vadd.f32 %v2338, %v2376
  %v2380 = vadd.f32 %v2343, %v2376
  %v2381 = vadd.f32 %v2348, %v2376
  %v2382 = vadd.f32 %v2353, %v2376
  %v2383 = vadd.f32 %v2358, %v2376
  %v2384 = vadd.f32 %v2363, %v2376
  %v2385 = vadd.f32 %v2368, %v2376
  %s2386 = scalar_lea.vmem %s6, 64
  %v2387 = vld [vmem:[%s2386] sm:$0xff]
  %v2388 = vld [vmem:[%s2386 + $0x8] sm:$0xff]
  %v2389 = vld [vmem:[%s2386 + $0x10] sm:$0xff]
  %v2390 = vld [vmem:[%s2386 + $0x18] sm:$0xff]
  %s2391 = scalar_lea.vmem %s6, 96
  %v2392 = vld [vmem:[%s2391] sm:$0xff]
  %v2393 = vld [vmem:[%s2391 + $0x8] sm:$0xff]
  %v2394 = vld [vmem:[%s2391 + $0x10] sm:$0xff]
  %v2395 = vld [vmem:[%s2391 + $0x18] sm:$0xff]
  %2396 = vmatprep.subr.mxu0 0.0
  %2397 = vmatpush1.msra.mxu0 %v2392
  %2398 = vmatprep.subr.mxu0 0.0
  %2399 = vmatpush1.msra.mxu0 %v2393
  %2400 = vmatprep.subr.mxu0 0.0
  %2401 = vmatpush1.msra.mxu0 %v2394
  %2402 = vmatprep.subr.mxu0 0.0
  %2403 = vmatpush1.msra.mxu0 %v2395
  %2404 = vmatprep.subr.mxu0 0.0
  %2405 = vmatpush1.msra.mxu0 0.0
  %2406 = vmatprep.subr.mxu0 0.0
  %2407 = vmatpush1.msra.mxu0 0.0
  %2408 = vmatprep.subr.mxu0 0.0
  %2409 = vmatpush1.msra.mxu0 0.0
  %2410 = vmatprep.subr.mxu0 0.0
  %2411 = vmatpush1.msra.mxu0 0.0
  %2412 = vmatprep.subr.mxu0 0.0
  %2413 = vmatpush1.msra.mxu0 0.0
  %2414 = vmatprep.subr.mxu0 0.0
  %2415 = vmatpush1.msra.mxu0 0.0
  %2416 = vmatprep.subr.mxu0 0.0
  %2417 = vmatpush1.msra.mxu0 0.0
  %2418 = vmatprep.subr.mxu0 0.0
  %2419 = vmatpush1.msra.mxu0 0.0
  %2420 = vmatprep.subr.mxu0 0.0
  %2421 = vmatpush1.msra.mxu0 0.0
  %2422 = vmatprep.subr.mxu0 0.0
  %2423 = vmatpush1.msra.mxu0 0.0
  %2424 = vmatprep.subr.mxu0 0.0
  %2425 = vmatpush1.msra.mxu0 0.0
  %2426 = vmatprep.subr.mxu0 0.0
  %2427 = vmatpush1.msra.mxu0 0.0
  %2428 = vmatprep.subr.mxu0 0.0
  %2429 = vmatpush1.msra.mxu0 0.0
  %2430 = vmatprep.subr.mxu0 0.0
  %2431 = vmatpush1.msra.mxu0 0.0
  %2432 = vmatprep.subr.mxu0 0.0
  %2433 = vmatpush1.msra.mxu0 0.0
  %2434 = vmatprep.subr.mxu0 0.0
  %2435 = vmatpush1.msra.mxu0 0.0
  %2436 = vmatprep.subr.mxu0 0.0
  %2437 = vmatpush1.msra.mxu0 0.0
  %2438 = vmatprep.subr.mxu0 0.0
  %2439 = vmatpush1.msra.mxu0 0.0
  %2440 = vmatprep.subr.mxu0 0.0
  %2441 = vmatpush1.msra.mxu0 0.0
  %2442 = vmatprep.subr.mxu0 0.0
  %2443 = vmatpush1.msra.mxu0 0.0
  %2444 = vmatprep.subr.mxu0 0.0
  %2445 = vmatpush1.msra.mxu0 0.0
  %2446 = vmatprep.subr.mxu0 0.0
  %2447 = vmatpush1.msra.mxu0 0.0
  %2448 = vmatprep.subr.mxu0 0.0
  %2449 = vmatpush1.msra.mxu0 0.0
  %2450 = vmatprep.subr.mxu0 0.0
  %2451 = vmatpush1.msra.mxu0 0.0
  %2452 = vmatprep.subr.mxu0 0.0
  %2453 = vmatpush1.msra.mxu0 0.0
  %2454 = vmatprep.subr.mxu0 0.0
  %2455 = vmatpush1.msra.mxu0 0.0
  %2456 = vmatprep.subr.mxu0 0.0
  %2457 = vmatpush1.msra.mxu0 0.0
  %2458 = vmatprep.subr.mxu0 0.0
  %2459 = vmatpush1.msra.mxu0 0.0
  %2460 = vmatprep.mubr.f32.mxu0 0.0
  %2461 = vmatmul.mubr.f32.gmra.mrb[0].mxu0 %v2114
  %v2462 = vpop.f32.mrb[0].mxu0
  %v2463 = vadd.f32 0.0, %v2462
  %v2464 = vpop.f32.mrb[0].mxu0
  %2465 = vmatprep.mubr.f32.mxu0 0.0
  %2466 = vmatmul.mubr.f32.gmra.mrb[0].mxu0 %v2117
  %v2467 = vpop.f32.mrb[0].mxu0
  %v2468 = vadd.f32 0.0, %v2467
  %v2469 = vpop.f32.mrb[0].mxu0
  %2470 = vmatprep.mubr.f32.mxu0 0.0
  %2471 = vmatmul.mubr.f32.gmra.mrb[0].mxu0 %v2120
  %v2472 = vpop.f32.mrb[0].mxu0
  %v2473 = vadd.f32 0.0, %v2472
  %v2474 = vpop.f32.mrb[0].mxu0
  %2475 = vmatprep.mubr.f32.mxu0 0.0
  %2476 = vmatmul.mubr.f32.gmra.mrb[0].mxu0 %v2123
  %v2477 = vpop.f32.mrb[0].mxu0
  %v2478 = vadd.f32 0.0, %v2477
  %v2479 = vpop.f32.mrb[0].mxu0
  %2480 = vmatprep.mubr.f32.mxu0 0.0
  %2481 = vmatmul.mubr.f32.gmra.mrb[0].mxu0 %v2126
  %v2482 = vpop.f32.mrb[0].mxu0
  %v2483 = vadd.f32 0.0, %v2482
  %v2484 = vpop.f32.mrb[0].mxu0
  %2485 = vmatprep.mubr.f32.mxu0 0.0
  %2486 = vmatmul.mubr.f32.gmra.mrb[0].mxu0 %v2129
  %v2487 = vpop.f32.mrb[0].mxu0
  %v2488 = vadd.f32 0.0, %v2487
  %v2489 = vpop.f32.mrb[0].mxu0
  %2490 = vmatprep.mubr.f32.mxu0 0.0
  %2491 = vmatmul.mubr.f32.gmra.mrb[0].mxu0 %v2132
  %v2492 = vpop.f32.mrb[0].mxu0
  %v2493 = vadd.f32 0.0, %v2492
  %v2494 = vpop.f32.mrb[0].mxu0
  %2495 = vmatprep.mubr.f32.mxu0 0.0
  %2496 = vmatmul.mubr.f32.gmra.mrb[0].mxu0 %v2135
  %v2497 = vpop.f32.mrb[0].mxu0
  %v2498 = vadd.f32 0.0, %v2497
  %v2499 = vpop.f32.mrb[0].mxu0
  %2500 = vdwg.mxu0
  %2501 = vmatprep.subr.mxu0 0.0
  %2502 = vmatpush1.msra.mxu0 %v2387
  %2503 = vmatprep.subr.mxu0 0.0
  %2504 = vmatpush1.msra.mxu0 %v2388
  %2505 = vmatprep.subr.mxu0 0.0
  %2506 = vmatpush1.msra.mxu0 %v2389
  %2507 = vmatprep.subr.mxu0 0.0
  %2508 = vmatpush1.msra.mxu0 %v2390
  %2509 = vmatprep.subr.mxu0 0.0
  %2510 = vmatpush1.msra.mxu0 0.0
  %2511 = vmatprep.subr.mxu0 0.0
  %2512 = vmatpush1.msra.mxu0 0.0
  %2513 = vmatprep.subr.mxu0 0.0
  %2514 = vmatpush1.msra.mxu0 0.0
  %2515 = vmatprep.subr.mxu0 0.0
  %2516 = vmatpush1.msra.mxu0 0.0
  %2517 = vmatprep.subr.mxu0 0.0
  %2518 = vmatpush1.msra.mxu0 0.0
  %2519 = vmatprep.subr.mxu0 0.0
  %2520 = vmatpush1.msra.mxu0 0.0
  %2521 = vmatprep.subr.mxu0 0.0
  %2522 = vmatpush1.msra.mxu0 0.0
  %2523 = vmatprep.subr.mxu0 0.0
  %2524 = vmatpush1.msra.mxu0 0.0
  %2525 = vmatprep.subr.mxu0 0.0
  %2526 = vmatpush1.msra.mxu0 0.0
  %2527 = vmatprep.subr.mxu0 0.0
  %2528 = vmatpush1.msra.mxu0 0.0
  %2529 = vmatprep.subr.mxu0 0.0
  %2530 = vmatpush1.msra.mxu0 0.0
  %2531 = vmatprep.subr.mxu0 0.0
  %2532 = vmatpush1.msra.mxu0 0.0
  %2533 = vmatprep.subr.mxu0 0.0
  %2534 = vmatpush1.msra.mxu0 0.0
  %2535 = vmatprep.subr.mxu0 0.0
  %2536 = vmatpush1.msra.mxu0 0.0
  %2537 = vmatprep.subr.mxu0 0.0
  %2538 = vmatpush1.msra.mxu0 0.0
  %2539 = vmatprep.subr.mxu0 0.0
  %2540 = vmatpush1.msra.mxu0 0.0
  %2541 = vmatprep.subr.mxu0 0.0
  %2542 = vmatpush1.msra.mxu0 0.0
  %2543 = vmatprep.subr.mxu0 0.0
  %2544 = vmatpush1.msra.mxu0 0.0
  %2545 = vmatprep.subr.mxu0 0.0
  %2546 = vmatpush1.msra.mxu0 0.0
  %2547 = vmatprep.subr.mxu0 0.0
  %2548 = vmatpush1.msra.mxu0 0.0
  %2549 = vmatprep.subr.mxu0 0.0
  %2550 = vmatpush1.msra.mxu0 0.0
  %2551 = vmatprep.subr.mxu0 0.0
  %2552 = vmatpush1.msra.mxu0 0.0
  %2553 = vmatprep.subr.mxu0 0.0
  %2554 = vmatpush1.msra.mxu0 0.0
  %2555 = vmatprep.subr.mxu0 0.0
  %2556 = vmatpush1.msra.mxu0 0.0
  %2557 = vmatprep.subr.mxu0 0.0
  %2558 = vmatpush1.msra.mxu0 0.0
  %2559 = vmatprep.subr.mxu0 0.0
  %2560 = vmatpush1.msra.mxu0 0.0
  %2561 = vmatprep.subr.mxu0 0.0
  %2562 = vmatpush1.msra.mxu0 0.0
  %2563 = vmatprep.subr.mxu0 0.0
  %2564 = vmatpush1.msra.mxu0 0.0
  %2565 = vmatprep.mubr.f32.mxu0 0.0
  %2566 = vmatmul.mubr.f32.gmra.mrb[0].mxu0 %v2243
  %v2567 = vpop.f32.mrb[0].mxu0
  %v2568 = vadd.f32 %v2463, %v2567
  %v2569 = vpop.f32.mrb[0].mxu0
  %2570 = vmatprep.mubr.f32.mxu0 0.0
  %2571 = vmatmul.mubr.f32.gmra.mrb[0].mxu0 %v2246
  %v2572 = vpop.f32.mrb[0].mxu0
  %v2573 = vadd.f32 %v2468, %v2572
  %v2574 = vpop.f32.mrb[0].mxu0
  %2575 = vmatprep.mubr.f32.mxu0 0.0
  %2576 = vmatmul.mubr.f32.gmra.mrb[0].mxu0 %v2249
  %v2577 = vpop.f32.mrb[0].mxu0
  %v2578 = vadd.f32 %v2473, %v2577
  %v2579 = vpop.f32.mrb[0].mxu0
  %2580 = vmatprep.mubr.f32.mxu0 0.0
  %2581 = vmatmul.mubr.f32.gmra.mrb[0].mxu0 %v2252
  %v2582 = vpop.f32.mrb[0].mxu0
  %v2583 = vadd.f32 %v2478, %v2582
  %v2584 = vpop.f32.mrb[0].mxu0
  %2585 = vmatprep.mubr.f32.mxu0 0.0
  %2586 = vmatmul.mubr.f32.gmra.mrb[0].mxu0 %v2255
  %v2587 = vpop.f32.mrb[0].mxu0
  %v2588 = vadd.f32 %v2483, %v2587
  %v2589 = vpop.f32.mrb[0].mxu0
  %2590 = vmatprep.mubr.f32.mxu0 0.0
  %2591 = vmatmul.mubr.f32.gmra.mrb[0].mxu0 %v2258
  %v2592 = vpop.f32.mrb[0].mxu0
  %v2593 = vadd.f32 %v2488, %v2592
  %v2594 = vpop.f32.mrb[0].mxu0
  %2595 = vmatprep.mubr.f32.mxu0 0.0
  %2596 = vmatmul.mubr.f32.gmra.mrb[0].mxu0 %v2261
  %v2597 = vpop.f32.mrb[0].mxu0
  %v2598 = vadd.f32 %v2493, %v2597
  %v2599 = vpop.f32.mrb[0].mxu0
  %2600 = vmatprep.mubr.f32.mxu0 0.0
  %2601 = vmatmul.mubr.f32.gmra.mrb[0].mxu0 %v2264
  %v2602 = vpop.f32.mrb[0].mxu0
  %v2603 = vadd.f32 %v2498, %v2602
  %v2604 = vpop.f32.mrb[0].mxu0
  %2605 = vdwg.mxu0
  %s2606 = scalar_lea.vmem %s8, 1
  %v2607 = vld [vmem:[%s2606] sm:$0x1]
  %v2609 = vlaneseq
  %v2610 = vshrl.u32 %v2609, 7
  %v2611 = vsub.s32 0, %v2610
  %v2612 = vrot.slane %v2607, %v2611
  %v2614 = vadd.f32 %v2568, %v2612
  %v2615 = vadd.f32 %v2573, %v2612
  %v2616 = vadd.f32 %v2578, %v2612
  %v2617 = vadd.f32 %v2583, %v2612
  %v2618 = vadd.f32 %v2588, %v2612
  %v2619 = vadd.f32 %v2593, %v2612
  %v2620 = vadd.f32 %v2598, %v2612
  %v2621 = vadd.f32 %v2603, %v2612
  %v2622 = vld [vmem:[%s7] sm:$0xff]
  %v2623 = vld [vmem:[%s7 + $0x8] sm:$0xff]
  %v2624 = vld [vmem:[%s7 + $0x10] sm:$0xff]
  %v2625 = vld [vmem:[%s7 + $0x18] sm:$0xff]
  %s2626 = scalar_lea.vmem %s7, 32
  %v2627 = vld [vmem:[%s2626] sm:$0xff]
  %v2628 = vld [vmem:[%s2626 + $0x8] sm:$0xff]
  %v2629 = vld [vmem:[%s2626 + $0x10] sm:$0xff]
  %v2630 = vld [vmem:[%s2626 + $0x18] sm:$0xff]
  %2631 = vmatprep.subr.mxu0 0.0
  %2632 = vmatpush1.msra.mxu0 %v2622
  %2633 = vmatprep.subr.mxu0 0.0
  %2634 = vmatpush1.msra.mxu0 %v2623
  %2635 = vmatprep.subr.mxu0 0.0
  %2636 = vmatpush1.msra.mxu0 %v2624
  %2637 = vmatprep.subr.mxu0 0.0
  %2638 = vmatpush1.msra.mxu0 %v2625
  %2639 = vmatprep.subr.mxu0 0.0
  %2640 = vmatpush1.msra.mxu0 0.0
  %2641 = vmatprep.subr.mxu0 0.0
  %2642 = vmatpush1.msra.mxu0 0.0
  %2643 = vmatprep.subr.mxu0 0.0
  %2644 = vmatpush1.msra.mxu0 0.0
  %2645 = vmatprep.subr.mxu0 0.0
  %2646 = vmatpush1.msra.mxu0 0.0
  %2647 = vmatprep.subr.mxu0 0.0
  %2648 = vmatpush1.msra.mxu0 0.0
  %2649 = vmatprep.subr.mxu0 0.0
  %2650 = vmatpush1.msra.mxu0 0.0
  %2651 = vmatprep.subr.mxu0 0.0
  %2652 = vmatpush1.msra.mxu0 0.0
  %2653 = vmatprep.subr.mxu0 0.0
  %2654 = vmatpush1.msra.mxu0 0.0
  %2655 = vmatprep.subr.mxu0 0.0
  %2656 = vmatpush1.msra.mxu0 0.0
  %2657 = vmatprep.subr.mxu0 0.0
  %2658 = vmatpush1.msra.mxu0 0.0
  %2659 = vmatprep.subr.mxu0 0.0
  %2660 = vmatpush1.msra.mxu0 0.0
  %2661 = vmatprep.subr.mxu0 0.0
  %2662 = vmatpush1.msra.mxu0 0.0
  %2663 = vmatprep.subr.mxu0 0.0
  %2664 = vmatpush1.msra.mxu0 0.0
  %2665 = vmatprep.subr.mxu0 0.0
  %2666 = vmatpush1.msra.mxu0 0.0
  %2667 = vmatprep.subr.mxu0 0.0
  %2668 = vmatpush1.msra.mxu0 0.0
  %2669 = vmatprep.subr.mxu0 0.0
  %2670 = vmatpush1.msra.mxu0 0.0
  %2671 = vmatprep.subr.mxu0 0.0
  %2672 = vmatpush1.msra.mxu0 0.0
  %2673 = vmatprep.subr.mxu0 0.0
  %2674 = vmatpush1.msra.mxu0 0.0
  %2675 = vmatprep.subr.mxu0 0.0
  %2676 = vmatpush1.msra.mxu0 0.0
  %2677 = vmatprep.subr.mxu0 0.0
  %2678 = vmatpush1.msra.mxu0 0.0
  %2679 = vmatprep.subr.mxu0 0.0
  %2680 = vmatpush1.msra.mxu0 0.0
  %2681 = vmatprep.subr.mxu0 0.0
  %2682 = vmatpush1.msra.mxu0 0.0
  %2683 = vmatprep.subr.mxu0 0.0
  %2684 = vmatpush1.msra.mxu0 0.0
  %2685 = vmatprep.subr.mxu0 0.0
  %2686 = vmatpush1.msra.mxu0 0.0
  %2687 = vmatprep.subr.mxu0 0.0
  %2688 = vmatpush1.msra.mxu0 0.0
  %2689 = vmatprep.subr.mxu0 0.0
  %2690 = vmatpush1.msra.mxu0 0.0
  %2691 = vmatprep.subr.mxu0 0.0
  %2692 = vmatpush1.msra.mxu0 0.0
  %2693 = vmatprep.subr.mxu0 0.0
  %2694 = vmatpush1.msra.mxu0 0.0
  %2695 = vmatprep.mubr.f32.mxu0 0.0
  %2696 = vmatmul.mubr.f32.gmra.mrb[0].mxu0 %v458
  %v2697 = vpop.f32.mrb[0].mxu0
  %v2698 = vadd.f32 0.0, %v2697
  %v2699 = vpop.f32.mrb[0].mxu0
  %2700 = vdwg.mxu0
  %v2701 = vadd.f32 %v2378, %v2698
  %v2702 = vxor.u32 %v2701, 2147483648
  %v2703 = vmul.f32 %v2702, 1.442695
  %v2704 = vpow.pop %v2703
  %v2705 = vadd.f32 %v2704, 1.0
  %v2706 = vrcp.pop %v2705
  %v2707 = vmul.f32 1.0, %v2706
  %v2708 = vtanh.pop %v2701
  %v2709 = vmul.f32 %v2707, 0.0
  %2711 = vrot.lane.b32.xlu0 %v2708, 64
  %v2712 = vpop.permute.xlu0 %2711
  %v2714 = vmul.f32 %v2707, %v2712
  %2716 = vrot.lane.b32.xlu0 %v2714, 32
  %v2717 = vpop.permute.xlu0 %2716
  %v2719 = vadd.f32 %v2709, %v2717
  %v2720 = vtanh.pop %v2719
  %2722 = vrot.lane.b32.xlu0 %v2720, 64
  %v2723 = vpop.permute.xlu0 %2722
  %v2725 = vmul.f32 %v2707, %v2723
  %2727 = vrot.lane.b32.xlu0 %v2725, 32
  %v2728 = vpop.permute.xlu0 %2727
  %2730 = vst.msk [vmem:[#allocation4] sm:$0xff] %vm200, %v2728
  %2731 = vmatprep.subr.mxu0 0.0
  %2732 = vmatpush1.msra.mxu0 %v2627
  %2733 = vmatprep.subr.mxu0 0.0
  %2734 = vmatpush1.msra.mxu0 %v2628
  %2735 = vmatprep.subr.mxu0 0.0
  %2736 = vmatpush1.msra.mxu0 %v2629
  %2737 = vmatprep.subr.mxu0 0.0
  %2738 = vmatpush1.msra.mxu0 %v2630
  %2739 = vmatprep.subr.mxu0 0.0
  %2740 = vmatpush1.msra.mxu0 0.0
  %2741 = vmatprep.subr.mxu0 0.0
  %2742 = vmatpush1.msra.mxu0 0.0
  %2743 = vmatprep.subr.mxu0 0.0
  %2744 = vmatpush1.msra.mxu0 0.0
  %2745 = vmatprep.subr.mxu0 0.0
  %2746 = vmatpush1.msra.mxu0 0.0
  %2747 = vmatprep.subr.mxu0 0.0
  %2748 = vmatpush1.msra.mxu0 0.0
  %2749 = vmatprep.subr.mxu0 0.0
  %2750 = vmatpush1.msra.mxu0 0.0
  %2751 = vmatprep.subr.mxu0 0.0
  %2752 = vmatpush1.msra.mxu0 0.0
  %2753 = vmatprep.subr.mxu0 0.0
  %2754 = vmatpush1.msra.mxu0 0.0
  %2755 = vmatprep.subr.mxu0 0.0
  %2756 = vmatpush1.msra.mxu0 0.0
  %2757 = vmatprep.subr.mxu0 0.0
  %2758 = vmatpush1.msra.mxu0 0.0
  %2759 = vmatprep.subr.mxu0 0.0
  %2760 = vmatpush1.msra.mxu0 0.0
  %2761 = vmatprep.subr.mxu0 0.0
  %2762 = vmatpush1.msra.mxu0 0.0
  %2763 = vmatprep.subr.mxu0 0.0
  %2764 = vmatpush1.msra.mxu0 0.0
  %2765 = vmatprep.subr.mxu0 0.0
  %2766 = vmatpush1.msra.mxu0 0.0
  %2767 = vmatprep.subr.mxu0 0.0
  %2768 = vmatpush1.msra.mxu0 0.0
  %2769 = vmatprep.subr.mxu0 0.0
  %2770 = vmatpush1.msra.mxu0 0.0
  %2771 = vmatprep.subr.mxu0 0.0
  %2772 = vmatpush1.msra.mxu0 0.0
  %2773 = vmatprep.subr.mxu0 0.0
  %2774 = vmatpush1.msra.mxu0 0.0
  %2775 = vmatprep.subr.mxu0 0.0
  %2776 = vmatpush1.msra.mxu0 0.0
  %2777 = vmatprep.subr.mxu0 0.0
  %2778 = vmatpush1.msra.mxu0 0.0
  %2779 = vmatprep.subr.mxu0 0.0
  %2780 = vmatpush1.msra.mxu0 0.0
  %2781 = vmatprep.subr.mxu0 0.0
  %2782 = vmatpush1.msra.mxu0 0.0
  %2783 = vmatprep.subr.mxu0 0.0
  %2784 = vmatpush1.msra.mxu0 0.0
  %2785 = vmatprep.subr.mxu0 0.0
  %2786 = vmatpush1.msra.mxu0 0.0
  %2787 = vmatprep.subr.mxu0 0.0
  %2788 = vmatpush1.msra.mxu0 0.0
  %2789 = vmatprep.subr.mxu0 0.0
  %2790 = vmatpush1.msra.mxu0 0.0
  %2791 = vmatprep.subr.mxu0 0.0
  %2792 = vmatpush1.msra.mxu0 0.0
  %2793 = vmatprep.subr.mxu0 0.0
  %2794 = vmatpush1.msra.mxu0 0.0
  %2795 = vmatprep.mubr.f32.mxu0 0.0
  %2796 = vmatmul.mubr.f32.gmra.mrb[0].mxu0 %v458
  %v2797 = vpop.f32.mrb[0].mxu0
  %v2798 = vadd.f32 0.0, %v2797
  %v2799 = vpop.f32.mrb[0].mxu0
  %2800 = vdwg.mxu0
  %v2801 = vadd.f32 %v2621, %v2798
  %v2802 = vxor.u32 %v2801, 2147483648
  %v2803 = vmul.f32 %v2802, 1.442695
  %v2804 = vpow.pop %v2803
  %v2805 = vadd.f32 %v2804, 1.0
  %v2806 = vrcp.pop %v2805
  %v2807 = vmul.f32 1.0, %v2806
  %v2808 = vtanh.pop %v2801
  %v2809 = vmul.f32 %v2807, 0.0
  %2811 = vrot.lane.b32.xlu0 %v2808, 64
  %v2812 = vpop.permute.xlu0 %2811
  %v2814 = vmul.f32 %v2807, %v2812
  %2816 = vrot.lane.b32.xlu0 %v2814, 32
  %v2817 = vpop.permute.xlu0 %2816
  %v2819 = vadd.f32 %v2809, %v2817
  %v2820 = vtanh.pop %v2819
  %2822 = vrot.lane.b32.xlu0 %v2820, 64
  %v2823 = vpop.permute.xlu0 %2822
  %v2825 = vmul.f32 %v2807, %v2823
  %2827 = vrot.lane.b32.xlu0 %v2825, 32
  %v2828 = vpop.permute.xlu0 %2827
  %2830 = vst.msk [vmem:[#allocation5 + $0x38] sm:$0xff] %vm200, %v2828
  %v2831 = vsel %vm200, %v2728, 0
  %2833 = vmatprep.subr.mxu0 0.0
  %2834 = vmatpush1.msra.mxu0 %v2622
  %2835 = vmatprep.subr.mxu0 0.0
  %2836 = vmatpush1.msra.mxu0 %v2623
  %2837 = vmatprep.subr.mxu0 0.0
  %2838 = vmatpush1.msra.mxu0 %v2624
  %2839 = vmatprep.subr.mxu0 0.0
  %2840 = vmatpush1.msra.mxu0 %v2625
  %2841 = vmatprep.subr.mxu0 0.0
  %2842 = vmatpush1.msra.mxu0 0.0
  %2843 = vmatprep.subr.mxu0 0.0
  %2844 = vmatpush1.msra.mxu0 0.0
  %2845 = vmatprep.subr.mxu0 0.0
  %2846 = vmatpush1.msra.mxu0 0.0
  %2847 = vmatprep.subr.mxu0 0.0
  %2848 = vmatpush1.msra.mxu0 0.0
  %2849 = vmatprep.subr.mxu0 0.0
  %2850 = vmatpush1.msra.mxu0 0.0
  %2851 = vmatprep.subr.mxu0 0.0
  %2852 = vmatpush1.msra.mxu0 0.0
  %2853 = vmatprep.subr.mxu0 0.0
  %2854 = vmatpush1.msra.mxu0 0.0
  %2855 = vmatprep.subr.mxu0 0.0
  %2856 = vmatpush1.msra.mxu0 0.0
  %2857 = vmatprep.subr.mxu0 0.0
  %2858 = vmatpush1.msra.mxu0 0.0
  %2859 = vmatprep.subr.mxu0 0.0
  %2860 = vmatpush1.msra.mxu0 0.0
  %2861 = vmatprep.subr.mxu0 0.0
  %2862 = vmatpush1.msra.mxu0 0.0
  %2863 = vmatprep.subr.mxu0 0.0
  %2864 = vmatpush1.msra.mxu0 0.0
  %2865 = vmatprep.subr.mxu0 0.0
  %2866 = vmatpush1.msra.mxu0 0.0
  %2867 = vmatprep.subr.mxu0 0.0
  %2868 = vmatpush1.msra.mxu0 0.0
  %2869 = vmatprep.subr.mxu0 0.0
  %2870 = vmatpush1.msra.mxu0 0.0
  %2871 = vmatprep.subr.mxu0 0.0
  %2872 = vmatpush1.msra.mxu0 0.0
  %2873 = vmatprep.subr.mxu0 0.0
  %2874 = vmatpush1.msra.mxu0 0.0
  %2875 = vmatprep.subr.mxu0 0.0
  %2876 = vmatpush1.msra.mxu0 0.0
  %2877 = vmatprep.subr.mxu0 0.0
  %2878 = vmatpush1.msra.mxu0 0.0
  %2879 = vmatprep.subr.mxu0 0.0
  %2880 = vmatpush1.msra.mxu0 0.0
  %2881 = vmatprep.subr.mxu0 0.0
  %2882 = vmatpush1.msra.mxu0 0.0
  %2883 = vmatprep.subr.mxu0 0.0
  %2884 = vmatpush1.msra.mxu0 0.0
  %2885 = vmatprep.subr.mxu0 0.0
  %2886 = vmatpush1.msra.mxu0 0.0
  %2887 = vmatprep.subr.mxu0 0.0
  %2888 = vmatpush1.msra.mxu0 0.0
  %2889 = vmatprep.subr.mxu0 0.0
  %2890 = vmatpush1.msra.mxu0 0.0
  %2891 = vmatprep.subr.mxu0 0.0
  %2892 = vmatpush1.msra.mxu0 0.0
  %2893 = vmatprep.subr.mxu0 0.0
  %2894 = vmatpush1.msra.mxu0 0.0
  %2895 = vmatprep.subr.mxu0 0.0
  %2896 = vmatpush1.msra.mxu0 0.0
  %2897 = vmatprep.mubr.f32.mxu0 0.0
  %2898 = vmatmul.mubr.f32.gmra.mrb[0].mxu0 %v2831
  %v2899 = vpop.f32.mrb[0].mxu0
  %v2900 = vadd.f32 0.0, %v2899
  %v2901 = vpop.f32.mrb[0].mxu0
  %2902 = vdwg.mxu0
  %v2903 = vadd.f32 %v2379, %v2900
  %v2904 = vxor.u32 %v2903, 2147483648
  %v2905 = vmul.f32 %v2904, 1.442695
  %v2906 = vpow.pop %v2905
  %v2907 = vadd.f32 %v2906, 1.0
  %v2908 = vrcp.pop %v2907
  %v2909 = vmul.f32 1.0, %v2908
  %v2910 = vtanh.pop %v2903
  %v2911 = vmul.f32 %v2909, %v2719
  %2913 = vrot.lane.b32.xlu0 %v2910, 64
  %v2914 = vpop.permute.xlu0 %2913
  %v2916 = vmul.f32 %v2909, %v2914
  %2918 = vrot.lane.b32.xlu0 %v2916, 32
  %v2919 = vpop.permute.xlu0 %2918
  %v2921 = vadd.f32 %v2911, %v2919
  %v2922 = vtanh.pop %v2921
  %2924 = vrot.lane.b32.xlu0 %v2922, 64
  %v2925 = vpop.permute.xlu0 %2924
  %v2927 = vmul.f32 %v2909, %v2925
  %2929 = vrot.lane.b32.xlu0 %v2927, 32
  %v2930 = vpop.permute.xlu0 %2929
  %2932 = vst.msk [vmem:[#allocation4 + $0x8] sm:$0xff] %vm200, %v2930
  %v2933 = vsel %vm200, %v2828, 0
  %2935 = vmatprep.subr.mxu0 0.0
  %2936 = vmatpush1.msra.mxu0 %v2627
  %2937 = vmatprep.subr.mxu0 0.0
  %2938 = vmatpush1.msra.mxu0 %v2628
  %2939 = vmatprep.subr.mxu0 0.0
  %2940 = vmatpush1.msra.mxu0 %v2629
  %2941 = vmatprep.subr.mxu0 0.0
  %2942 = vmatpush1.msra.mxu0 %v2630
  %2943 = vmatprep.subr.mxu0 0.0
  %2944 = vmatpush1.msra.mxu0 0.0
  %2945 = vmatprep.subr.mxu0 0.0
  %2946 = vmatpush1.msra.mxu0 0.0
  %2947 = vmatprep.subr.mxu0 0.0
  %2948 = vmatpush1.msra.mxu0 0.0
  %2949 = vmatprep.subr.mxu0 0.0
  %2950 = vmatpush1.msra.mxu0 0.0
  %2951 = vmatprep.subr.mxu0 0.0
  %2952 = vmatpush1.msra.mxu0 0.0
  %2953 = vmatprep.subr.mxu0 0.0
  %2954 = vmatpush1.msra.mxu0 0.0
  %2955 = vmatprep.subr.mxu0 0.0
  %2956 = vmatpush1.msra.mxu0 0.0
  %2957 = vmatprep.subr.mxu0 0.0
  %2958 = vmatpush1.msra.mxu0 0.0
  %2959 = vmatprep.subr.mxu0 0.0
  %2960 = vmatpush1.msra.mxu0 0.0
  %2961 = vmatprep.subr.mxu0 0.0
  %2962 = vmatpush1.msra.mxu0 0.0
  %2963 = vmatprep.subr.mxu0 0.0
  %2964 = vmatpush1.msra.mxu0 0.0
  %2965 = vmatprep.subr.mxu0 0.0
  %2966 = vmatpush1.msra.mxu0 0.0
  %2967 = vmatprep.subr.mxu0 0.0
  %2968 = vmatpush1.msra.mxu0 0.0
  %2969 = vmatprep.subr.mxu0 0.0
  %2970 = vmatpush1.msra.mxu0 0.0
  %2971 = vmatprep.subr.mxu0 0.0
  %2972 = vmatpush1.msra.mxu0 0.0
  %2973 = vmatprep.subr.mxu0 0.0
  %2974 = vmatpush1.msra.mxu0 0.0
  %2975 = vmatprep.subr.mxu0 0.0
  %2976 = vmatpush1.msra.mxu0 0.0
  %2977 = vmatprep.subr.mxu0 0.0
  %2978 = vmatpush1.msra.mxu0 0.0
  %2979 = vmatprep.subr.mxu0 0.0
  %2980 = vmatpush1.msra.mxu0 0.0
  %2981 = vmatprep.subr.mxu0 0.0
  %2982 = vmatpush1.msra.mxu0 0.0
  %2983 = vmatprep.subr.mxu0 0.0
  %2984 = vmatpush1.msra.mxu0 0.0
  %2985 = vmatprep.subr.mxu0 0.0
  %2986 = vmatpush1.msra.mxu0 0.0
  %2987 = vmatprep.subr.mxu0 0.0
  %2988 = vmatpush1.msra.mxu0 0.0
  %2989 = vmatprep.subr.mxu0 0.0
  %2990 = vmatpush1.msra.mxu0 0.0
  %2991 = vmatprep.subr.mxu0 0.0
  %2992 = vmatpush1.msra.mxu0 0.0
  %2993 = vmatprep.subr.mxu0 0.0
  %2994 = vmatpush1.msra.mxu0 0.0
  %2995 = vmatprep.subr.mxu0 0.0
  %2996 = vmatpush1.msra.mxu0 0.0
  %2997 = vmatprep.subr.mxu0 0.0
  %2998 = vmatpush1.msra.mxu0 0.0
  %2999 = vmatprep.mubr.f32.mxu0 0.0
  %3000 = vmatmul.mubr.f32.gmra.mrb[0].mxu0 %v2933
  %v3001 = vpop.f32.mrb[0].mxu0
  %v3002 = vadd.f32 0.0, %v3001
  %v3003 = vpop.f32.mrb[0].mxu0
  %3004 = vdwg.mxu0
  %v3005 = vadd.f32 %v2620, %v3002
  %v3006 = vxor.u32 %v3005, 2147483648
  %v3007 = vmul.f32 %v3006, 1.442695
  %v3008 = vpow.pop %v3007
  %v3009 = vadd.f32 %v3008, 1.0
  %v3010 = vrcp.pop %v3009
  %v3011 = vmul.f32 1.0, %v3010
  %v3012 = vtanh.pop %v3005
  %v3013 = vmul.f32 %v3011, %v2819
  %3015 = vrot.lane.b32.xlu0 %v3012, 64
  %v3016 = vpop.permute.xlu0 %3015
  %v3018 = vmul.f32 %v3011, %v3016
  %3020 = vrot.lane.b32.xlu0 %v3018, 32
  %v3021 = vpop.permute.xlu0 %3020
  %v3023 = vadd.f32 %v3013, %v3021
  %v3024 = vtanh.pop %v3023
  %3026 = vrot.lane.b32.xlu0 %v3024, 64
  %v3027 = vpop.permute.xlu0 %3026
  %v3029 = vmul.f32 %v3011, %v3027
  %3031 = vrot.lane.b32.xlu0 %v3029, 32
  %v3032 = vpop.permute.xlu0 %3031
  %3034 = vst.msk [vmem:[#allocation5 + $0x30] sm:$0xff] %vm200, %v3032
  %v3035 = vsel %vm200, %v2930, 0
  %3037 = vmatprep.subr.mxu0 0.0
  %3038 = vmatpush1.msra.mxu0 %v2622
  %3039 = vmatprep.subr.mxu0 0.0
  %3040 = vmatpush1.msra.mxu0 %v2623
  %3041 = vmatprep.subr.mxu0 0.0
  %3042 = vmatpush1.msra.mxu0 %v2624
  %3043 = vmatprep.subr.mxu0 0.0
  %3044 = vmatpush1.msra.mxu0 %v2625
  %3045 = vmatprep.subr.mxu0 0.0
  %3046 = vmatpush1.msra.mxu0 0.0
  %3047 = vmatprep.subr.mxu0 0.0
  %3048 = vmatpush1.msra.mxu0 0.0
  %3049 = vmatprep.subr.mxu0 0.0
  %3050 = vmatpush1.msra.mxu0 0.0
  %3051 = vmatprep.subr.mxu0 0.0
  %3052 = vmatpush1.msra.mxu0 0.0
  %3053 = vmatprep.subr.mxu0 0.0
  %3054 = vmatpush1.msra.mxu0 0.0
  %3055 = vmatprep.subr.mxu0 0.0
  %3056 = vmatpush1.msra.mxu0 0.0
  %3057 = vmatprep.subr.mxu0 0.0
  %3058 = vmatpush1.msra.mxu0 0.0
  %3059 = vmatprep.subr.mxu0 0.0
  %3060 = vmatpush1.msra.mxu0 0.0
  %3061 = vmatprep.subr.mxu0 0.0
  %3062 = vmatpush1.msra.mxu0 0.0
  %3063 = vmatprep.subr.mxu0 0.0
  %3064 = vmatpush1.msra.mxu0 0.0
  %3065 = vmatprep.subr.mxu0 0.0
  %3066 = vmatpush1.msra.mxu0 0.0
  %3067 = vmatprep.subr.mxu0 0.0
  %3068 = vmatpush1.msra.mxu0 0.0
  %3069 = vmatprep.subr.mxu0 0.0
  %3070 = vmatpush1.msra.mxu0 0.0
  %3071 = vmatprep.subr.mxu0 0.0
  %3072 = vmatpush1.msra.mxu0 0.0
  %3073 = vmatprep.subr.mxu0 0.0
  %3074 = vmatpush1.msra.mxu0 0.0
  %3075 = vmatprep.subr.mxu0 0.0
  %3076 = vmatpush1.msra.mxu0 0.0
  %3077 = vmatprep.subr.mxu0 0.0
  %3078 = vmatpush1.msra.mxu0 0.0
  %3079 = vmatprep.subr.mxu0 0.0
  %3080 = vmatpush1.msra.mxu0 0.0
  %3081 = vmatprep.subr.mxu0 0.0
  %3082 = vmatpush1.msra.mxu0 0.0
  %3083 = vmatprep.subr.mxu0 0.0
  %3084 = vmatpush1.msra.mxu0 0.0
  %3085 = vmatprep.subr.mxu0 0.0
  %3086 = vmatpush1.msra.mxu0 0.0
  %3087 = vmatprep.subr.mxu0 0.0
  %3088 = vmatpush1.msra.mxu0 0.0
  %3089 = vmatprep.subr.mxu0 0.0
  %3090 = vmatpush1.msra.mxu0 0.0
  %3091 = vmatprep.subr.mxu0 0.0
  %3092 = vmatpush1.msra.mxu0 0.0
  %3093 = vmatprep.subr.mxu0 0.0
  %3094 = vmatpush1.msra.mxu0 0.0
  %3095 = vmatprep.subr.mxu0 0.0
  %3096 = vmatpush1.msra.mxu0 0.0
  %3097 = vmatprep.subr.mxu0 0.0
  %3098 = vmatpush1.msra.mxu0 0.0
  %3099 = vmatprep.subr.mxu0 0.0
  %3100 = vmatpush1.msra.mxu0 0.0
  %3101 = vmatprep.mubr.f32.mxu0 0.0
  %3102 = vmatmul.mubr.f32.gmra.mrb[0].mxu0 %v3035
  %v3103 = vpop.f32.mrb[0].mxu0
  %v3104 = vadd.f32 0.0, %v3103
  %v3105 = vpop.f32.mrb[0].mxu0
  %3106 = vdwg.mxu0
  %v3107 = vadd.f32 %v2380, %v3104
  %v3108 = vxor.u32 %v3107, 2147483648
  %v3109 = vmul.f32 %v3108, 1.442695
  %v3110 = vpow.pop %v3109
  %v3111 = vadd.f32 %v3110, 1.0
  %v3112 = vrcp.pop %v3111
  %v3113 = vmul.f32 1.0, %v3112
  %v3114 = vtanh.pop %v3107
  %v3115 = vmul.f32 %v3113, %v2921
  %3117 = vrot.lane.b32.xlu0 %v3114, 64
  %v3118 = vpop.permute.xlu0 %3117
  %v3120 = vmul.f32 %v3113, %v3118
  %3122 = vrot.lane.b32.xlu0 %v3120, 32
  %v3123 = vpop.permute.xlu0 %3122
  %v3125 = vadd.f32 %v3115, %v3123
  %v3126 = vtanh.pop %v3125
  %3128 = vrot.lane.b32.xlu0 %v3126, 64
  %v3129 = vpop.permute.xlu0 %3128
  %v3131 = vmul.f32 %v3113, %v3129
  %3133 = vrot.lane.b32.xlu0 %v3131, 32
  %v3134 = vpop.permute.xlu0 %3133
  %3136 = vst.msk [vmem:[#allocation4 + $0x10] sm:$0xff] %vm200, %v3134
  %v3137 = vsel %vm200, %v3032, 0
  %3139 = vmatprep.subr.mxu0 0.0
  %3140 = vmatpush1.msra.mxu0 %v2627
  %3141 = vmatprep.subr.mxu0 0.0
  %3142 = vmatpush1.msra.mxu0 %v2628
  %3143 = vmatprep.subr.mxu0 0.0
  %3144 = vmatpush1.msra.mxu0 %v2629
  %3145 = vmatprep.subr.mxu0 0.0
  %3146 = vmatpush1.msra.mxu0 %v2630
  %3147 = vmatprep.subr.mxu0 0.0
  %3148 = vmatpush1.msra.mxu0 0.0
  %3149 = vmatprep.subr.mxu0 0.0
  %3150 = vmatpush1.msra.mxu0 0.0
  %3151 = vmatprep.subr.mxu0 0.0
  %3152 = vmatpush1.msra.mxu0 0.0
  %3153 = vmatprep.subr.mxu0 0.0
  %3154 = vmatpush1.msra.mxu0 0.0
  %3155 = vmatprep.subr.mxu0 0.0
  %3156 = vmatpush1.msra.mxu0 0.0
  %3157 = vmatprep.subr.mxu0 0.0
  %3158 = vmatpush1.msra.mxu0 0.0
  %3159 = vmatprep.subr.mxu0 0.0
  %3160 = vmatpush1.msra.mxu0 0.0
  %3161 = vmatprep.subr.mxu0 0.0
  %3162 = vmatpush1.msra.mxu0 0.0
  %3163 = vmatprep.subr.mxu0 0.0
  %3164 = vmatpush1.msra.mxu0 0.0
  %3165 = vmatprep.subr.mxu0 0.0
  %3166 = vmatpush1.msra.mxu0 0.0
  %3167 = vmatprep.subr.mxu0 0.0
  %3168 = vmatpush1.msra.mxu0 0.0
  %3169 = vmatprep.subr.mxu0 0.0
  %3170 = vmatpush1.msra.mxu0 0.0
  %3171 = vmatprep.subr.mxu0 0.0
  %3172 = vmatpush1.msra.mxu0 0.0
  %3173 = vmatprep.subr.mxu0 0.0
  %3174 = vmatpush1.msra.mxu0 0.0
  %3175 = vmatprep.subr.mxu0 0.0
  %3176 = vmatpush1.msra.mxu0 0.0
  %3177 = vmatprep.subr.mxu0 0.0
  %3178 = vmatpush1.msra.mxu0 0.0
  %3179 = vmatprep.subr.mxu0 0.0
  %3180 = vmatpush1.msra.mxu0 0.0
  %3181 = vmatprep.subr.mxu0 0.0
  %3182 = vmatpush1.msra.mxu0 0.0
  %3183 = vmatprep.subr.mxu0 0.0
  %3184 = vmatpush1.msra.mxu0 0.0
  %3185 = vmatprep.subr.mxu0 0.0
  %3186 = vmatpush1.msra.mxu0 0.0
  %3187 = vmatprep.subr.mxu0 0.0
  %3188 = vmatpush1.msra.mxu0 0.0
  %3189 = vmatprep.subr.mxu0 0.0
  %3190 = vmatpush1.msra.mxu0 0.0
  %3191 = vmatprep.subr.mxu0 0.0
  %3192 = vmatpush1.msra.mxu0 0.0
  %3193 = vmatprep.subr.mxu0 0.0
  %3194 = vmatpush1.msra.mxu0 0.0
  %3195 = vmatprep.subr.mxu0 0.0
  %3196 = vmatpush1.msra.mxu0 0.0
  %3197 = vmatprep.subr.mxu0 0.0
  %3198 = vmatpush1.msra.mxu0 0.0
  %3199 = vmatprep.subr.mxu0 0.0
  %3200 = vmatpush1.msra.mxu0 0.0
  %3201 = vmatprep.subr.mxu0 0.0
  %3202 = vmatpush1.msra.mxu0 0.0
  %3203 = vmatprep.mubr.f32.mxu0 0.0
  %3204 = vmatmul.mubr.f32.gmra.mrb[0].mxu0 %v3137
  %v3205 = vpop.f32.mrb[0].mxu0
  %v3206 = vadd.f32 0.0, %v3205
  %v3207 = vpop.f32.mrb[0].mxu0
  %3208 = vdwg.mxu0
  %v3209 = vadd.f32 %v2619, %v3206
  %v3210 = vxor.u32 %v3209, 2147483648
  %v3211 = vmul.f32 %v3210, 1.442695
  %v3212 = vpow.pop %v3211
  %v3213 = vadd.f32 %v3212, 1.0
  %v3214 = vrcp.pop %v3213
  %v3215 = vmul.f32 1.0, %v3214
  %v3216 = vtanh.pop %v3209
  %v3217 = vmul.f32 %v3215, %v3023
  %3219 = vrot.lane.b32.xlu0 %v3216, 64
  %v3220 = vpop.permute.xlu0 %3219
  %v3222 = vmul.f32 %v3215, %v3220
  %3224 = vrot.lane.b32.xlu0 %v3222, 32
  %v3225 = vpop.permute.xlu0 %3224
  %v3227 = vadd.f32 %v3217, %v3225
  %v3228 = vtanh.pop %v3227
  %3230 = vrot.lane.b32.xlu0 %v3228, 64
  %v3231 = vpop.permute.xlu0 %3230
  %v3233 = vmul.f32 %v3215, %v3231
  %3235 = vrot.lane.b32.xlu0 %v3233, 32
  %v3236 = vpop.permute.xlu0 %3235
  %3238 = vst.msk [vmem:[#allocation5 + $0x28] sm:$0xff] %vm200, %v3236
  %v3239 = vsel %vm200, %v3134, 0
  %3241 = vmatprep.subr.mxu0 0.0
  %3242 = vmatpush1.msra.mxu0 %v2622
  %3243 = vmatprep.subr.mxu0 0.0
  %3244 = vmatpush1.msra.mxu0 %v2623
  %3245 = vmatprep.subr.mxu0 0.0
  %3246 = vmatpush1.msra.mxu0 %v2624
  %3247 = vmatprep.subr.mxu0 0.0
  %3248 = vmatpush1.msra.mxu0 %v2625
  %3249 = vmatprep.subr.mxu0 0.0
  %3250 = vmatpush1.msra.mxu0 0.0
  %3251 = vmatprep.subr.mxu0 0.0
  %3252 = vmatpush1.msra.mxu0 0.0
  %3253 = vmatprep.subr.mxu0 0.0
  %3254 = vmatpush1.msra.mxu0 0.0
  %3255 = vmatprep.subr.mxu0 0.0
  %3256 = vmatpush1.msra.mxu0 0.0
  %3257 = vmatprep.subr.mxu0 0.0
  %3258 = vmatpush1.msra.mxu0 0.0
  %3259 = vmatprep.subr.mxu0 0.0
  %3260 = vmatpush1.msra.mxu0 0.0
  %3261 = vmatprep.subr.mxu0 0.0
  %3262 = vmatpush1.msra.mxu0 0.0
  %3263 = vmatprep.subr.mxu0 0.0
  %3264 = vmatpush1.msra.mxu0 0.0
  %3265 = vmatprep.subr.mxu0 0.0
  %3266 = vmatpush1.msra.mxu0 0.0
  %3267 = vmatprep.subr.mxu0 0.0
  %3268 = vmatpush1.msra.mxu0 0.0
  %3269 = vmatprep.subr.mxu0 0.0
  %3270 = vmatpush1.msra.mxu0 0.0
  %3271 = vmatprep.subr.mxu0 0.0
  %3272 = vmatpush1.msra.mxu0 0.0
  %3273 = vmatprep.subr.mxu0 0.0
  %3274 = vmatpush1.msra.mxu0 0.0
  %3275 = vmatprep.subr.mxu0 0.0
  %3276 = vmatpush1.msra.mxu0 0.0
  %3277 = vmatprep.subr.mxu0 0.0
  %3278 = vmatpush1.msra.mxu0 0.0
  %3279 = vmatprep.subr.mxu0 0.0
  %3280 = vmatpush1.msra.mxu0 0.0
  %3281 = vmatprep.subr.mxu0 0.0
  %3282 = vmatpush1.msra.mxu0 0.0
  %3283 = vmatprep.subr.mxu0 0.0
  %3284 = vmatpush1.msra.mxu0 0.0
  %3285 = vmatprep.subr.mxu0 0.0
  %3286 = vmatpush1.msra.mxu0 0.0
  %3287 = vmatprep.subr.mxu0 0.0
  %3288 = vmatpush1.msra.mxu0 0.0
  %3289 = vmatprep.subr.mxu0 0.0
  %3290 = vmatpush1.msra.mxu0 0.0
  %3291 = vmatprep.subr.mxu0 0.0
  %3292 = vmatpush1.msra.mxu0 0.0
  %3293 = vmatprep.subr.mxu0 0.0
  %3294 = vmatpush1.msra.mxu0 0.0
  %3295 = vmatprep.subr.mxu0 0.0
  %3296 = vmatpush1.msra.mxu0 0.0
  %3297 = vmatprep.subr.mxu0 0.0
  %3298 = vmatpush1.msra.mxu0 0.0
  %3299 = vmatprep.subr.mxu0 0.0
  %3300 = vmatpush1.msra.mxu0 0.0
  %3301 = vmatprep.subr.mxu0 0.0
  %3302 = vmatpush1.msra.mxu0 0.0
  %3303 = vmatprep.subr.mxu0 0.0
  %3304 = vmatpush1.msra.mxu0 0.0
  %3305 = vmatprep.mubr.f32.mxu0 0.0
  %3306 = vmatmul.mubr.f32.gmra.mrb[0].mxu0 %v3239
  %v3307 = vpop.f32.mrb[0].mxu0
  %v3308 = vadd.f32 0.0, %v3307
  %v3309 = vpop.f32.mrb[0].mxu0
  %3310 = vdwg.mxu0
  %v3311 = vadd.f32 %v2381, %v3308
  %v3312 = vxor.u32 %v3311, 2147483648
  %v3313 = vmul.f32 %v3312, 1.442695
  %v3314 = vpow.pop %v3313
  %v3315 = vadd.f32 %v3314, 1.0
  %v3316 = vrcp.pop %v3315
  %v3317 = vmul.f32 1.0, %v3316
  %v3318 = vtanh.pop %v3311
  %v3319 = vmul.f32 %v3317, %v3125
  %3321 = vrot.lane.b32.xlu0 %v3318, 64
  %v3322 = vpop.permute.xlu0 %3321
  %v3324 = vmul.f32 %v3317, %v3322
  %3326 = vrot.lane.b32.xlu0 %v3324, 32
  %v3327 = vpop.permute.xlu0 %3326
  %v3329 = vadd.f32 %v3319, %v3327
  %v3330 = vtanh.pop %v3329
  %3332 = vrot.lane.b32.xlu0 %v3330, 64
  %v3333 = vpop.permute.xlu0 %3332
  %v3335 = vmul.f32 %v3317, %v3333
  %3337 = vrot.lane.b32.xlu0 %v3335, 32
  %v3338 = vpop.permute.xlu0 %3337
  %3340 = vst.msk [vmem:[#allocation4 + $0x18] sm:$0xff] %vm200, %v3338
  %v3341 = vsel %vm200, %v3236, 0
  %3343 = vmatprep.subr.mxu0 0.0
  %3344 = vmatpush1.msra.mxu0 %v2627
  %3345 = vmatprep.subr.mxu0 0.0
  %3346 = vmatpush1.msra.mxu0 %v2628
  %3347 = vmatprep.subr.mxu0 0.0
  %3348 = vmatpush1.msra.mxu0 %v2629
  %3349 = vmatprep.subr.mxu0 0.0
  %3350 = vmatpush1.msra.mxu0 %v2630
  %3351 = vmatprep.subr.mxu0 0.0
  %3352 = vmatpush1.msra.mxu0 0.0
  %3353 = vmatprep.subr.mxu0 0.0
  %3354 = vmatpush1.msra.mxu0 0.0
  %3355 = vmatprep.subr.mxu0 0.0
  %3356 = vmatpush1.msra.mxu0 0.0
  %3357 = vmatprep.subr.mxu0 0.0
  %3358 = vmatpush1.msra.mxu0 0.0
  %3359 = vmatprep.subr.mxu0 0.0
  %3360 = vmatpush1.msra.mxu0 0.0
  %3361 = vmatprep.subr.mxu0 0.0
  %3362 = vmatpush1.msra.mxu0 0.0
  %3363 = vmatprep.subr.mxu0 0.0
  %3364 = vmatpush1.msra.mxu0 0.0
  %3365 = vmatprep.subr.mxu0 0.0
  %3366 = vmatpush1.msra.mxu0 0.0
  %3367 = vmatprep.subr.mxu0 0.0
  %3368 = vmatpush1.msra.mxu0 0.0
  %3369 = vmatprep.subr.mxu0 0.0
  %3370 = vmatpush1.msra.mxu0 0.0
  %3371 = vmatprep.subr.mxu0 0.0
  %3372 = vmatpush1.msra.mxu0 0.0
  %3373 = vmatprep.subr.mxu0 0.0
  %3374 = vmatpush1.msra.mxu0 0.0
  %3375 = vmatprep.subr.mxu0 0.0
  %3376 = vmatpush1.msra.mxu0 0.0
  %3377 = vmatprep.subr.mxu0 0.0
  %3378 = vmatpush1.msra.mxu0 0.0
  %3379 = vmatprep.subr.mxu0 0.0
  %3380 = vmatpush1.msra.mxu0 0.0
  %3381 = vmatprep.subr.mxu0 0.0
  %3382 = vmatpush1.msra.mxu0 0.0
  %3383 = vmatprep.subr.mxu0 0.0
  %3384 = vmatpush1.msra.mxu0 0.0
  %3385 = vmatprep.subr.mxu0 0.0
  %3386 = vmatpush1.msra.mxu0 0.0
  %3387 = vmatprep.subr.mxu0 0.0
  %3388 = vmatpush1.msra.mxu0 0.0
  %3389 = vmatprep.subr.mxu0 0.0
  %3390 = vmatpush1.msra.mxu0 0.0
  %3391 = vmatprep.subr.mxu0 0.0
  %3392 = vmatpush1.msra.mxu0 0.0
  %3393 = vmatprep.subr.mxu0 0.0
  %3394 = vmatpush1.msra.mxu0 0.0
  %3395 = vmatprep.subr.mxu0 0.0
  %3396 = vmatpush1.msra.mxu0 0.0
  %3397 = vmatprep.subr.mxu0 0.0
  %3398 = vmatpush1.msra.mxu0 0.0
  %3399 = vmatprep.subr.mxu0 0.0
  %3400 = vmatpush1.msra.mxu0 0.0
  %3401 = vmatprep.subr.mxu0 0.0
  %3402 = vmatpush1.msra.mxu0 0.0
  %3403 = vmatprep.subr.mxu0 0.0
  %3404 = vmatpush1.msra.mxu0 0.0
  %3405 = vmatprep.subr.mxu0 0.0
  %3406 = vmatpush1.msra.mxu0 0.0
  %3407 = vmatprep.mubr.f32.mxu0 0.0
  %3408 = vmatmul.mubr.f32.gmra.mrb[0].mxu0 %v3341
  %v3409 = vpop.f32.mrb[0].mxu0
  %v3410 = vadd.f32 0.0, %v3409
  %v3411 = vpop.f32.mrb[0].mxu0
  %3412 = vdwg.mxu0
  %v3413 = vadd.f32 %v2618, %v3410
  %v3414 = vxor.u32 %v3413, 2147483648
  %v3415 = vmul.f32 %v3414, 1.442695
  %v3416 = vpow.pop %v3415
  %v3417 = vadd.f32 %v3416, 1.0
  %v3418 = vrcp.pop %v3417
  %v3419 = vmul.f32 1.0, %v3418
  %v3420 = vtanh.pop %v3413
  %v3421 = vmul.f32 %v3419, %v3227
  %3423 = vrot.lane.b32.xlu0 %v3420, 64
  %v3424 = vpop.permute.xlu0 %3423
  %v3426 = vmul.f32 %v3419, %v3424
  %3428 = vrot.lane.b32.xlu0 %v3426, 32
  %v3429 = vpop.permute.xlu0 %3428
  %v3431 = vadd.f32 %v3421, %v3429
  %v3432 = vtanh.pop %v3431
  %3434 = vrot.lane.b32.xlu0 %v3432, 64
  %v3435 = vpop.permute.xlu0 %3434
  %v3437 = vmul.f32 %v3419, %v3435
  %3439 = vrot.lane.b32.xlu0 %v3437, 32
  %v3440 = vpop.permute.xlu0 %3439
  %3442 = vst.msk [vmem:[#allocation5 + $0x20] sm:$0xff] %vm200, %v3440
  %v3443 = vsel %vm200, %v3338, 0
  %3445 = vmatprep.subr.mxu0 0.0
  %3446 = vmatpush1.msra.mxu0 %v2622
  %3447 = vmatprep.subr.mxu0 0.0
  %3448 = vmatpush1.msra.mxu0 %v2623
  %3449 = vmatprep.subr.mxu0 0.0
  %3450 = vmatpush1.msra.mxu0 %v2624
  %3451 = vmatprep.subr.mxu0 0.0
  %3452 = vmatpush1.msra.mxu0 %v2625
  %3453 = vmatprep.subr.mxu0 0.0
  %3454 = vmatpush1.msra.mxu0 0.0
  %3455 = vmatprep.subr.mxu0 0.0
  %3456 = vmatpush1.msra.mxu0 0.0
  %3457 = vmatprep.subr.mxu0 0.0
  %3458 = vmatpush1.msra.mxu0 0.0
  %3459 = vmatprep.subr.mxu0 0.0
  %3460 = vmatpush1.msra.mxu0 0.0
  %3461 = vmatprep.subr.mxu0 0.0
  %3462 = vmatpush1.msra.mxu0 0.0
  %3463 = vmatprep.subr.mxu0 0.0
  %3464 = vmatpush1.msra.mxu0 0.0
  %3465 = vmatprep.subr.mxu0 0.0
  %3466 = vmatpush1.msra.mxu0 0.0
  %3467 = vmatprep.subr.mxu0 0.0
  %3468 = vmatpush1.msra.mxu0 0.0
  %3469 = vmatprep.subr.mxu0 0.0
  %3470 = vmatpush1.msra.mxu0 0.0
  %3471 = vmatprep.subr.mxu0 0.0
  %3472 = vmatpush1.msra.mxu0 0.0
  %3473 = vmatprep.subr.mxu0 0.0
  %3474 = vmatpush1.msra.mxu0 0.0
  %3475 = vmatprep.subr.mxu0 0.0
  %3476 = vmatpush1.msra.mxu0 0.0
  %3477 = vmatprep.subr.mxu0 0.0
  %3478 = vmatpush1.msra.mxu0 0.0
  %3479 = vmatprep.subr.mxu0 0.0
  %3480 = vmatpush1.msra.mxu0 0.0
  %3481 = vmatprep.subr.mxu0 0.0
  %3482 = vmatpush1.msra.mxu0 0.0
  %3483 = vmatprep.subr.mxu0 0.0
  %3484 = vmatpush1.msra.mxu0 0.0
  %3485 = vmatprep.subr.mxu0 0.0
  %3486 = vmatpush1.msra.mxu0 0.0
  %3487 = vmatprep.subr.mxu0 0.0
  %3488 = vmatpush1.msra.mxu0 0.0
  %3489 = vmatprep.subr.mxu0 0.0
  %3490 = vmatpush1.msra.mxu0 0.0
  %3491 = vmatprep.subr.mxu0 0.0
  %3492 = vmatpush1.msra.mxu0 0.0
  %3493 = vmatprep.subr.mxu0 0.0
  %3494 = vmatpush1.msra.mxu0 0.0
  %3495 = vmatprep.subr.mxu0 0.0
  %3496 = vmatpush1.msra.mxu0 0.0
  %3497 = vmatprep.subr.mxu0 0.0
  %3498 = vmatpush1.msra.mxu0 0.0
  %3499 = vmatprep.subr.mxu0 0.0
  %3500 = vmatpush1.msra.mxu0 0.0
  %3501 = vmatprep.subr.mxu0 0.0
  %3502 = vmatpush1.msra.mxu0 0.0
  %3503 = vmatprep.subr.mxu0 0.0
  %3504 = vmatpush1.msra.mxu0 0.0
  %3505 = vmatprep.subr.mxu0 0.0
  %3506 = vmatpush1.msra.mxu0 0.0
  %3507 = vmatprep.subr.mxu0 0.0
  %3508 = vmatpush1.msra.mxu0 0.0
  %3509 = vmatprep.mubr.f32.mxu0 0.0
  %3510 = vmatmul.mubr.f32.gmra.mrb[0].mxu0 %v3443
  %v3511 = vpop.f32.mrb[0].mxu0
  %v3512 = vadd.f32 0.0, %v3511
  %v3513 = vpop.f32.mrb[0].mxu0
  %3514 = vdwg.mxu0
  %v3515 = vadd.f32 %v2382, %v3512
  %v3516 = vxor.u32 %v3515, 2147483648
  %v3517 = vmul.f32 %v3516, 1.442695
  %v3518 = vpow.pop %v3517
  %v3519 = vadd.f32 %v3518, 1.0
  %v3520 = vrcp.pop %v3519
  %v3521 = vmul.f32 1.0, %v3520
  %v3522 = vtanh.pop %v3515
  %v3523 = vmul.f32 %v3521, %v3329
  %3525 = vrot.lane.b32.xlu0 %v3522, 64
  %v3526 = vpop.permute.xlu0 %3525
  %v3528 = vmul.f32 %v3521, %v3526
  %3530 = vrot.lane.b32.xlu0 %v3528, 32
  %v3531 = vpop.permute.xlu0 %3530
  %v3533 = vadd.f32 %v3523, %v3531
  %v3534 = vtanh.pop %v3533
  %3536 = vrot.lane.b32.xlu0 %v3534, 64
  %v3537 = vpop.permute.xlu0 %3536
  %v3539 = vmul.f32 %v3521, %v3537
  %3541 = vrot.lane.b32.xlu0 %v3539, 32
  %v3542 = vpop.permute.xlu0 %3541
  %3544 = vst.msk [vmem:[#allocation4 + $0x20] sm:$0xff] %vm200, %v3542
  %v3545 = vsel %vm200, %v3440, 0
  %3547 = vmatprep.subr.mxu0 0.0
  %3548 = vmatpush1.msra.mxu0 %v2627
  %3549 = vmatprep.subr.mxu0 0.0
  %3550 = vmatpush1.msra.mxu0 %v2628
  %3551 = vmatprep.subr.mxu0 0.0
  %3552 = vmatpush1.msra.mxu0 %v2629
  %3553 = vmatprep.subr.mxu0 0.0
  %3554 = vmatpush1.msra.mxu0 %v2630
  %3555 = vmatprep.subr.mxu0 0.0
  %3556 = vmatpush1.msra.mxu0 0.0
  %3557 = vmatprep.subr.mxu0 0.0
  %3558 = vmatpush1.msra.mxu0 0.0
  %3559 = vmatprep.subr.mxu0 0.0
  %3560 = vmatpush1.msra.mxu0 0.0
  %3561 = vmatprep.subr.mxu0 0.0
  %3562 = vmatpush1.msra.mxu0 0.0
  %3563 = vmatprep.subr.mxu0 0.0
  %3564 = vmatpush1.msra.mxu0 0.0
  %3565 = vmatprep.subr.mxu0 0.0
  %3566 = vmatpush1.msra.mxu0 0.0
  %3567 = vmatprep.subr.mxu0 0.0
  %3568 = vmatpush1.msra.mxu0 0.0
  %3569 = vmatprep.subr.mxu0 0.0
  %3570 = vmatpush1.msra.mxu0 0.0
  %3571 = vmatprep.subr.mxu0 0.0
  %3572 = vmatpush1.msra.mxu0 0.0
  %3573 = vmatprep.subr.mxu0 0.0
  %3574 = vmatpush1.msra.mxu0 0.0
  %3575 = vmatprep.subr.mxu0 0.0
  %3576 = vmatpush1.msra.mxu0 0.0
  %3577 = vmatprep.subr.mxu0 0.0
  %3578 = vmatpush1.msra.mxu0 0.0
  %3579 = vmatprep.subr.mxu0 0.0
  %3580 = vmatpush1.msra.mxu0 0.0
  %3581 = vmatprep.subr.mxu0 0.0
  %3582 = vmatpush1.msra.mxu0 0.0
  %3583 = vmatprep.subr.mxu0 0.0
  %3584 = vmatpush1.msra.mxu0 0.0
  %3585 = vmatprep.subr.mxu0 0.0
  %3586 = vmatpush1.msra.mxu0 0.0
  %3587 = vmatprep.subr.mxu0 0.0
  %3588 = vmatpush1.msra.mxu0 0.0
  %3589 = vmatprep.subr.mxu0 0.0
  %3590 = vmatpush1.msra.mxu0 0.0
  %3591 = vmatprep.subr.mxu0 0.0
  %3592 = vmatpush1.msra.mxu0 0.0
  %3593 = vmatprep.subr.mxu0 0.0
  %3594 = vmatpush1.msra.mxu0 0.0
  %3595 = vmatprep.subr.mxu0 0.0
  %3596 = vmatpush1.msra.mxu0 0.0
  %3597 = vmatprep.subr.mxu0 0.0
  %3598 = vmatpush1.msra.mxu0 0.0
  %3599 = vmatprep.subr.mxu0 0.0
  %3600 = vmatpush1.msra.mxu0 0.0
  %3601 = vmatprep.subr.mxu0 0.0
  %3602 = vmatpush1.msra.mxu0 0.0
  %3603 = vmatprep.subr.mxu0 0.0
  %3604 = vmatpush1.msra.mxu0 0.0
  %3605 = vmatprep.subr.mxu0 0.0
  %3606 = vmatpush1.msra.mxu0 0.0
  %3607 = vmatprep.subr.mxu0 0.0
  %3608 = vmatpush1.msra.mxu0 0.0
  %3609 = vmatprep.subr.mxu0 0.0
  %3610 = vmatpush1.msra.mxu0 0.0
  %3611 = vmatprep.mubr.f32.mxu0 0.0
  %3612 = vmatmul.mubr.f32.gmra.mrb[0].mxu0 %v3545
  %v3613 = vpop.f32.mrb[0].mxu0
  %v3614 = vadd.f32 0.0, %v3613
  %v3615 = vpop.f32.mrb[0].mxu0
  %3616 = vdwg.mxu0
  %v3617 = vadd.f32 %v2617, %v3614
  %v3618 = vxor.u32 %v3617, 2147483648
  %v3619 = vmul.f32 %v3618, 1.442695
  %v3620 = vpow.pop %v3619
  %v3621 = vadd.f32 %v3620, 1.0
  %v3622 = vrcp.pop %v3621
  %v3623 = vmul.f32 1.0, %v3622
  %v3624 = vtanh.pop %v3617
  %v3625 = vmul.f32 %v3623, %v3431
  %3627 = vrot.lane.b32.xlu0 %v3624, 64
  %v3628 = vpop.permute.xlu0 %3627
  %v3630 = vmul.f32 %v3623, %v3628
  %3632 = vrot.lane.b32.xlu0 %v3630, 32
  %v3633 = vpop.permute.xlu0 %3632
  %v3635 = vadd.f32 %v3625, %v3633
  %v3636 = vtanh.pop %v3635
  %3638 = vrot.lane.b32.xlu0 %v3636, 64
  %v3639 = vpop.permute.xlu0 %3638
  %v3641 = vmul.f32 %v3623, %v3639
  %3643 = vrot.lane.b32.xlu0 %v3641, 32
  %v3644 = vpop.permute.xlu0 %3643
  %3646 = vst.msk [vmem:[#allocation5 + $0x18] sm:$0xff] %vm200, %v3644
  %v3647 = vsel %vm200, %v3542, 0
  %3649 = vmatprep.subr.mxu0 0.0
  %3650 = vmatpush1.msra.mxu0 %v2622
  %3651 = vmatprep.subr.mxu0 0.0
  %3652 = vmatpush1.msra.mxu0 %v2623
  %3653 = vmatprep.subr.mxu0 0.0
  %3654 = vmatpush1.msra.mxu0 %v2624
  %3655 = vmatprep.subr.mxu0 0.0
  %3656 = vmatpush1.msra.mxu0 %v2625
  %3657 = vmatprep.subr.mxu0 0.0
  %3658 = vmatpush1.msra.mxu0 0.0
  %3659 = vmatprep.subr.mxu0 0.0
  %3660 = vmatpush1.msra.mxu0 0.0
  %3661 = vmatprep.subr.mxu0 0.0
  %3662 = vmatpush1.msra.mxu0 0.0
  %3663 = vmatprep.subr.mxu0 0.0
  %3664 = vmatpush1.msra.mxu0 0.0
  %3665 = vmatprep.subr.mxu0 0.0
  %3666 = vmatpush1.msra.mxu0 0.0
  %3667 = vmatprep.subr.mxu0 0.0
  %3668 = vmatpush1.msra.mxu0 0.0
  %3669 = vmatprep.subr.mxu0 0.0
  %3670 = vmatpush1.msra.mxu0 0.0
  %3671 = vmatprep.subr.mxu0 0.0
  %3672 = vmatpush1.msra.mxu0 0.0
  %3673 = vmatprep.subr.mxu0 0.0
  %3674 = vmatpush1.msra.mxu0 0.0
  %3675 = vmatprep.subr.mxu0 0.0
  %3676 = vmatpush1.msra.mxu0 0.0
  %3677 = vmatprep.subr.mxu0 0.0
  %3678 = vmatpush1.msra.mxu0 0.0
  %3679 = vmatprep.subr.mxu0 0.0
  %3680 = vmatpush1.msra.mxu0 0.0
  %3681 = vmatprep.subr.mxu0 0.0
  %3682 = vmatpush1.msra.mxu0 0.0
  %3683 = vmatprep.subr.mxu0 0.0
  %3684 = vmatpush1.msra.mxu0 0.0
  %3685 = vmatprep.subr.mxu0 0.0
  %3686 = vmatpush1.msra.mxu0 0.0
  %3687 = vmatprep.subr.mxu0 0.0
  %3688 = vmatpush1.msra.mxu0 0.0
  %3689 = vmatprep.subr.mxu0 0.0
  %3690 = vmatpush1.msra.mxu0 0.0
  %3691 = vmatprep.subr.mxu0 0.0
  %3692 = vmatpush1.msra.mxu0 0.0
  %3693 = vmatprep.subr.mxu0 0.0
  %3694 = vmatpush1.msra.mxu0 0.0
  %3695 = vmatprep.subr.mxu0 0.0
  %3696 = vmatpush1.msra.mxu0 0.0
  %3697 = vmatprep.subr.mxu0 0.0
  %3698 = vmatpush1.msra.mxu0 0.0
  %3699 = vmatprep.subr.mxu0 0.0
  %3700 = vmatpush1.msra.mxu0 0.0
  %3701 = vmatprep.subr.mxu0 0.0
  %3702 = vmatpush1.msra.mxu0 0.0
  %3703 = vmatprep.subr.mxu0 0.0
  %3704 = vmatpush1.msra.mxu0 0.0
  %3705 = vmatprep.subr.mxu0 0.0
  %3706 = vmatpush1.msra.mxu0 0.0
  %3707 = vmatprep.subr.mxu0 0.0
  %3708 = vmatpush1.msra.mxu0 0.0
  %3709 = vmatprep.subr.mxu0 0.0
  %3710 = vmatpush1.msra.mxu0 0.0
  %3711 = vmatprep.subr.mxu0 0.0
  %3712 = vmatpush1.msra.mxu0 0.0
  %3713 = vmatprep.mubr.f32.mxu0 0.0
  %3714 = vmatmul.mubr.f32.gmra.mrb[0].mxu0 %v3647
  %v3715 = vpop.f32.mrb[0].mxu0
  %v3716 = vadd.f32 0.0, %v3715
  %v3717 = vpop.f32.mrb[0].mxu0
  %3718 = vdwg.mxu0
  %v3719 = vadd.f32 %v2383, %v3716
  %v3720 = vxor.u32 %v3719, 2147483648
  %v3721 = vmul.f32 %v3720, 1.442695
  %v3722 = vpow.pop %v3721
  %v3723 = vadd.f32 %v3722, 1.0
  %v3724 = vrcp.pop %v3723
  %v3725 = vmul.f32 1.0, %v3724
  %v3726 = vtanh.pop %v3719
  %v3727 = vmul.f32 %v3725, %v3533
  %3729 = vrot.lane.b32.xlu0 %v3726, 64
  %v3730 = vpop.permute.xlu0 %3729
  %v3732 = vmul.f32 %v3725, %v3730
  %3734 = vrot.lane.b32.xlu0 %v3732, 32
  %v3735 = vpop.permute.xlu0 %3734
  %v3737 = vadd.f32 %v3727, %v3735
  %v3738 = vtanh.pop %v3737
  %3740 = vrot.lane.b32.xlu0 %v3738, 64
  %v3741 = vpop.permute.xlu0 %3740
  %v3743 = vmul.f32 %v3725, %v3741
  %3745 = vrot.lane.b32.xlu0 %v3743, 32
  %v3746 = vpop.permute.xlu0 %3745
  %3748 = vst.msk [vmem:[#allocation4 + $0x28] sm:$0xff] %vm200, %v3746
  %v3749 = vsel %vm200, %v3644, 0
  %3751 = vmatprep.subr.mxu0 0.0
  %3752 = vmatpush1.msra.mxu0 %v2627
  %3753 = vmatprep.subr.mxu0 0.0
  %3754 = vmatpush1.msra.mxu0 %v2628
  %3755 = vmatprep.subr.mxu0 0.0
  %3756 = vmatpush1.msra.mxu0 %v2629
  %3757 = vmatprep.subr.mxu0 0.0
  %3758 = vmatpush1.msra.mxu0 %v2630
  %3759 = vmatprep.subr.mxu0 0.0
  %3760 = vmatpush1.msra.mxu0 0.0
  %3761 = vmatprep.subr.mxu0 0.0
  %3762 = vmatpush1.msra.mxu0 0.0
  %3763 = vmatprep.subr.mxu0 0.0
  %3764 = vmatpush1.msra.mxu0 0.0
  %3765 = vmatprep.subr.mxu0 0.0
  %3766 = vmatpush1.msra.mxu0 0.0
  %3767 = vmatprep.subr.mxu0 0.0
  %3768 = vmatpush1.msra.mxu0 0.0
  %3769 = vmatprep.subr.mxu0 0.0
  %3770 = vmatpush1.msra.mxu0 0.0
  %3771 = vmatprep.subr.mxu0 0.0
  %3772 = vmatpush1.msra.mxu0 0.0
  %3773 = vmatprep.subr.mxu0 0.0
  %3774 = vmatpush1.msra.mxu0 0.0
  %3775 = vmatprep.subr.mxu0 0.0
  %3776 = vmatpush1.msra.mxu0 0.0
  %3777 = vmatprep.subr.mxu0 0.0
  %3778 = vmatpush1.msra.mxu0 0.0
  %3779 = vmatprep.subr.mxu0 0.0
  %3780 = vmatpush1.msra.mxu0 0.0
  %3781 = vmatprep.subr.mxu0 0.0
  %3782 = vmatpush1.msra.mxu0 0.0
  %3783 = vmatprep.subr.mxu0 0.0
  %3784 = vmatpush1.msra.mxu0 0.0
  %3785 = vmatprep.subr.mxu0 0.0
  %3786 = vmatpush1.msra.mxu0 0.0
  %3787 = vmatprep.subr.mxu0 0.0
  %3788 = vmatpush1.msra.mxu0 0.0
  %3789 = vmatprep.subr.mxu0 0.0
  %3790 = vmatpush1.msra.mxu0 0.0
  %3791 = vmatprep.subr.mxu0 0.0
  %3792 = vmatpush1.msra.mxu0 0.0
  %3793 = vmatprep.subr.mxu0 0.0
  %3794 = vmatpush1.msra.mxu0 0.0
  %3795 = vmatprep.subr.mxu0 0.0
  %3796 = vmatpush1.msra.mxu0 0.0
  %3797 = vmatprep.subr.mxu0 0.0
  %3798 = vmatpush1.msra.mxu0 0.0
  %3799 = vmatprep.subr.mxu0 0.0
  %3800 = vmatpush1.msra.mxu0 0.0
  %3801 = vmatprep.subr.mxu0 0.0
  %3802 = vmatpush1.msra.mxu0 0.0
  %3803 = vmatprep.subr.mxu0 0.0
  %3804 = vmatpush1.msra.mxu0 0.0
  %3805 = vmatprep.subr.mxu0 0.0
  %3806 = vmatpush1.msra.mxu0 0.0
  %3807 = vmatprep.subr.mxu0 0.0
  %3808 = vmatpush1.msra.mxu0 0.0
  %3809 = vmatprep.subr.mxu0 0.0
  %3810 = vmatpush1.msra.mxu0 0.0
  %3811 = vmatprep.subr.mxu0 0.0
  %3812 = vmatpush1.msra.mxu0 0.0
  %3813 = vmatprep.subr.mxu0 0.0
  %3814 = vmatpush1.msra.mxu0 0.0
  %3815 = vmatprep.mubr.f32.mxu0 0.0
  %3816 = vmatmul.mubr.f32.gmra.mrb[0].mxu0 %v3749
  %v3817 = vpop.f32.mrb[0].mxu0
  %v3818 = vadd.f32 0.0, %v3817
  %v3819 = vpop.f32.mrb[0].mxu0
  %3820 = vdwg.mxu0
  %v3821 = vadd.f32 %v2616, %v3818
  %v3822 = vxor.u32 %v3821, 2147483648
  %v3823 = vmul.f32 %v3822, 1.442695
  %v3824 = vpow.pop %v3823
  %v3825 = vadd.f32 %v3824, 1.0
  %v3826 = vrcp.pop %v3825
  %v3827 = vmul.f32 1.0, %v3826
  %v3828 = vtanh.pop %v3821
  %v3829 = vmul.f32 %v3827, %v3635
  %3831 = vrot.lane.b32.xlu0 %v3828, 64
  %v3832 = vpop.permute.xlu0 %3831
  %v3834 = vmul.f32 %v3827, %v3832
  %3836 = vrot.lane.b32.xlu0 %v3834, 32
  %v3837 = vpop.permute.xlu0 %3836
  %v3839 = vadd.f32 %v3829, %v3837
  %v3840 = vtanh.pop %v3839
  %3842 = vrot.lane.b32.xlu0 %v3840, 64
  %v3843 = vpop.permute.xlu0 %3842
  %v3845 = vmul.f32 %v3827, %v3843
  %3847 = vrot.lane.b32.xlu0 %v3845, 32
  %v3848 = vpop.permute.xlu0 %3847
  %3850 = vst.msk [vmem:[#allocation5 + $0x10] sm:$0xff] %vm200, %v3848
  %v3851 = vsel %vm200, %v3746, 0
  %3853 = vmatprep.subr.mxu0 0.0
  %3854 = vmatpush1.msra.mxu0 %v2622
  %3855 = vmatprep.subr.mxu0 0.0
  %3856 = vmatpush1.msra.mxu0 %v2623
  %3857 = vmatprep.subr.mxu0 0.0
  %3858 = vmatpush1.msra.mxu0 %v2624
  %3859 = vmatprep.subr.mxu0 0.0
  %3860 = vmatpush1.msra.mxu0 %v2625
  %3861 = vmatprep.subr.mxu0 0.0
  %3862 = vmatpush1.msra.mxu0 0.0
  %3863 = vmatprep.subr.mxu0 0.0
  %3864 = vmatpush1.msra.mxu0 0.0
  %3865 = vmatprep.subr.mxu0 0.0
  %3866 = vmatpush1.msra.mxu0 0.0
  %3867 = vmatprep.subr.mxu0 0.0
  %3868 = vmatpush1.msra.mxu0 0.0
  %3869 = vmatprep.subr.mxu0 0.0
  %3870 = vmatpush1.msra.mxu0 0.0
  %3871 = vmatprep.subr.mxu0 0.0
  %3872 = vmatpush1.msra.mxu0 0.0
  %3873 = vmatprep.subr.mxu0 0.0
  %3874 = vmatpush1.msra.mxu0 0.0
  %3875 = vmatprep.subr.mxu0 0.0
  %3876 = vmatpush1.msra.mxu0 0.0
  %3877 = vmatprep.subr.mxu0 0.0
  %3878 = vmatpush1.msra.mxu0 0.0
  %3879 = vmatprep.subr.mxu0 0.0
  %3880 = vmatpush1.msra.mxu0 0.0
  %3881 = vmatprep.subr.mxu0 0.0
  %3882 = vmatpush1.msra.mxu0 0.0
  %3883 = vmatprep.subr.mxu0 0.0
  %3884 = vmatpush1.msra.mxu0 0.0
  %3885 = vmatprep.subr.mxu0 0.0
  %3886 = vmatpush1.msra.mxu0 0.0
  %3887 = vmatprep.subr.mxu0 0.0
  %3888 = vmatpush1.msra.mxu0 0.0
  %3889 = vmatprep.subr.mxu0 0.0
  %3890 = vmatpush1.msra.mxu0 0.0
  %3891 = vmatprep.subr.mxu0 0.0
  %3892 = vmatpush1.msra.mxu0 0.0
  %3893 = vmatprep.subr.mxu0 0.0
  %3894 = vmatpush1.msra.mxu0 0.0
  %3895 = vmatprep.subr.mxu0 0.0
  %3896 = vmatpush1.msra.mxu0 0.0
  %3897 = vmatprep.subr.mxu0 0.0
  %3898 = vmatpush1.msra.mxu0 0.0
  %3899 = vmatprep.subr.mxu0 0.0
  %3900 = vmatpush1.msra.mxu0 0.0
  %3901 = vmatprep.subr.mxu0 0.0
  %3902 = vmatpush1.msra.mxu0 0.0
  %3903 = vmatprep.subr.mxu0 0.0
  %3904 = vmatpush1.msra.mxu0 0.0
  %3905 = vmatprep.subr.mxu0 0.0
  %3906 = vmatpush1.msra.mxu0 0.0
  %3907 = vmatprep.subr.mxu0 0.0
  %3908 = vmatpush1.msra.mxu0 0.0
  %3909 = vmatprep.subr.mxu0 0.0
  %3910 = vmatpush1.msra.mxu0 0.0
  %3911 = vmatprep.subr.mxu0 0.0
  %3912 = vmatpush1.msra.mxu0 0.0
  %3913 = vmatprep.subr.mxu0 0.0
  %3914 = vmatpush1.msra.mxu0 0.0
  %3915 = vmatprep.subr.mxu0 0.0
  %3916 = vmatpush1.msra.mxu0 0.0
  %3917 = vmatprep.mubr.f32.mxu0 0.0
  %3918 = vmatmul.mubr.f32.gmra.mrb[0].mxu0 %v3851
  %v3919 = vpop.f32.mrb[0].mxu0
  %v3920 = vadd.f32 0.0, %v3919
  %v3921 = vpop.f32.mrb[0].mxu0
  %3922 = vdwg.mxu0
  %v3923 = vadd.f32 %v2384, %v3920
  %v3924 = vxor.u32 %v3923, 2147483648
  %v3925 = vmul.f32 %v3924, 1.442695
  %v3926 = vpow.pop %v3925
  %v3927 = vadd.f32 %v3926, 1.0
  %v3928 = vrcp.pop %v3927
  %v3929 = vmul.f32 1.0, %v3928
  %v3930 = vtanh.pop %v3923
  %v3931 = vmul.f32 %v3929, %v3737
  %3933 = vrot.lane.b32.xlu0 %v3930, 64
  %v3934 = vpop.permute.xlu0 %3933
  %v3936 = vmul.f32 %v3929, %v3934
  %3938 = vrot.lane.b32.xlu0 %v3936, 32
  %v3939 = vpop.permute.xlu0 %3938
  %v3941 = vadd.f32 %v3931, %v3939
  %v3942 = vtanh.pop %v3941
  %3944 = vrot.lane.b32.xlu0 %v3942, 64
  %v3945 = vpop.permute.xlu0 %3944
  %v3947 = vmul.f32 %v3929, %v3945
  %3949 = vrot.lane.b32.xlu0 %v3947, 32
  %v3950 = vpop.permute.xlu0 %3949
  %3952 = vst.msk [vmem:[#allocation4 + $0x30] sm:$0xff] %vm200, %v3950
  %v3953 = vsel %vm200, %v3848, 0
  %3955 = vmatprep.subr.mxu0 0.0
  %3956 = vmatpush1.msra.mxu0 %v2627
  %3957 = vmatprep.subr.mxu0 0.0
  %3958 = vmatpush1.msra.mxu0 %v2628
  %3959 = vmatprep.subr.mxu0 0.0
  %3960 = vmatpush1.msra.mxu0 %v2629
  %3961 = vmatprep.subr.mxu0 0.0
  %3962 = vmatpush1.msra.mxu0 %v2630
  %3963 = vmatprep.subr.mxu0 0.0
  %3964 = vmatpush1.msra.mxu0 0.0
  %3965 = vmatprep.subr.mxu0 0.0
  %3966 = vmatpush1.msra.mxu0 0.0
  %3967 = vmatprep.subr.mxu0 0.0
  %3968 = vmatpush1.msra.mxu0 0.0
  %3969 = vmatprep.subr.mxu0 0.0
  %3970 = vmatpush1.msra.mxu0 0.0
  %3971 = vmatprep.subr.mxu0 0.0
  %3972 = vmatpush1.msra.mxu0 0.0
  %3973 = vmatprep.subr.mxu0 0.0
  %3974 = vmatpush1.msra.mxu0 0.0
  %3975 = vmatprep.subr.mxu0 0.0
  %3976 = vmatpush1.msra.mxu0 0.0
  %3977 = vmatprep.subr.mxu0 0.0
  %3978 = vmatpush1.msra.mxu0 0.0
  %3979 = vmatprep.subr.mxu0 0.0
  %3980 = vmatpush1.msra.mxu0 0.0
  %3981 = vmatprep.subr.mxu0 0.0
  %3982 = vmatpush1.msra.mxu0 0.0
  %3983 = vmatprep.subr.mxu0 0.0
  %3984 = vmatpush1.msra.mxu0 0.0
  %3985 = vmatprep.subr.mxu0 0.0
  %3986 = vmatpush1.msra.mxu0 0.0
  %3987 = vmatprep.subr.mxu0 0.0
  %3988 = vmatpush1.msra.mxu0 0.0
  %3989 = vmatprep.subr.mxu0 0.0
  %3990 = vmatpush1.msra.mxu0 0.0
  %3991 = vmatprep.subr.mxu0 0.0
  %3992 = vmatpush1.msra.mxu0 0.0
  %3993 = vmatprep.subr.mxu0 0.0
  %3994 = vmatpush1.msra.mxu0 0.0
  %3995 = vmatprep.subr.mxu0 0.0
  %3996 = vmatpush1.msra.mxu0 0.0
  %3997 = vmatprep.subr.mxu0 0.0
  %3998 = vmatpush1.msra.mxu0 0.0
  %3999 = vmatprep.subr.mxu0 0.0
  %4000 = vmatpush1.msra.mxu0 0.0
  %4001 = vmatprep.subr.mxu0 0.0
  %4002 = vmatpush1.msra.mxu0 0.0
  %4003 = vmatprep.subr.mxu0 0.0
  %4004 = vmatpush1.msra.mxu0 0.0
  %4005 = vmatprep.subr.mxu0 0.0
  %4006 = vmatpush1.msra.mxu0 0.0
  %4007 = vmatprep.subr.mxu0 0.0
  %4008 = vmatpush1.msra.mxu0 0.0
  %4009 = vmatprep.subr.mxu0 0.0
  %4010 = vmatpush1.msra.mxu0 0.0
  %4011 = vmatprep.subr.mxu0 0.0
  %4012 = vmatpush1.msra.mxu0 0.0
  %4013 = vmatprep.subr.mxu0 0.0
  %4014 = vmatpush1.msra.mxu0 0.0
  %4015 = vmatprep.subr.mxu0 0.0
  %4016 = vmatpush1.msra.mxu0 0.0
  %4017 = vmatprep.subr.mxu0 0.0
  %4018 = vmatpush1.msra.mxu0 0.0
  %4019 = vmatprep.mubr.f32.mxu0 0.0
  %4020 = vmatmul.mubr.f32.gmra.mrb[0].mxu0 %v3953
  %v4021 = vpop.f32.mrb[0].mxu0
  %v4022 = vadd.f32 0.0, %v4021
  %v4023 = vpop.f32.mrb[0].mxu0
  %4024 = vdwg.mxu0
  %v4025 = vadd.f32 %v2615, %v4022
  %v4026 = vxor.u32 %v4025, 2147483648
  %v4027 = vmul.f32 %v4026, 1.442695
  %v4028 = vpow.pop %v4027
  %v4029 = vadd.f32 %v4028, 1.0
  %v4030 = vrcp.pop %v4029
  %v4031 = vmul.f32 1.0, %v4030
  %v4032 = vtanh.pop %v4025
  %v4033 = vmul.f32 %v4031, %v3839
  %4035 = vrot.lane.b32.xlu0 %v4032, 64
  %v4036 = vpop.permute.xlu0 %4035
  %v4038 = vmul.f32 %v4031, %v4036
  %4040 = vrot.lane.b32.xlu0 %v4038, 32
  %v4041 = vpop.permute.xlu0 %4040
  %v4043 = vadd.f32 %v4033, %v4041
  %v4044 = vtanh.pop %v4043
  %4046 = vrot.lane.b32.xlu0 %v4044, 64
  %v4047 = vpop.permute.xlu0 %4046
  %v4049 = vmul.f32 %v4031, %v4047
  %4051 = vrot.lane.b32.xlu0 %v4049, 32
  %v4052 = vpop.permute.xlu0 %4051
  %4054 = vst.msk [vmem:[#allocation5 + $0x8] sm:$0xff] %vm200, %v4052
  %v4055 = vsel %vm200, %v3950, 0
  %4057 = vmatprep.subr.mxu0 0.0
  %4058 = vmatpush1.msra.mxu0 %v2622
  %4059 = vmatprep.subr.mxu0 0.0
  %4060 = vmatpush1.msra.mxu0 %v2623
  %4061 = vmatprep.subr.mxu0 0.0
  %4062 = vmatpush1.msra.mxu0 %v2624
  %4063 = vmatprep.subr.mxu0 0.0
  %4064 = vmatpush1.msra.mxu0 %v2625
  %4065 = vmatprep.subr.mxu0 0.0
  %4066 = vmatpush1.msra.mxu0 0.0
  %4067 = vmatprep.subr.mxu0 0.0
  %4068 = vmatpush1.msra.mxu0 0.0
  %4069 = vmatprep.subr.mxu0 0.0
  %4070 = vmatpush1.msra.mxu0 0.0
  %4071 = vmatprep.subr.mxu0 0.0
  %4072 = vmatpush1.msra.mxu0 0.0
  %4073 = vmatprep.subr.mxu0 0.0
  %4074 = vmatpush1.msra.mxu0 0.0
  %4075 = vmatprep.subr.mxu0 0.0
  %4076 = vmatpush1.msra.mxu0 0.0
  %4077 = vmatprep.subr.mxu0 0.0
  %4078 = vmatpush1.msra.mxu0 0.0
  %4079 = vmatprep.subr.mxu0 0.0
  %4080 = vmatpush1.msra.mxu0 0.0
  %4081 = vmatprep.subr.mxu0 0.0
  %4082 = vmatpush1.msra.mxu0 0.0
  %4083 = vmatprep.subr.mxu0 0.0
  %4084 = vmatpush1.msra.mxu0 0.0
  %4085 = vmatprep.subr.mxu0 0.0
  %4086 = vmatpush1.msra.mxu0 0.0
  %4087 = vmatprep.subr.mxu0 0.0
  %4088 = vmatpush1.msra.mxu0 0.0
  %4089 = vmatprep.subr.mxu0 0.0
  %4090 = vmatpush1.msra.mxu0 0.0
  %4091 = vmatprep.subr.mxu0 0.0
  %4092 = vmatpush1.msra.mxu0 0.0
  %4093 = vmatprep.subr.mxu0 0.0
  %4094 = vmatpush1.msra.mxu0 0.0
  %4095 = vmatprep.subr.mxu0 0.0
  %4096 = vmatpush1.msra.mxu0 0.0
  %4097 = vmatprep.subr.mxu0 0.0
  %4098 = vmatpush1.msra.mxu0 0.0
  %4099 = vmatprep.subr.mxu0 0.0
  %4100 = vmatpush1.msra.mxu0 0.0
  %4101 = vmatprep.subr.mxu0 0.0
  %4102 = vmatpush1.msra.mxu0 0.0
  %4103 = vmatprep.subr.mxu0 0.0
  %4104 = vmatpush1.msra.mxu0 0.0
  %4105 = vmatprep.subr.mxu0 0.0
  %4106 = vmatpush1.msra.mxu0 0.0
  %4107 = vmatprep.subr.mxu0 0.0
  %4108 = vmatpush1.msra.mxu0 0.0
  %4109 = vmatprep.subr.mxu0 0.0
  %4110 = vmatpush1.msra.mxu0 0.0
  %4111 = vmatprep.subr.mxu0 0.0
  %4112 = vmatpush1.msra.mxu0 0.0
  %4113 = vmatprep.subr.mxu0 0.0
  %4114 = vmatpush1.msra.mxu0 0.0
  %4115 = vmatprep.subr.mxu0 0.0
  %4116 = vmatpush1.msra.mxu0 0.0
  %4117 = vmatprep.subr.mxu0 0.0
  %4118 = vmatpush1.msra.mxu0 0.0
  %4119 = vmatprep.subr.mxu0 0.0
  %4120 = vmatpush1.msra.mxu0 0.0
  %4121 = vmatprep.mubr.f32.mxu0 0.0
  %4122 = vmatmul.mubr.f32.gmra.mrb[0].mxu0 %v4055
  %v4123 = vpop.f32.mrb[0].mxu0
  %v4124 = vadd.f32 0.0, %v4123
  %v4125 = vpop.f32.mrb[0].mxu0
  %4126 = vdwg.mxu0
  %v4127 = vadd.f32 %v2385, %v4124
  %v4128 = vxor.u32 %v4127, 2147483648
  %v4129 = vmul.f32 %v4128, 1.442695
  %v4130 = vpow.pop %v4129
  %v4131 = vadd.f32 %v4130, 1.0
  %v4132 = vrcp.pop %v4131
  %v4133 = vmul.f32 1.0, %v4132
  %v4134 = vtanh.pop %v4127
  %v4135 = vmul.f32 %v4133, %v3941
  %4137 = vrot.lane.b32.xlu0 %v4134, 64
  %v4138 = vpop.permute.xlu0 %4137
  %v4140 = vmul.f32 %v4133, %v4138
  %4142 = vrot.lane.b32.xlu0 %v4140, 32
  %v4143 = vpop.permute.xlu0 %4142
  %v4145 = vadd.f32 %v4135, %v4143
  %v4146 = vtanh.pop %v4145
  %4148 = vrot.lane.b32.xlu0 %v4146, 64
  %v4149 = vpop.permute.xlu0 %4148
  %v4151 = vmul.f32 %v4133, %v4149
  %4153 = vrot.lane.b32.xlu0 %v4151, 32
  %v4154 = vpop.permute.xlu0 %4153
  %4156 = vst.msk [vmem:[#allocation4 + $0x38] sm:$0xff] %vm200, %v4154
  %v4157 = vsel %vm200, %v4052, 0
  %4159 = vmatprep.subr.mxu0 0.0
  %4160 = vmatpush1.msra.mxu0 %v2627
  %4161 = vmatprep.subr.mxu0 0.0
  %4162 = vmatpush1.msra.mxu0 %v2628
  %4163 = vmatprep.subr.mxu0 0.0
  %4164 = vmatpush1.msra.mxu0 %v2629
  %4165 = vmatprep.subr.mxu0 0.0
  %4166 = vmatpush1.msra.mxu0 %v2630
  %4167 = vmatprep.subr.mxu0 0.0
  %4168 = vmatpush1.msra.mxu0 0.0
  %4169 = vmatprep.subr.mxu0 0.0
  %4170 = vmatpush1.msra.mxu0 0.0
  %4171 = vmatprep.subr.mxu0 0.0
  %4172 = vmatpush1.msra.mxu0 0.0
  %4173 = vmatprep.subr.mxu0 0.0
  %4174 = vmatpush1.msra.mxu0 0.0
  %4175 = vmatprep.subr.mxu0 0.0
  %4176 = vmatpush1.msra.mxu0 0.0
  %4177 = vmatprep.subr.mxu0 0.0
  %4178 = vmatpush1.msra.mxu0 0.0
  %4179 = vmatprep.subr.mxu0 0.0
  %4180 = vmatpush1.msra.mxu0 0.0
  %4181 = vmatprep.subr.mxu0 0.0
  %4182 = vmatpush1.msra.mxu0 0.0
  %4183 = vmatprep.subr.mxu0 0.0
  %4184 = vmatpush1.msra.mxu0 0.0
  %4185 = vmatprep.subr.mxu0 0.0
  %4186 = vmatpush1.msra.mxu0 0.0
  %4187 = vmatprep.subr.mxu0 0.0
  %4188 = vmatpush1.msra.mxu0 0.0
  %4189 = vmatprep.subr.mxu0 0.0
  %4190 = vmatpush1.msra.mxu0 0.0
  %4191 = vmatprep.subr.mxu0 0.0
  %4192 = vmatpush1.msra.mxu0 0.0
  %4193 = vmatprep.subr.mxu0 0.0
  %4194 = vmatpush1.msra.mxu0 0.0
  %4195 = vmatprep.subr.mxu0 0.0
  %4196 = vmatpush1.msra.mxu0 0.0
  %4197 = vmatprep.subr.mxu0 0.0
  %4198 = vmatpush1.msra.mxu0 0.0
  %4199 = vmatprep.subr.mxu0 0.0
  %4200 = vmatpush1.msra.mxu0 0.0
  %4201 = vmatprep.subr.mxu0 0.0
  %4202 = vmatpush1.msra.mxu0 0.0
  %4203 = vmatprep.subr.mxu0 0.0
  %4204 = vmatpush1.msra.mxu0 0.0
  %4205 = vmatprep.subr.mxu0 0.0
  %4206 = vmatpush1.msra.mxu0 0.0
  %4207 = vmatprep.subr.mxu0 0.0
  %4208 = vmatpush1.msra.mxu0 0.0
  %4209 = vmatprep.subr.mxu0 0.0
  %4210 = vmatpush1.msra.mxu0 0.0
  %4211 = vmatprep.subr.mxu0 0.0
  %4212 = vmatpush1.msra.mxu0 0.0
  %4213 = vmatprep.subr.mxu0 0.0
  %4214 = vmatpush1.msra.mxu0 0.0
  %4215 = vmatprep.subr.mxu0 0.0
  %4216 = vmatpush1.msra.mxu0 0.0
  %4217 = vmatprep.subr.mxu0 0.0
  %4218 = vmatpush1.msra.mxu0 0.0
  %4219 = vmatprep.subr.mxu0 0.0
  %4220 = vmatpush1.msra.mxu0 0.0
  %4221 = vmatprep.subr.mxu0 0.0
  %4222 = vmatpush1.msra.mxu0 0.0
  %4223 = vmatprep.mubr.f32.mxu0 0.0
  %4224 = vmatmul.mubr.f32.gmra.mrb[0].mxu0 %v4157
  %v4225 = vpop.f32.mrb[0].mxu0
  %v4226 = vadd.f32 0.0, %v4225
  %v4227 = vpop.f32.mrb[0].mxu0
  %4228 = vdwg.mxu0
  %v4229 = vadd.f32 %v2614, %v4226
  %v4230 = vxor.u32 %v4229, 2147483648
  %v4231 = vmul.f32 %v4230, 1.442695
  %v4232 = vpow.pop %v4231
  %v4233 = vadd.f32 %v4232, 1.0
  %v4234 = vrcp.pop %v4233
  %v4235 = vmul.f32 1.0, %v4234
  %v4236 = vtanh.pop %v4229
  %v4237 = vmul.f32 %v4235, %v4043
  %4239 = vrot.lane.b32.xlu0 %v4236, 64
  %v4240 = vpop.permute.xlu0 %4239
  %v4242 = vmul.f32 %v4235, %v4240
  %4244 = vrot.lane.b32.xlu0 %v4242, 32
  %v4245 = vpop.permute.xlu0 %4244
  %v4247 = vadd.f32 %v4237, %v4245
  %v4248 = vtanh.pop %v4247
  %4250 = vrot.lane.b32.xlu0 %v4248, 64
  %v4251 = vpop.permute.xlu0 %4250
  %v4253 = vmul.f32 %v4235, %v4251
  %4255 = vrot.lane.b32.xlu0 %v4253, 32
  %v4256 = vpop.permute.xlu0 %4255
  %4258 = vst.msk [vmem:[#allocation5] sm:$0xff] %vm200, %v4256
  %v4259 = vld [vmem:[#allocation4] sm:$0xff]
  %v4260 = vld [vmem:[#allocation4 + $0x8] sm:$0xff]
  %v4261 = vld [vmem:[#allocation4 + $0x10] sm:$0xff]
  %v4262 = vld [vmem:[#allocation4 + $0x18] sm:$0xff]
  %v4263 = vld [vmem:[#allocation4 + $0x20] sm:$0xff]
  %v4264 = vld [vmem:[#allocation4 + $0x28] sm:$0xff]
  %v4265 = vld [vmem:[#allocation4 + $0x30] sm:$0xff]
  %v4266 = vld [vmem:[#allocation4 + $0x38] sm:$0xff]
  %v4267 = vld [vmem:[%s9] sm:$0xff]
  %v4268 = vld [vmem:[%s9 + $0x8] sm:$0xff]
  %v4269 = vld [vmem:[%s9 + $0x10] sm:$0xff]
  %v4270 = vld [vmem:[%s9 + $0x18] sm:$0xff]
  %v4271 = vld [vmem:[#allocation5] sm:$0xff]
  %v4272 = vld [vmem:[#allocation5 + $0x8] sm:$0xff]
  %v4273 = vld [vmem:[#allocation5 + $0x10] sm:$0xff]
  %v4274 = vld [vmem:[#allocation5 + $0x18] sm:$0xff]
  %v4275 = vld [vmem:[#allocation5 + $0x20] sm:$0xff]
  %v4276 = vld [vmem:[#allocation5 + $0x28] sm:$0xff]
  %v4277 = vld [vmem:[#allocation5 + $0x30] sm:$0xff]
  %v4278 = vld [vmem:[#allocation5 + $0x38] sm:$0xff]
  %s4279 = scalar_lea.vmem %s9, 32
  %v4280 = vld [vmem:[%s4279] sm:$0xff]
  %v4281 = vld [vmem:[%s4279 + $0x8] sm:$0xff]
  %v4282 = vld [vmem:[%s4279 + $0x10] sm:$0xff]
  %v4283 = vld [vmem:[%s4279 + $0x18] sm:$0xff]
  %v4285 = vsel %vm200, %v4271, 0
  %v4288 = vsel %vm200, %v4272, 0
  %v4291 = vsel %vm200, %v4273, 0
  %v4294 = vsel %vm200, %v4274, 0
  %v4297 = vsel %vm200, %v4275, 0
  %v4300 = vsel %vm200, %v4276, 0
  %v4303 = vsel %vm200, %v4277, 0
  %v4306 = vsel %vm200, %v4278, 0
  %4308 = vmatprep.subr.mxu0 0.0
  %4309 = vmatpush1.msra.mxu0 %v4280
  %4310 = vmatprep.subr.mxu0 0.0
  %4311 = vmatpush1.msra.mxu0 %v4281
  %4312 = vmatprep.subr.mxu0 0.0
  %4313 = vmatpush1.msra.mxu0 %v4282
  %4314 = vmatprep.subr.mxu0 0.0
  %4315 = vmatpush1.msra.mxu0 %v4283
  %4316 = vmatprep.subr.mxu0 0.0
  %4317 = vmatpush1.msra.mxu0 0.0
  %4318 = vmatprep.subr.mxu0 0.0
  %4319 = vmatpush1.msra.mxu0 0.0
  %4320 = vmatprep.subr.mxu0 0.0
  %4321 = vmatpush1.msra.mxu0 0.0
  %4322 = vmatprep.subr.mxu0 0.0
  %4323 = vmatpush1.msra.mxu0 0.0
  %4324 = vmatprep.subr.mxu0 0.0
  %4325 = vmatpush1.msra.mxu0 0.0
  %4326 = vmatprep.subr.mxu0 0.0
  %4327 = vmatpush1.msra.mxu0 0.0
  %4328 = vmatprep.subr.mxu0 0.0
  %4329 = vmatpush1.msra.mxu0 0.0
  %4330 = vmatprep.subr.mxu0 0.0
  %4331 = vmatpush1.msra.mxu0 0.0
  %4332 = vmatprep.subr.mxu0 0.0
  %4333 = vmatpush1.msra.mxu0 0.0
  %4334 = vmatprep.subr.mxu0 0.0
  %4335 = vmatpush1.msra.mxu0 0.0
  %4336 = vmatprep.subr.mxu0 0.0
  %4337 = vmatpush1.msra.mxu0 0.0
  %4338 = vmatprep.subr.mxu0 0.0
  %4339 = vmatpush1.msra.mxu0 0.0
  %4340 = vmatprep.subr.mxu0 0.0
  %4341 = vmatpush1.msra.mxu0 0.0
  %4342 = vmatprep.subr.mxu0 0.0
  %4343 = vmatpush1.msra.mxu0 0.0
  %4344 = vmatprep.subr.mxu0 0.0
  %4345 = vmatpush1.msra.mxu0 0.0
  %4346 = vmatprep.subr.mxu0 0.0
  %4347 = vmatpush1.msra.mxu0 0.0
  %4348 = vmatprep.subr.mxu0 0.0
  %4349 = vmatpush1.msra.mxu0 0.0
  %4350 = vmatprep.subr.mxu0 0.0
  %4351 = vmatpush1.msra.mxu0 0.0
  %4352 = vmatprep.subr.mxu0 0.0
  %4353 = vmatpush1.msra.mxu0 0.0
  %4354 = vmatprep.subr.mxu0 0.0
  %4355 = vmatpush1.msra.mxu0 0.0
  %4356 = vmatprep.subr.mxu0 0.0
  %4357 = vmatpush1.msra.mxu0 0.0
  %4358 = vmatprep.subr.mxu0 0.0
  %4359 = vmatpush1.msra.mxu0 0.0
  %4360 = vmatprep.subr.mxu0 0.0
  %4361 = vmatpush1.msra.mxu0 0.0
  %4362 = vmatprep.subr.mxu0 0.0
  %4363 = vmatpush1.msra.mxu0 0.0
  %4364 = vmatprep.subr.mxu0 0.0
  %4365 = vmatpush1.msra.mxu0 0.0
  %4366 = vmatprep.subr.mxu0 0.0
  %4367 = vmatpush1.msra.mxu0 0.0
  %4368 = vmatprep.subr.mxu0 0.0
  %4369 = vmatpush1.msra.mxu0 0.0
  %4370 = vmatprep.subr.mxu0 0.0
  %4371 = vmatpush1.msra.mxu0 0.0
  %4372 = vmatprep.mubr.f32.mxu0 0.0
  %4373 = vmatmul.mubr.f32.gmra.mrb[0].mxu0 %v4285
  %v4374 = vpop.f32.mrb[0].mxu0
  %v4375 = vadd.f32 0.0, %v4374
  %v4376 = vpop.f32.mrb[0].mxu0
  %4377 = vmatprep.mubr.f32.mxu0 0.0
  %4378 = vmatmul.mubr.f32.gmra.mrb[0].mxu0 %v4288
  %v4379 = vpop.f32.mrb[0].mxu0
  %v4380 = vadd.f32 0.0, %v4379
  %v4381 = vpop.f32.mrb[0].mxu0
  %4382 = vmatprep.mubr.f32.mxu0 0.0
  %4383 = vmatmul.mubr.f32.gmra.mrb[0].mxu0 %v4291
  %v4384 = vpop.f32.mrb[0].mxu0
  %v4385 = vadd.f32 0.0, %v4384
  %v4386 = vpop.f32.mrb[0].mxu0
  %4387 = vmatprep.mubr.f32.mxu0 0.0
  %4388 = vmatmul.mubr.f32.gmra.mrb[0].mxu0 %v4294
  %v4389 = vpop.f32.mrb[0].mxu0
  %v4390 = vadd.f32 0.0, %v4389
  %v4391 = vpop.f32.mrb[0].mxu0
  %4392 = vmatprep.mubr.f32.mxu0 0.0
  %4393 = vmatmul.mubr.f32.gmra.mrb[0].mxu0 %v4297
  %v4394 = vpop.f32.mrb[0].mxu0
  %v4395 = vadd.f32 0.0, %v4394
  %v4396 = vpop.f32.mrb[0].mxu0
  %4397 = vmatprep.mubr.f32.mxu0 0.0
  %4398 = vmatmul.mubr.f32.gmra.mrb[0].mxu0 %v4300
  %v4399 = vpop.f32.mrb[0].mxu0
  %v4400 = vadd.f32 0.0, %v4399
  %v4401 = vpop.f32.mrb[0].mxu0
  %4402 = vmatprep.mubr.f32.mxu0 0.0
  %4403 = vmatmul.mubr.f32.gmra.mrb[0].mxu0 %v4303
  %v4404 = vpop.f32.mrb[0].mxu0
  %v4405 = vadd.f32 0.0, %v4404
  %v4406 = vpop.f32.mrb[0].mxu0
  %4407 = vmatprep.mubr.f32.mxu0 0.0
  %4408 = vmatmul.mubr.f32.gmra.mrb[0].mxu0 %v4306
  %v4409 = vpop.f32.mrb[0].mxu0
  %v4410 = vadd.f32 0.0, %v4409
  %v4411 = vpop.f32.mrb[0].mxu0
  %4412 = vdwg.mxu0
  %v4414 = vsel %vm200, %v4259, 0
  %v4417 = vsel %vm200, %v4260, 0
  %v4420 = vsel %vm200, %v4261, 0
  %v4423 = vsel %vm200, %v4262, 0
  %v4426 = vsel %vm200, %v4263, 0
  %v4429 = vsel %vm200, %v4264, 0
  %v4432 = vsel %vm200, %v4265, 0
  %v4435 = vsel %vm200, %v4266, 0
  %4437 = vmatprep.subr.mxu0 0.0
  %4438 = vmatpush1.msra.mxu0 %v4267
  %4439 = vmatprep.subr.mxu0 0.0
  %4440 = vmatpush1.msra.mxu0 %v4268
  %4441 = vmatprep.subr.mxu0 0.0
  %4442 = vmatpush1.msra.mxu0 %v4269
  %4443 = vmatprep.subr.mxu0 0.0
  %4444 = vmatpush1.msra.mxu0 %v4270
  %4445 = vmatprep.subr.mxu0 0.0
  %4446 = vmatpush1.msra.mxu0 0.0
  %4447 = vmatprep.subr.mxu0 0.0
  %4448 = vmatpush1.msra.mxu0 0.0
  %4449 = vmatprep.subr.mxu0 0.0
  %4450 = vmatpush1.msra.mxu0 0.0
  %4451 = vmatprep.subr.mxu0 0.0
  %4452 = vmatpush1.msra.mxu0 0.0
  %4453 = vmatprep.subr.mxu0 0.0
  %4454 = vmatpush1.msra.mxu0 0.0
  %4455 = vmatprep.subr.mxu0 0.0
  %4456 = vmatpush1.msra.mxu0 0.0
  %4457 = vmatprep.subr.mxu0 0.0
  %4458 = vmatpush1.msra.mxu0 0.0
  %4459 = vmatprep.subr.mxu0 0.0
  %4460 = vmatpush1.msra.mxu0 0.0
  %4461 = vmatprep.subr.mxu0 0.0
  %4462 = vmatpush1.msra.mxu0 0.0
  %4463 = vmatprep.subr.mxu0 0.0
  %4464 = vmatpush1.msra.mxu0 0.0
  %4465 = vmatprep.subr.mxu0 0.0
  %4466 = vmatpush1.msra.mxu0 0.0
  %4467 = vmatprep.subr.mxu0 0.0
  %4468 = vmatpush1.msra.mxu0 0.0
  %4469 = vmatprep.subr.mxu0 0.0
  %4470 = vmatpush1.msra.mxu0 0.0
  %4471 = vmatprep.subr.mxu0 0.0
  %4472 = vmatpush1.msra.mxu0 0.0
  %4473 = vmatprep.subr.mxu0 0.0
  %4474 = vmatpush1.msra.mxu0 0.0
  %4475 = vmatprep.subr.mxu0 0.0
  %4476 = vmatpush1.msra.mxu0 0.0
  %4477 = vmatprep.subr.mxu0 0.0
  %4478 = vmatpush1.msra.mxu0 0.0
  %4479 = vmatprep.subr.mxu0 0.0
  %4480 = vmatpush1.msra.mxu0 0.0
  %4481 = vmatprep.subr.mxu0 0.0
  %4482 = vmatpush1.msra.mxu0 0.0
  %4483 = vmatprep.subr.mxu0 0.0
  %4484 = vmatpush1.msra.mxu0 0.0
  %4485 = vmatprep.subr.mxu0 0.0
  %4486 = vmatpush1.msra.mxu0 0.0
  %4487 = vmatprep.subr.mxu0 0.0
  %4488 = vmatpush1.msra.mxu0 0.0
  %4489 = vmatprep.subr.mxu0 0.0
  %4490 = vmatpush1.msra.mxu0 0.0
  %4491 = vmatprep.subr.mxu0 0.0
  %4492 = vmatpush1.msra.mxu0 0.0
  %4493 = vmatprep.subr.mxu0 0.0
  %4494 = vmatpush1.msra.mxu0 0.0
  %4495 = vmatprep.subr.mxu0 0.0
  %4496 = vmatpush1.msra.mxu0 0.0
  %4497 = vmatprep.subr.mxu0 0.0
  %4498 = vmatpush1.msra.mxu0 0.0
  %4499 = vmatprep.subr.mxu0 0.0
  %4500 = vmatpush1.msra.mxu0 0.0
  %4501 = vmatprep.mubr.f32.mxu0 0.0
  %4502 = vmatmul.mubr.f32.gmra.mrb[0].mxu0 %v4414
  %v4503 = vpop.f32.mrb[0].mxu0
  %v4504 = vadd.f32 %v4375, %v4503
  %v4505 = vpop.f32.mrb[0].mxu0
  %4506 = vmatprep.mubr.f32.mxu0 0.0
  %4507 = vmatmul.mubr.f32.gmra.mrb[0].mxu0 %v4417
  %v4508 = vpop.f32.mrb[0].mxu0
  %v4509 = vadd.f32 %v4380, %v4508
  %v4510 = vpop.f32.mrb[0].mxu0
  %4511 = vmatprep.mubr.f32.mxu0 0.0
  %4512 = vmatmul.mubr.f32.gmra.mrb[0].mxu0 %v4420
  %v4513 = vpop.f32.mrb[0].mxu0
  %v4514 = vadd.f32 %v4385, %v4513
  %v4515 = vpop.f32.mrb[0].mxu0
  %4516 = vmatprep.mubr.f32.mxu0 0.0
  %4517 = vmatmul.mubr.f32.gmra.mrb[0].mxu0 %v4423
  %v4518 = vpop.f32.mrb[0].mxu0
  %v4519 = vadd.f32 %v4390, %v4518
  %v4520 = vpop.f32.mrb[0].mxu0
  %4521 = vmatprep.mubr.f32.mxu0 0.0
  %4522 = vmatmul.mubr.f32.gmra.mrb[0].mxu0 %v4426
  %v4523 = vpop.f32.mrb[0].mxu0
  %v4524 = vadd.f32 %v4395, %v4523
  %v4525 = vpop.f32.mrb[0].mxu0
  %4526 = vmatprep.mubr.f32.mxu0 0.0
  %4527 = vmatmul.mubr.f32.gmra.mrb[0].mxu0 %v4429
  %v4528 = vpop.f32.mrb[0].mxu0
  %v4529 = vadd.f32 %v4400, %v4528
  %v4530 = vpop.f32.mrb[0].mxu0
  %4531 = vmatprep.mubr.f32.mxu0 0.0
  %4532 = vmatmul.mubr.f32.gmra.mrb[0].mxu0 %v4432
  %v4533 = vpop.f32.mrb[0].mxu0
  %v4534 = vadd.f32 %v4405, %v4533
  %v4535 = vpop.f32.mrb[0].mxu0
  %4536 = vmatprep.mubr.f32.mxu0 0.0
  %4537 = vmatmul.mubr.f32.gmra.mrb[0].mxu0 %v4435
  %v4538 = vpop.f32.mrb[0].mxu0
  %v4539 = vadd.f32 %v4410, %v4538
  %v4540 = vpop.f32.mrb[0].mxu0
  %4541 = vdwg.mxu0
  %v4542 = vld [vmem:[%s10] sm:$0x1]
  %v4544 = vlaneseq
  %v4545 = vshrl.u32 %v4544, 7
  %v4546 = vsub.s32 0, %v4545
  %v4547 = vrot.slane %v4542, %v4546
  %v4549 = vadd.f32 %v4504, %v4547
  %v4550 = vadd.f32 %v4509, %v4547
  %v4551 = vadd.f32 %v4514, %v4547
  %v4552 = vadd.f32 %v4519, %v4547
  %v4553 = vadd.f32 %v4524, %v4547
  %v4554 = vadd.f32 %v4529, %v4547
  %v4555 = vadd.f32 %v4534, %v4547
  %v4556 = vadd.f32 %v4539, %v4547
  %4557 = vst [vmem:[%s11] sm:$0xff] %v4549
  %4558 = vst [vmem:[%s11 + $0x8] sm:$0xff] %v4550
  %4559 = vst [vmem:[%s11 + $0x10] sm:$0xff] %v4551
  %4560 = vst [vmem:[%s11 + $0x18] sm:$0xff] %v4552
  %4561 = vst [vmem:[%s11 + $0x20] sm:$0xff] %v4553
  %4562 = vst [vmem:[%s11 + $0x28] sm:$0xff] %v4554
  %4563 = vst [vmem:[%s11 + $0x30] sm:$0xff] %v4555
  %4564 = vst [vmem:[%s11 + $0x38] sm:$0xff] %v4556
  // Predicated region
  $region46: #{forward_pallas.1} parent=0 // pred_check
    _
  $region47: #{forward_pallas.1} parent=0 // pred_check_branch
    %4566 = sbr.rel (0) target = $region49
  $region48: #{forward_pallas.1} parent=0 // pred_region
    _
  $region49: #{forward_pallas.1} parent=0 // pred_fallthru
    _
  // Predicated region
  $region50: #{forward_pallas.1} parent=0 // pred_check
    _
  $region51: #{forward_pallas.1} parent=0 // pred_check_branch
    %4568 = sbr.rel (0) target = $region53
  $region52: #{forward_pallas.1} parent=0 // pred_region
    _
  $region53: #{forward_pallas.1} parent=0 // pred_fallthru
    _

</llo_original>
